<compile_context>
chip_gen: v7x
topology: tpu7x:2x2x1
jax: 0.10.0
libtpu: 0.0.40
codegen_flags: <defaults>
</compile_context>

<pallas_src>
import math

import jax
import jax.numpy as jnp
from jax.experimental import pallas as pl
from jax.experimental.pallas import tpu as pltpu


# ----------------------------------------------------------------------------
# Kernel: one grid step = (one batch tile, one encoder layer)
# ----------------------------------------------------------------------------

def make_encoder_kernel(Bt, S, D, H, hd, ln_eps=1e-5):
    scale = 1.0 / math.sqrt(hd)
    TOK = Bt * S

    def layer_norm(v, g, b):          # f32 elementwise math
        mu = jnp.mean(v, axis=-1, keepdims=True)
        vc = v - mu
        var = jnp.mean(vc * vc, axis=-1, keepdims=True)
        return vc * jax.lax.rsqrt(var + ln_eps) * g + b

    def kernel(x_ref, bias_ref,
               ln1g_ref, ln1b_ref, wqkv_ref, bqkv_ref, wo_ref, bo_ref,
               ln2g_ref, ln2b_ref, w1_ref, b1_ref, w2_ref, b2_ref,
               fing_ref, finb_ref,
               out_ref,
               x_acc, qh_s, kh_s, vh_s, ctx_s):
        l = pl.program_id(1)

        # ---- residual-stream init for a new batch tile -----------------------
        @pl.when(l == 0)
        def _():
            x_acc[...] = x_ref[...].reshape(TOK, D)

        x = x_acc[...]                                            # (TOK, D) f32

        # ---- sublayer 0: x + MHA(LayerNorm(x)) -------------------------------
        xn = layer_norm(x, ln1g_ref[0], ln1b_ref[0])
        qkv = (jnp.dot(xn.astype(jnp.bfloat16), wqkv_ref[0],
                       preferred_element_type=jnp.float32)
               + bqkv_ref[0])                                     # (TOK, 3D) f32
        qkv_b = qkv.astype(jnp.bfloat16)

        # single relayout: heads -> (Bt*H, S, hd) bf16 scratches
        for b in range(Bt):
            r0 = b * S
            for h in range(H):
                i = b * H + h
                c0 = h * hd
                qh_s[i] = qkv_b[r0:r0 + S, c0:c0 + hd]
                kh_s[i] = qkv_b[r0:r0 + S, D + c0:D + c0 + hd]
                vh_s[i] = qkv_b[r0:r0 + S, 2 * D + c0:2 * D + c0 + hd]

        # batched-head attention (f32 scores / softmax, bf16 matmul operands)
        s = jnp.einsum('bqd,bkd->bqk', qh_s[...], kh_s[...],
                       preferred_element_type=jnp.float32) * scale    # (Bt*H, S, S)
        s = s + bias_ref[...]                                          # additive key-padding bias
        m = jnp.max(s, axis=-1, keepdims=True)
        p = jnp.exp(s - m)
        denom = jnp.sum(p, axis=-1, keepdims=True)
        attn = p * pl.reciprocal(denom, approx=False)
        ctx_h = jnp.einsum('bqk,bkd->bqd', attn.astype(jnp.bfloat16), vh_s[...],
                           preferred_element_type=jnp.float32)         # (Bt*H, S, hd)

        # merge heads into preallocated (TOK, D) scratch (no list concat)
        for b in range(Bt):
            r0 = b * S
            for h in range(H):
                ctx_s[r0:r0 + S, h * hd:(h + 1) * hd] = \
                    ctx_h[b * H + h].astype(jnp.bfloat16)

        attn_out = (jnp.dot(ctx_s[...], wo_ref[0],
                            preferred_element_type=jnp.float32)
                    + bo_ref[0])
        x = x + attn_out

        # ---- sublayer 1: x + FFN(LayerNorm(x)) -------------------------------
        xn2 = layer_norm(x, ln2g_ref[0], ln2b_ref[0])
        h1 = (jnp.dot(xn2.astype(jnp.bfloat16), w1_ref[0],
                      preferred_element_type=jnp.float32)
              + b1_ref[0])
        h1 = jnp.maximum(h1, 0.0)
        ffn = (jnp.dot(h1.astype(jnp.bfloat16), w2_ref[0],
                       preferred_element_type=jnp.float32)
               + b2_ref[0])
        x = x + ffn

        x_acc[...] = x                                            # carry to next layer

        # ---- final encoder LayerNorm on the last layer -----------------------
        @pl.when(l == pl.num_programs(1) - 1)
        def _():
            y = layer_norm(x, fing_ref[...], finb_ref[...])
            out_ref[...] = y.reshape(Bt, S, D).astype(out_ref.dtype)

    return kernel


# ----------------------------------------------------------------------------
# Wrapper: one pallas_call for the whole Encoder forward
# ----------------------------------------------------------------------------

WEIGHT_ORDER = ("ln1_g", "ln1_b", "wqkv", "bqkv", "wo", "bo",
                "ln2_g", "ln2_b", "w1", "b1", "w2", "b2")


def encoder_forward(params, x, key_mask, num_heads, batch_tile=None):
    """x: (B, S, D) f32; key_mask: (B, S) bool/int (True = real token)."""
    B, S, D = x.shape
    L = params["wqkv"].shape[0]
    H = num_heads
    assert D % H == 0
    hd = D // H
    # lane-dense layout (avoids masked vst / wasted MXU columns)
    assert D % 128 == 0, "model_dim must be a multiple of 128"
    assert S % 8 == 0, "sequence length must be a multiple of 8"

    if batch_tile is None:
        batch_tile = math.gcd(B, max(1, 256 // S))   # aim for >=256 MXU rows
    assert B % batch_tile == 0
    Bt = batch_tile
    nb = B // Bt

    # mask hoisted to an additive bias, replicated per head on the host (tiny)
    NEG = -1e30   # finite: fully-masked rows stay finite (reference would give NaN)
    bias = jnp.where(key_mask, 0.0, NEG).astype(jnp.float32)            # (B, S)
    bias = jnp.repeat(bias[:, None, :], H, axis=1).reshape(B * H, 1, S)

    kernel = make_encoder_kernel(Bt, S, D, H, hd)

    def per_layer_spec(arr):
        nd = arr.ndim
        return pl.BlockSpec((1,) + arr.shape[1:],
                            lambda b, l, _nd=nd: (l,) + (0,) * (_nd - 1))

    def shared_spec(arr):
        nd = arr.ndim
        return pl.BlockSpec(arr.shape, lambda b, l, _nd=nd: (0,) * _nd)

    weights = [params[n] for n in WEIGHT_ORDER] + [params["fin_g"], params["fin_b"]]
    in_specs = ([pl.BlockSpec((Bt, S, D), lambda b, l: (b, 0, 0)),
                 pl.BlockSpec((Bt * H, 1, S), lambda b, l: (b, 0, 0))]
                + [per_layer_spec(params[n]) for n in WEIGHT_ORDER]
                + [shared_spec(params["fin_g"]), shared_spec(params["fin_b"])])

    grid_spec = pltpu.PrefetchScalarGridSpec(
        num_scalar_prefetch=0,
        grid=(nb, L),                      # layers innermost ("arbitrary")
        in_specs=in_specs,
        out_specs=pl.BlockSpec((Bt, S, D), lambda b, l: (b, 0, 0)),
        scratch_shapes=[
            pltpu.VMEM((Bt * S, D), jnp.float32),        # residual stream (persists over l)
            pltpu.VMEM((Bt * H, S, hd), jnp.bfloat16),   # Q heads
            pltpu.VMEM((Bt * H, S, hd), jnp.bfloat16),   # K heads
            pltpu.VMEM((Bt * H, S, hd), jnp.bfloat16),   # V heads
            pltpu.VMEM((Bt * S, D), jnp.bfloat16),       # merged context
        ],
    )

    return pl.pallas_call(
        kernel,
        out_shape=jax.ShapeDtypeStruct((B, S, D), jnp.float32),
        grid_spec=grid_spec,
        compiler_params=pltpu.CompilerParams(
            dimension_semantics=("parallel", "arbitrary"),
            vmem_limit_bytes=32 * 1024 * 1024),
    )(x, bias, *weights)


# ----------------------------------------------------------------------------
# Parameter init (nn.Linear / nn.LayerNorm shapes; matmul weights stored bf16)
# ----------------------------------------------------------------------------

def init_params(key, num_layers, model_dim, ff_dim):
    D, FF = model_dim, ff_dim

    def linear(k, din, dout):
        kw, kb = jax.random.split(k)
        bound = 1.0 / math.sqrt(din)
        w = jax.random.uniform(kw, (din, dout), jnp.float32, -bound, bound)
        b = jax.random.uniform(kb, (dout,), jnp.float32, -bound, bound)
        return w, b

    keys = jax.random.split(key, num_layers * 10 + 2)
    ki = iter(keys)

    acc = {n: [] for n in WEIGHT_ORDER}
    for _ in range(num_layers):
        wq, bq = linear(next(ki), D, D)
        wk, bk = linear(next(ki), D, D)
        wv, bv = linear(next(ki), D, D)
        wo, bo = linear(next(ki), D, D)
        w1, b1 = linear(next(ki), D, FF)
        w2, b2 = linear(next(ki), FF, D)
        g1 = 1.0 + 0.05 * jax.random.normal(next(ki), (D,), jnp.float32)
        e1 = 0.05 * jax.random.normal(next(ki), (D,), jnp.float32)
        g2 = 1.0 + 0.05 * jax.random.normal(next(ki), (D,), jnp.float32)
        e2 = 0.05 * jax.random.normal(next(ki), (D,), jnp.float32)

        acc["ln1_g"].append(g1[None]); acc["ln1_b"].append(e1[None])
        acc["wqkv"].append(jnp.concatenate([wq, wk, wv], axis=1))     # (D, 3D)
        acc["bqkv"].append(jnp.concatenate([bq, bk, bv])[None])       # (1, 3D)
        acc["wo"].append(wo); acc["bo"].append(bo[None])
        acc["ln2_g"].append(g2[None]); acc["ln2_b"].append(e2[None])
        acc["w1"].append(w1); acc["b1"].append(b1[None])
        acc["w2"].append(w2); acc["b2"].append(b2[None])

    params = {n: jnp.stack(v, axis=0) for n, v in acc.items()}
    for n in ("wqkv", "wo", "w1", "w2"):          # bf16 weights: half HBM traffic, bf16 MXU path
        params[n] = params[n].astype(jnp.bfloat16)
    params["fin_g"] = (1.0 + 0.05 * jax.random.normal(next(ki), (D,), jnp.float32))[None]
    params["fin_b"] = (0.05 * jax.random.normal(next(ki), (D,), jnp.float32))[None]
    return params


# ----------------------------------------------------------------------------
# Pure-JAX reference (mirrors the PyTorch Encoder forward, eval mode)
# ----------------------------------------------------------------------------

def ref_encoder(params, x, key_mask, num_heads, eps=1e-5):
    B, S, D = x.shape
    H, hd = num_heads, D // num_heads
    L = params["wqkv"].shape[0]
    NEG = -1e30
    mask4 = key_mask.reshape(B, 1, 1, S)
    f32 = lambda a: a.astype(jnp.float32)

    def ln(v, g, b):
        mu = v.mean(-1, keepdims=True)
        var = ((v - mu) ** 2).mean(-1, keepdims=True)
        return (v - mu) / jnp.sqrt(var + eps) * g + b

    for l in range(L):
        xn = ln(x, params["ln1_g"][l, 0], params["ln1_b"][l, 0])
        qkv = xn @ f32(params["wqkv"][l]) + params["bqkv"][l, 0]
        q, k, v = qkv[..., :D], qkv[..., D:2 * D], qkv[..., 2 * D:]
        split = lambda t: t.reshape(B, S, H, hd).transpose(0, 2, 1, 3)
        qh, kh, vh = split(q), split(k), split(v)
        sc = jnp.einsum("bhqd,bhkd->bhqk", qh, kh) / math.sqrt(hd)
        sc = jnp.where(mask4, sc, NEG)
        aw = jax.nn.softmax(sc, axis=-1)
        ctx = jnp.einsum("bhqk,bhkd->bhqd", aw, vh).transpose(0, 2, 1, 3).reshape(B, S, D)
        x = x + (ctx @ f32(params["wo"][l]) + params["bo"][l, 0])

        xn = ln(x, params["ln2_g"][l, 0], params["ln2_b"][l, 0])
        h1 = jnp.maximum(xn @ f32(params["w1"][l]) + params["b1"][l, 0], 0.0)
        x = x + (h1 @ f32(params["w2"][l]) + params["b2"][l, 0])

    return ln(x, params["fin_g"][0], params["fin_b"][0])


# ----------------------------------------------------------------------------
# Main
# ----------------------------------------------------------------------------

if __name__ == "__main__":
    B, S, D, H, L = 4, 16, 128, 4, 2   # batch, seq, model_dim, heads, encoder layers
    FF = 4 * D                          # pointwise-net hidden width
    Bt = 2                              # batch tile -> grid = (2, L) = 4 steps

    root = jax.random.PRNGKey(0)
    k_params, k_x = jax.random.split(root)

    params = init_params(k_params, L, D, FF)
    x = jax.random.normal(k_x, (B, S, D), jnp.float32)

    # src_mask semantics: key-padding mask (True = real token), broadcast over
    # heads and query positions.
    key_mask = jnp.ones((B, S), dtype=bool)
    key_mask = key_mask.at[1, S - 3:].set(False).at[3, S - 5:].set(False)

    out = encoder_forward(params, x, key_mask, H, batch_tile=Bt)
    out = jax.block_until_ready(out)

    ref = ref_encoder(params, x, key_mask, H)
    err = float(jnp.max(jnp.abs(out - ref)))
    assert out.shape == (B, S, D)
    assert err < 3e-2, f"mismatch vs reference: max abs err = {err}"

    print("KERNEL_OK")
</pallas_src>

<mosaic_0001>
module attributes {stable_mosaic.version = 11 : i64} {
  func.func @kernel(%arg0: i32, %arg1: i32, %arg2: memref<2x16x128xf32, #tpu.memory_space<vmem>>, %arg3: memref<8x1x16xf32, #tpu.memory_space<vmem>>, %arg4: memref<1x1x128xf32, #tpu.memory_space<vmem>>, %arg5: memref<1x1x128xf32, #tpu.memory_space<vmem>>, %arg6: memref<1x128x384xbf16, #tpu.memory_space<vmem>>, %arg7: memref<1x1x384xf32, #tpu.memory_space<vmem>>, %arg8: memref<1x128x128xbf16, #tpu.memory_space<vmem>>, %arg9: memref<1x1x128xf32, #tpu.memory_space<vmem>>, %arg10: memref<1x1x128xf32, #tpu.memory_space<vmem>>, %arg11: memref<1x1x128xf32, #tpu.memory_space<vmem>>, %arg12: memref<1x128x512xbf16, #tpu.memory_space<vmem>>, %arg13: memref<1x1x512xf32, #tpu.memory_space<vmem>>, %arg14: memref<1x512x128xbf16, #tpu.memory_space<vmem>>, %arg15: memref<1x1x128xf32, #tpu.memory_space<vmem>>, %arg16: memref<1x128xf32, #tpu.memory_space<vmem>>, %arg17: memref<1x128xf32, #tpu.memory_space<vmem>>, %arg18: memref<2x16x128xf32, #tpu.memory_space<vmem>>, %arg19: memref<32x128xf32, #tpu.memory_space<vmem>>, %arg20: memref<8x16x32xbf16, #tpu.memory_space<vmem>>, %arg21: memref<8x16x32xbf16, #tpu.memory_space<vmem>>, %arg22: memref<8x16x32xbf16, #tpu.memory_space<vmem>>, %arg23: memref<32x128xbf16, #tpu.memory_space<vmem>>) attributes {dimension_semantics = [#tpu.dimension_semantics<parallel>, #tpu.dimension_semantics<arbitrary>], iteration_bounds = array<i64: 2, 2>, scalar_prefetch = 0 : i64, scratch_operands = 5 : i64, tpu.core_type = #tpu.core_type<tc>, window_params = [{transform_indices = @transform_0, window_bounds = array<i64: 2, 16, 128>}, {transform_indices = @transform_1, window_bounds = array<i64: 8, 1, 16>}, {transform_indices = @transform_2, window_bounds = array<i64: 1, 1, 128>}, {transform_indices = @transform_3, window_bounds = array<i64: 1, 1, 128>}, {transform_indices = @transform_4, window_bounds = array<i64: 1, 128, 384>}, {transform_indices = @transform_5, window_bounds = array<i64: 1, 1, 384>}, {transform_indices = @transform_6, window_bounds = array<i64: 1, 128, 128>}, {transform_indices = @transform_7, window_bounds = array<i64: 1, 1, 128>}, {transform_indices = @transform_8, window_bounds = array<i64: 1, 1, 128>}, {transform_indices = @transform_9, window_bounds = array<i64: 1, 1, 128>}, {transform_indices = @transform_10, window_bounds = array<i64: 1, 128, 512>}, {transform_indices = @transform_11, window_bounds = array<i64: 1, 1, 512>}, {transform_indices = @transform_12, window_bounds = array<i64: 1, 512, 128>}, {transform_indices = @transform_13, window_bounds = array<i64: 1, 1, 128>}, {pipeline_mode = #tpu.pipeline_mode<synchronous>, transform_indices = @transform_14, window_bounds = array<i64: 1, 128>}, {pipeline_mode = #tpu.pipeline_mode<synchronous>, transform_indices = @transform_15, window_bounds = array<i64: 1, 128>}, {transform_indices = @transform_16, window_bounds = array<i64: 2, 16, 128>}]} {
    %c0_i32 = arith.constant 0 : i32
    %0 = arith.cmpi eq, %arg1, %c0_i32 : i32
    %1 = arith.extui %0 : i1 to i32
    %c0_i32_0 = arith.constant 0 : i32
    %2 = arith.cmpi ne, %1, %c0_i32_0 : i32
    scf.if %2 {
      %c0_151 = arith.constant 0 : index
      %c0_152 = arith.constant 0 : index
      %c0_153 = arith.constant 0 : index
      %242 = vector.load %arg2[%c0_151, %c0_152, %c0_153] : memref<2x16x128xf32, #tpu.memory_space<vmem>>, vector<2x16x128xf32>
      %243 = vector.shape_cast %242 : vector<2x16x128xf32> to vector<32x128xf32>
      %c0_154 = arith.constant 0 : index
      %c0_155 = arith.constant 0 : index
      %244 = vector.load %arg19[%c0_154, %c0_155] : memref<32x128xf32, #tpu.memory_space<vmem>>, vector<32x128xf32>
      tpu.vector_store %arg19[%c0_154, %c0_155], %243 {strides = array<i32>} : memref<32x128xf32, #tpu.memory_space<vmem>>, vector<32x128xf32>,
    } else {
    }
    %c0 = arith.constant 0 : index
    %c0_1 = arith.constant 0 : index
    %3 = vector.load %arg19[%c0, %c0_1] : memref<32x128xf32, #tpu.memory_space<vmem>>, vector<32x128xf32>
    %c0_2 = arith.constant 0 : index
    %c0_3 = arith.constant 0 : index
    %c0_4 = arith.constant 0 : index
    %4 = vector.load %arg4[%c0_2, %c0_3, %c0_4] : memref<1x1x128xf32, #tpu.memory_space<vmem>>, vector<1x1x128xf32>
    %5 = vector.shape_cast %4 : vector<1x1x128xf32> to vector<1x128xf32>
    %c0_5 = arith.constant 0 : index
    %c0_6 = arith.constant 0 : index
    %c0_7 = arith.constant 0 : index
    %6 = vector.load %arg5[%c0_5, %c0_6, %c0_7] : memref<1x1x128xf32, #tpu.memory_space<vmem>>, vector<1x1x128xf32>
    %7 = vector.shape_cast %6 : vector<1x1x128xf32> to vector<1x128xf32>
    %cst = arith.constant dense<0.000000e+00> : vector<32xf32>
    %8 = vector.multi_reduction <add>, %3, %cst [1] : vector<32x128xf32> to vector<32xf32>
    %9 = vector.shape_cast %8 : vector<32xf32> to vector<32x1xf32>
    %cst_8 = arith.constant 1.280000e+02 : f32
    %10 = vector.broadcast %cst_8 : f32 to vector<32x1xf32>
    %11 = arith.divf %9, %10 : vector<32x1xf32>
    %12 = vector.broadcast %11 : vector<32x1xf32> to vector<32x128xf32>
    %13 = arith.subf %3, %12 : vector<32x128xf32>
    %14 = arith.mulf %13, %13 : vector<32x128xf32>
    %cst_9 = arith.constant dense<0.000000e+00> : vector<32xf32>
    %15 = vector.multi_reduction <add>, %14, %cst_9 [1] : vector<32x128xf32> to vector<32xf32>
    %16 = vector.shape_cast %15 : vector<32xf32> to vector<32x1xf32>
    %cst_10 = arith.constant 1.280000e+02 : f32
    %17 = vector.broadcast %cst_10 : f32 to vector<32x1xf32>
    %18 = arith.divf %16, %17 : vector<32x1xf32>
    %cst_11 = arith.constant 9.99999974E-6 : f32
    %19 = vector.broadcast %cst_11 : f32 to vector<32x1xf32>
    %20 = arith.addf %18, %19 : vector<32x1xf32>
    %21 = math.rsqrt %20 : vector<32x1xf32>
    %22 = vector.broadcast %21 : vector<32x1xf32> to vector<32x128xf32>
    %23 = arith.mulf %13, %22 : vector<32x128xf32>
    %24 = vector.broadcast %5 : vector<1x128xf32> to vector<32x128xf32>
    %25 = arith.mulf %23, %24 : vector<32x128xf32>
    %26 = vector.broadcast %7 : vector<1x128xf32> to vector<32x128xf32>
    %27 = arith.addf %25, %26 : vector<32x128xf32>
    %28 = arith.truncf %27 : vector<32x128xf32> to vector<32x128xbf16>
    %c0_12 = arith.constant 0 : index
    %c0_13 = arith.constant 0 : index
    %c0_14 = arith.constant 0 : index
    %29 = vector.load %arg6[%c0_12, %c0_13, %c0_14] : memref<1x128x384xbf16, #tpu.memory_space<vmem>>, vector<1x128x384xbf16>
    %30 = vector.shape_cast %29 : vector<1x128x384xbf16> to vector<128x384xbf16>
    %cst_15 = arith.constant dense<0.000000e+00> : vector<32x384xf32>
    %31 = tpu.matmul %28, %30, %cst_15 {dimension_numbers = #tpu.dot_dimension_numbers<[1], [0], [0], [1], [0, 0, 1, 1], [], []>} : vector<32x128xbf16>, vector<128x384xbf16>, vector<32x384xf32> -> vector<32x384xf32>
    %c0_16 = arith.constant 0 : index
    %c0_17 = arith.constant 0 : index
    %c0_18 = arith.constant 0 : index
    %32 = vector.load %arg7[%c0_16, %c0_17, %c0_18] : memref<1x1x384xf32, #tpu.memory_space<vmem>>, vector<1x1x384xf32>
    %33 = vector.shape_cast %32 : vector<1x1x384xf32> to vector<1x384xf32>
    %34 = vector.broadcast %33 : vector<1x384xf32> to vector<32x384xf32>
    %35 = arith.addf %31, %34 : vector<32x384xf32>
    %36 = arith.truncf %35 : vector<32x384xf32> to vector<32x384xbf16>
    %37 = vector.extract_strided_slice %36 {offsets = [0, 0], sizes = [16, 32], strides = [1, 1]} : vector<32x384xbf16> to vector<16x32xbf16>
    %c0_19 = arith.constant 0 : index
    %c0_20 = arith.constant 0 : index
    %c0_21 = arith.constant 0 : index
    %38 = vector.load %arg20[%c0_19, %c0_20, %c0_21] : memref<8x16x32xbf16, #tpu.memory_space<vmem>>, vector<1x16x32xbf16>
    %39 = vector.shape_cast %38 : vector<1x16x32xbf16> to vector<16x32xbf16>
    %40 = vector.shape_cast %37 : vector<16x32xbf16> to vector<1x16x32xbf16>
    tpu.vector_store %arg20[%c0_19, %c0_20, %c0_21], %40 {strides = array<i32>} : memref<8x16x32xbf16, #tpu.memory_space<vmem>>, vector<1x16x32xbf16>,
    %41 = vector.extract_strided_slice %36 {offsets = [0, 128], sizes = [16, 32], strides = [1, 1]} : vector<32x384xbf16> to vector<16x32xbf16>
    %c0_22 = arith.constant 0 : index
    %c0_23 = arith.constant 0 : index
    %c0_24 = arith.constant 0 : index
    %42 = vector.load %arg21[%c0_22, %c0_23, %c0_24] : memref<8x16x32xbf16, #tpu.memory_space<vmem>>, vector<1x16x32xbf16>
    %43 = vector.shape_cast %42 : vector<1x16x32xbf16> to vector<16x32xbf16>
    %44 = vector.shape_cast %41 : vector<16x32xbf16> to vector<1x16x32xbf16>
    tpu.vector_store %arg21[%c0_22, %c0_23, %c0_24], %44 {strides = array<i32>} : memref<8x16x32xbf16, #tpu.memory_space<vmem>>, vector<1x16x32xbf16>,
    %45 = vector.extract_strided_slice %36 {offsets = [0, 256], sizes = [16, 32], strides = [1, 1]} : vector<32x384xbf16> to vector<16x32xbf16>
    %c0_25 = arith.constant 0 : index
    %c0_26 = arith.constant 0 : index
    %c0_27 = arith.constant 0 : index
    %46 = vector.load %arg22[%c0_25, %c0_26, %c0_27] : memref<8x16x32xbf16, #tpu.memory_space<vmem>>, vector<1x16x32xbf16>
    %47 = vector.shape_cast %46 : vector<1x16x32xbf16> to vector<16x32xbf16>
    %48 = vector.shape_cast %45 : vector<16x32xbf16> to vector<1x16x32xbf16>
    tpu.vector_store %arg22[%c0_25, %c0_26, %c0_27], %48 {strides = array<i32>} : memref<8x16x32xbf16, #tpu.memory_space<vmem>>, vector<1x16x32xbf16>,
    %49 = vector.extract_strided_slice %36 {offsets = [0, 32], sizes = [16, 32], strides = [1, 1]} : vector<32x384xbf16> to vector<16x32xbf16>
    %c1 = arith.constant 1 : index
    %c0_28 = arith.constant 0 : index
    %c0_29 = arith.constant 0 : index
    %50 = vector.load %arg20[%c1, %c0_28, %c0_29] : memref<8x16x32xbf16, #tpu.memory_space<vmem>>, vector<1x16x32xbf16>
    %51 = vector.shape_cast %50 : vector<1x16x32xbf16> to vector<16x32xbf16>
    %52 = vector.shape_cast %49 : vector<16x32xbf16> to vector<1x16x32xbf16>
    tpu.vector_store %arg20[%c1, %c0_28, %c0_29], %52 {strides = array<i32>} : memref<8x16x32xbf16, #tpu.memory_space<vmem>>, vector<1x16x32xbf16>,
    %53 = vector.extract_strided_slice %36 {offsets = [0, 160], sizes = [16, 32], strides = [1, 1]} : vector<32x384xbf16> to vector<16x32xbf16>
    %c1_30 = arith.constant 1 : index
    %c0_31 = arith.constant 0 : index
    %c0_32 = arith.constant 0 : index
    %54 = vector.load %arg21[%c1_30, %c0_31, %c0_32] : memref<8x16x32xbf16, #tpu.memory_space<vmem>>, vector<1x16x32xbf16>
    %55 = vector.shape_cast %54 : vector<1x16x32xbf16> to vector<16x32xbf16>
    %56 = vector.shape_cast %53 : vector<16x32xbf16> to vector<1x16x32xbf16>
    tpu.vector_store %arg21[%c1_30, %c0_31, %c0_32], %56 {strides = array<i32>} : memref<8x16x32xbf16, #tpu.memory_space<vmem>>, vector<1x16x32xbf16>,
    %57 = vector.extract_strided_slice %36 {offsets = [0, 288], sizes = [16, 32], strides = [1, 1]} : vector<32x384xbf16> to vector<16x32xbf16>
    %c1_33 = arith.constant 1 : index
    %c0_34 = arith.constant 0 : index
    %c0_35 = arith.constant 0 : index
    %58 = vector.load %arg22[%c1_33, %c0_34, %c0_35] : memref<8x16x32xbf16, #tpu.memory_space<vmem>>, vector<1x16x32xbf16>
    %59 = vector.shape_cast %58 : vector<1x16x32xbf16> to vector<16x32xbf16>
    %60 = vector.shape_cast %57 : vector<16x32xbf16> to vector<1x16x32xbf16>
    tpu.vector_store %arg22[%c1_33, %c0_34, %c0_35], %60 {strides = array<i32>} : memref<8x16x32xbf16, #tpu.memory_space<vmem>>, vector<1x16x32xbf16>,
    %61 = vector.extract_strided_slice %36 {offsets = [0, 64], sizes = [16, 32], strides = [1, 1]} : vector<32x384xbf16> to vector<16x32xbf16>
    %c2 = arith.constant 2 : index
    %c0_36 = arith.constant 0 : index
    %c0_37 = arith.constant 0 : index
    %62 = vector.load %arg20[%c2, %c0_36, %c0_37] : memref<8x16x32xbf16, #tpu.memory_space<vmem>>, vector<1x16x32xbf16>
    %63 = vector.shape_cast %62 : vector<1x16x32xbf16> to vector<16x32xbf16>
    %64 = vector.shape_cast %61 : vector<16x32xbf16> to vector<1x16x32xbf16>
    tpu.vector_store %arg20[%c2, %c0_36, %c0_37], %64 {strides = array<i32>} : memref<8x16x32xbf16, #tpu.memory_space<vmem>>, vector<1x16x32xbf16>,
    %65 = vector.extract_strided_slice %36 {offsets = [0, 192], sizes = [16, 32], strides = [1, 1]} : vector<32x384xbf16> to vector<16x32xbf16>
    %c2_38 = arith.constant 2 : index
    %c0_39 = arith.constant 0 : index
    %c0_40 = arith.constant 0 : index
    %66 = vector.load %arg21[%c2_38, %c0_39, %c0_40] : memref<8x16x32xbf16, #tpu.memory_space<vmem>>, vector<1x16x32xbf16>
    %67 = vector.shape_cast %66 : vector<1x16x32xbf16> to vector<16x32xbf16>
    %68 = vector.shape_cast %65 : vector<16x32xbf16> to vector<1x16x32xbf16>
    tpu.vector_store %arg21[%c2_38, %c0_39, %c0_40], %68 {strides = array<i32>} : memref<8x16x32xbf16, #tpu.memory_space<vmem>>, vector<1x16x32xbf16>,
    %69 = vector.extract_strided_slice %36 {offsets = [0, 320], sizes = [16, 32], strides = [1, 1]} : vector<32x384xbf16> to vector<16x32xbf16>
    %c2_41 = arith.constant 2 : index
    %c0_42 = arith.constant 0 : index
    %c0_43 = arith.constant 0 : index
    %70 = vector.load %arg22[%c2_41, %c0_42, %c0_43] : memref<8x16x32xbf16, #tpu.memory_space<vmem>>, vector<1x16x32xbf16>
    %71 = vector.shape_cast %70 : vector<1x16x32xbf16> to vector<16x32xbf16>
    %72 = vector.shape_cast %69 : vector<16x32xbf16> to vector<1x16x32xbf16>
    tpu.vector_store %arg22[%c2_41, %c0_42, %c0_43], %72 {strides = array<i32>} : memref<8x16x32xbf16, #tpu.memory_space<vmem>>, vector<1x16x32xbf16>,
    %73 = vector.extract_strided_slice %36 {offsets = [0, 96], sizes = [16, 32], strides = [1, 1]} : vector<32x384xbf16> to vector<16x32xbf16>
    %c3 = arith.constant 3 : index
    %c0_44 = arith.constant 0 : index
    %c0_45 = arith.constant 0 : index
    %74 = vector.load %arg20[%c3, %c0_44, %c0_45] : memref<8x16x32xbf16, #tpu.memory_space<vmem>>, vector<1x16x32xbf16>
    %75 = vector.shape_cast %74 : vector<1x16x32xbf16> to vector<16x32xbf16>
    %76 = vector.shape_cast %73 : vector<16x32xbf16> to vector<1x16x32xbf16>
    tpu.vector_store %arg20[%c3, %c0_44, %c0_45], %76 {strides = array<i32>} : memref<8x16x32xbf16, #tpu.memory_space<vmem>>, vector<1x16x32xbf16>,
    %77 = vector.extract_strided_slice %36 {offsets = [0, 224], sizes = [16, 32], strides = [1, 1]} : vector<32x384xbf16> to vector<16x32xbf16>
    %c3_46 = arith.constant 3 : index
    %c0_47 = arith.constant 0 : index
    %c0_48 = arith.constant 0 : index
    %78 = vector.load %arg21[%c3_46, %c0_47, %c0_48] : memref<8x16x32xbf16, #tpu.memory_space<vmem>>, vector<1x16x32xbf16>
    %79 = vector.shape_cast %78 : vector<1x16x32xbf16> to vector<16x32xbf16>
    %80 = vector.shape_cast %77 : vector<16x32xbf16> to vector<1x16x32xbf16>
    tpu.vector_store %arg21[%c3_46, %c0_47, %c0_48], %80 {strides = array<i32>} : memref<8x16x32xbf16, #tpu.memory_space<vmem>>, vector<1x16x32xbf16>,
    %81 = vector.extract_strided_slice %36 {offsets = [0, 352], sizes = [16, 32], strides = [1, 1]} : vector<32x384xbf16> to vector<16x32xbf16>
    %c3_49 = arith.constant 3 : index
    %c0_50 = arith.constant 0 : index
    %c0_51 = arith.constant 0 : index
    %82 = vector.load %arg22[%c3_49, %c0_50, %c0_51] : memref<8x16x32xbf16, #tpu.memory_space<vmem>>, vector<1x16x32xbf16>
    %83 = vector.shape_cast %82 : vector<1x16x32xbf16> to vector<16x32xbf16>
    %84 = vector.shape_cast %81 : vector<16x32xbf16> to vector<1x16x32xbf16>
    tpu.vector_store %arg22[%c3_49, %c0_50, %c0_51], %84 {strides = array<i32>} : memref<8x16x32xbf16, #tpu.memory_space<vmem>>, vector<1x16x32xbf16>,
    %85 = vector.extract_strided_slice %36 {offsets = [16, 0], sizes = [16, 32], strides = [1, 1]} : vector<32x384xbf16> to vector<16x32xbf16>
    %c4 = arith.constant 4 : index
    %c0_52 = arith.constant 0 : index
    %c0_53 = arith.constant 0 : index
    %86 = vector.load %arg20[%c4, %c0_52, %c0_53] : memref<8x16x32xbf16, #tpu.memory_space<vmem>>, vector<1x16x32xbf16>
    %87 = vector.shape_cast %86 : vector<1x16x32xbf16> to vector<16x32xbf16>
    %88 = vector.shape_cast %85 : vector<16x32xbf16> to vector<1x16x32xbf16>
    tpu.vector_store %arg20[%c4, %c0_52, %c0_53], %88 {strides = array<i32>} : memref<8x16x32xbf16, #tpu.memory_space<vmem>>, vector<1x16x32xbf16>,
    %89 = vector.extract_strided_slice %36 {offsets = [16, 128], sizes = [16, 32], strides = [1, 1]} : vector<32x384xbf16> to vector<16x32xbf16>
    %c4_54 = arith.constant 4 : index
    %c0_55 = arith.constant 0 : index
    %c0_56 = arith.constant 0 : index
    %90 = vector.load %arg21[%c4_54, %c0_55, %c0_56] : memref<8x16x32xbf16, #tpu.memory_space<vmem>>, vector<1x16x32xbf16>
    %91 = vector.shape_cast %90 : vector<1x16x32xbf16> to vector<16x32xbf16>
    %92 = vector.shape_cast %89 : vector<16x32xbf16> to vector<1x16x32xbf16>
    tpu.vector_store %arg21[%c4_54, %c0_55, %c0_56], %92 {strides = array<i32>} : memref<8x16x32xbf16, #tpu.memory_space<vmem>>, vector<1x16x32xbf16>,
    %93 = vector.extract_strided_slice %36 {offsets = [16, 256], sizes = [16, 32], strides = [1, 1]} : vector<32x384xbf16> to vector<16x32xbf16>
    %c4_57 = arith.constant 4 : index
    %c0_58 = arith.constant 0 : index
    %c0_59 = arith.constant 0 : index
    %94 = vector.load %arg22[%c4_57, %c0_58, %c0_59] : memref<8x16x32xbf16, #tpu.memory_space<vmem>>, vector<1x16x32xbf16>
    %95 = vector.shape_cast %94 : vector<1x16x32xbf16> to vector<16x32xbf16>
    %96 = vector.shape_cast %93 : vector<16x32xbf16> to vector<1x16x32xbf16>
    tpu.vector_store %arg22[%c4_57, %c0_58, %c0_59], %96 {strides = array<i32>} : memref<8x16x32xbf16, #tpu.memory_space<vmem>>, vector<1x16x32xbf16>,
    %97 = vector.extract_strided_slice %36 {offsets = [16, 32], sizes = [16, 32], strides = [1, 1]} : vector<32x384xbf16> to vector<16x32xbf16>
    %c5 = arith.constant 5 : index
    %c0_60 = arith.constant 0 : index
    %c0_61 = arith.constant 0 : index
    %98 = vector.load %arg20[%c5, %c0_60, %c0_61] : memref<8x16x32xbf16, #tpu.memory_space<vmem>>, vector<1x16x32xbf16>
    %99 = vector.shape_cast %98 : vector<1x16x32xbf16> to vector<16x32xbf16>
    %100 = vector.shape_cast %97 : vector<16x32xbf16> to vector<1x16x32xbf16>
    tpu.vector_store %arg20[%c5, %c0_60, %c0_61], %100 {strides = array<i32>} : memref<8x16x32xbf16, #tpu.memory_space<vmem>>, vector<1x16x32xbf16>,
    %101 = vector.extract_strided_slice %36 {offsets = [16, 160], sizes = [16, 32], strides = [1, 1]} : vector<32x384xbf16> to vector<16x32xbf16>
    %c5_62 = arith.constant 5 : index
    %c0_63 = arith.constant 0 : index
    %c0_64 = arith.constant 0 : index
    %102 = vector.load %arg21[%c5_62, %c0_63, %c0_64] : memref<8x16x32xbf16, #tpu.memory_space<vmem>>, vector<1x16x32xbf16>
    %103 = vector.shape_cast %102 : vector<1x16x32xbf16> to vector<16x32xbf16>
    %104 = vector.shape_cast %101 : vector<16x32xbf16> to vector<1x16x32xbf16>
    tpu.vector_store %arg21[%c5_62, %c0_63, %c0_64], %104 {strides = array<i32>} : memref<8x16x32xbf16, #tpu.memory_space<vmem>>, vector<1x16x32xbf16>,
    %105 = vector.extract_strided_slice %36 {offsets = [16, 288], sizes = [16, 32], strides = [1, 1]} : vector<32x384xbf16> to vector<16x32xbf16>
    %c5_65 = arith.constant 5 : index
    %c0_66 = arith.constant 0 : index
    %c0_67 = arith.constant 0 : index
    %106 = vector.load %arg22[%c5_65, %c0_66, %c0_67] : memref<8x16x32xbf16, #tpu.memory_space<vmem>>, vector<1x16x32xbf16>
    %107 = vector.shape_cast %106 : vector<1x16x32xbf16> to vector<16x32xbf16>
    %108 = vector.shape_cast %105 : vector<16x32xbf16> to vector<1x16x32xbf16>
    tpu.vector_store %arg22[%c5_65, %c0_66, %c0_67], %108 {strides = array<i32>} : memref<8x16x32xbf16, #tpu.memory_space<vmem>>, vector<1x16x32xbf16>,
    %109 = vector.extract_strided_slice %36 {offsets = [16, 64], sizes = [16, 32], strides = [1, 1]} : vector<32x384xbf16> to vector<16x32xbf16>
    %c6 = arith.constant 6 : index
    %c0_68 = arith.constant 0 : index
    %c0_69 = arith.constant 0 : index
    %110 = vector.load %arg20[%c6, %c0_68, %c0_69] : memref<8x16x32xbf16, #tpu.memory_space<vmem>>, vector<1x16x32xbf16>
    %111 = vector.shape_cast %110 : vector<1x16x32xbf16> to vector<16x32xbf16>
    %112 = vector.shape_cast %109 : vector<16x32xbf16> to vector<1x16x32xbf16>
    tpu.vector_store %arg20[%c6, %c0_68, %c0_69], %112 {strides = array<i32>} : memref<8x16x32xbf16, #tpu.memory_space<vmem>>, vector<1x16x32xbf16>,
    %113 = vector.extract_strided_slice %36 {offsets = [16, 192], sizes = [16, 32], strides = [1, 1]} : vector<32x384xbf16> to vector<16x32xbf16>
    %c6_70 = arith.constant 6 : index
    %c0_71 = arith.constant 0 : index
    %c0_72 = arith.constant 0 : index
    %114 = vector.load %arg21[%c6_70, %c0_71, %c0_72] : memref<8x16x32xbf16, #tpu.memory_space<vmem>>, vector<1x16x32xbf16>
    %115 = vector.shape_cast %114 : vector<1x16x32xbf16> to vector<16x32xbf16>
    %116 = vector.shape_cast %113 : vector<16x32xbf16> to vector<1x16x32xbf16>
    tpu.vector_store %arg21[%c6_70, %c0_71, %c0_72], %116 {strides = array<i32>} : memref<8x16x32xbf16, #tpu.memory_space<vmem>>, vector<1x16x32xbf16>,
    %117 = vector.extract_strided_slice %36 {offsets = [16, 320], sizes = [16, 32], strides = [1, 1]} : vector<32x384xbf16> to vector<16x32xbf16>
    %c6_73 = arith.constant 6 : index
    %c0_74 = arith.constant 0 : index
    %c0_75 = arith.constant 0 : index
    %118 = vector.load %arg22[%c6_73, %c0_74, %c0_75] : memref<8x16x32xbf16, #tpu.memory_space<vmem>>, vector<1x16x32xbf16>
    %119 = vector.shape_cast %118 : vector<1x16x32xbf16> to vector<16x32xbf16>
    %120 = vector.shape_cast %117 : vector<16x32xbf16> to vector<1x16x32xbf16>
    tpu.vector_store %arg22[%c6_73, %c0_74, %c0_75], %120 {strides = array<i32>} : memref<8x16x32xbf16, #tpu.memory_space<vmem>>, vector<1x16x32xbf16>,
    %121 = vector.extract_strided_slice %36 {offsets = [16, 96], sizes = [16, 32], strides = [1, 1]} : vector<32x384xbf16> to vector<16x32xbf16>
    %c7 = arith.constant 7 : index
    %c0_76 = arith.constant 0 : index
    %c0_77 = arith.constant 0 : index
    %122 = vector.load %arg20[%c7, %c0_76, %c0_77] : memref<8x16x32xbf16, #tpu.memory_space<vmem>>, vector<1x16x32xbf16>
    %123 = vector.shape_cast %122 : vector<1x16x32xbf16> to vector<16x32xbf16>
    %124 = vector.shape_cast %121 : vector<16x32xbf16> to vector<1x16x32xbf16>
    tpu.vector_store %arg20[%c7, %c0_76, %c0_77], %124 {strides = array<i32>} : memref<8x16x32xbf16, #tpu.memory_space<vmem>>, vector<1x16x32xbf16>,
    %125 = vector.extract_strided_slice %36 {offsets = [16, 224], sizes = [16, 32], strides = [1, 1]} : vector<32x384xbf16> to vector<16x32xbf16>
    %c7_78 = arith.constant 7 : index
    %c0_79 = arith.constant 0 : index
    %c0_80 = arith.constant 0 : index
    %126 = vector.load %arg21[%c7_78, %c0_79, %c0_80] : memref<8x16x32xbf16, #tpu.memory_space<vmem>>, vector<1x16x32xbf16>
    %127 = vector.shape_cast %126 : vector<1x16x32xbf16> to vector<16x32xbf16>
    %128 = vector.shape_cast %125 : vector<16x32xbf16> to vector<1x16x32xbf16>
    tpu.vector_store %arg21[%c7_78, %c0_79, %c0_80], %128 {strides = array<i32>} : memref<8x16x32xbf16, #tpu.memory_space<vmem>>, vector<1x16x32xbf16>,
    %129 = vector.extract_strided_slice %36 {offsets = [16, 352], sizes = [16, 32], strides = [1, 1]} : vector<32x384xbf16> to vector<16x32xbf16>
    %c7_81 = arith.constant 7 : index
    %c0_82 = arith.constant 0 : index
    %c0_83 = arith.constant 0 : index
    %130 = vector.load %arg22[%c7_81, %c0_82, %c0_83] : memref<8x16x32xbf16, #tpu.memory_space<vmem>>, vector<1x16x32xbf16>
    %131 = vector.shape_cast %130 : vector<1x16x32xbf16> to vector<16x32xbf16>
    %132 = vector.shape_cast %129 : vector<16x32xbf16> to vector<1x16x32xbf16>
    tpu.vector_store %arg22[%c7_81, %c0_82, %c0_83], %132 {strides = array<i32>} : memref<8x16x32xbf16, #tpu.memory_space<vmem>>, vector<1x16x32xbf16>,
    %c0_84 = arith.constant 0 : index
    %c0_85 = arith.constant 0 : index
    %c0_86 = arith.constant 0 : index
    %133 = vector.load %arg20[%c0_84, %c0_85, %c0_86] : memref<8x16x32xbf16, #tpu.memory_space<vmem>>, vector<8x16x32xbf16>
    %c0_87 = arith.constant 0 : index
    %c0_88 = arith.constant 0 : index
    %c0_89 = arith.constant 0 : index
    %134 = vector.load %arg21[%c0_87, %c0_88, %c0_89] : memref<8x16x32xbf16, #tpu.memory_space<vmem>>, vector<8x16x32xbf16>
    "tpu.trace_start"() <{level = 10 : i32, message = "bqd,bkd->bqk"}> : () -> ()
    %cst_90 = arith.constant dense<0.000000e+00> : vector<8x16x16xf32>
    %135 = tpu.matmul %133, %134, %cst_90 {dimension_numbers = #tpu.dot_dimension_numbers<[2], [2], [1], [1], [0, 0, 0, 1, 1, 1], [0], [0]>} : vector<8x16x32xbf16>, vector<8x16x32xbf16>, vector<8x16x16xf32> -> vector<8x16x16xf32>
    "tpu.trace_stop"() : () -> ()
    %cst_91 = arith.constant 0.176776692 : f32
    %136 = vector.broadcast %cst_91 : f32 to vector<8x16x16xf32>
    %137 = arith.mulf %135, %136 : vector<8x16x16xf32>
    %c0_92 = arith.constant 0 : index
    %c0_93 = arith.constant 0 : index
    %c0_94 = arith.constant 0 : index
    %138 = vector.load %arg3[%c0_92, %c0_93, %c0_94] : memref<8x1x16xf32, #tpu.memory_space<vmem>>, vector<8x1x16xf32>
    %139 = vector.broadcast %138 : vector<8x1x16xf32> to vector<8x16x16xf32>
    %140 = arith.addf %137, %139 : vector<8x16x16xf32>
    %cst_95 = arith.constant dense<0xFF800000> : vector<8x16xf32>
    %141 = vector.multi_reduction <maximumf>, %140, %cst_95 [2] : vector<8x16x16xf32> to vector<8x16xf32>
    %142 = vector.shape_cast %141 : vector<8x16xf32> to vector<8x16x1xf32>
    %143 = vector.broadcast %142 : vector<8x16x1xf32> to vector<8x16x16xf32>
    %144 = arith.subf %140, %143 : vector<8x16x16xf32>
    %145 = math.exp %144 : vector<8x16x16xf32>
    %cst_96 = arith.constant dense<0.000000e+00> : vector<8x16xf32>
    %146 = vector.multi_reduction <add>, %145, %cst_96 [2] : vector<8x16x16xf32> to vector<8x16xf32>
    %147 = vector.shape_cast %146 : vector<8x16xf32> to vector<8x16x1xf32>
    %148 = tpu.reciprocal %147 : vector<8x16x1xf32> -> vector<8x16x1xf32>
    %149 = vector.broadcast %148 : vector<8x16x1xf32> to vector<8x16x16xf32>
    %150 = arith.mulf %145, %149 : vector<8x16x16xf32>
    %151 = arith.truncf %150 : vector<8x16x16xf32> to vector<8x16x16xbf16>
    %c0_97 = arith.constant 0 : index
    %c0_98 = arith.constant 0 : index
    %c0_99 = arith.constant 0 : index
    %152 = vector.load %arg22[%c0_97, %c0_98, %c0_99] : memref<8x16x32xbf16, #tpu.memory_space<vmem>>, vector<8x16x32xbf16>
    "tpu.trace_start"() <{level = 10 : i32, message = "bqk,bkd->bqd"}> : () -> ()
    %cst_100 = arith.constant dense<0.000000e+00> : vector<8x16x32xf32>
    %153 = tpu.matmul %151, %152, %cst_100 {dimension_numbers = #tpu.dot_dimension_numbers<[2], [1], [1], [2], [0, 0, 0, 1, 1, 2], [0], [0]>} : vector<8x16x16xbf16>, vector<8x16x32xbf16>, vector<8x16x32xf32> -> vector<8x16x32xf32>
    "tpu.trace_stop"() : () -> ()
    %154 = vector.extract_strided_slice %153 {offsets = [0, 0, 0], sizes = [1, 16, 32], strides = [1, 1, 1]} : vector<8x16x32xf32> to vector<1x16x32xf32>
    %155 = vector.shape_cast %154 : vector<1x16x32xf32> to vector<16x32xf32>
    %156 = arith.truncf %155 : vector<16x32xf32> to vector<16x32xbf16>
    %c0_101 = arith.constant 0 : index
    %c0_102 = arith.constant 0 : index
    %157 = vector.load %arg23[%c0_101, %c0_102] : memref<32x128xbf16, #tpu.memory_space<vmem>>, vector<16x32xbf16>
    tpu.vector_store %arg23[%c0_101, %c0_102], %156 {strides = array<i32>} : memref<32x128xbf16, #tpu.memory_space<vmem>>, vector<16x32xbf16>,
    %158 = vector.extract_strided_slice %153 {offsets = [1, 0, 0], sizes = [1, 16, 32], strides = [1, 1, 1]} : vector<8x16x32xf32> to vector<1x16x32xf32>
    %159 = vector.shape_cast %158 : vector<1x16x32xf32> to vector<16x32xf32>
    %160 = arith.truncf %159 : vector<16x32xf32> to vector<16x32xbf16>
    %c0_103 = arith.constant 0 : index
    %c32 = arith.constant 32 : index
    %161 = vector.load %arg23[%c0_103, %c32] : memref<32x128xbf16, #tpu.memory_space<vmem>>, vector<16x32xbf16>
    tpu.vector_store %arg23[%c0_103, %c32], %160 {strides = array<i32>} : memref<32x128xbf16, #tpu.memory_space<vmem>>, vector<16x32xbf16>,
    %162 = vector.extract_strided_slice %153 {offsets = [2, 0, 0], sizes = [1, 16, 32], strides = [1, 1, 1]} : vector<8x16x32xf32> to vector<1x16x32xf32>
    %163 = vector.shape_cast %162 : vector<1x16x32xf32> to vector<16x32xf32>
    %164 = arith.truncf %163 : vector<16x32xf32> to vector<16x32xbf16>
    %c0_104 = arith.constant 0 : index
    %c64 = arith.constant 64 : index
    %165 = vector.load %arg23[%c0_104, %c64] : memref<32x128xbf16, #tpu.memory_space<vmem>>, vector<16x32xbf16>
    tpu.vector_store %arg23[%c0_104, %c64], %164 {strides = array<i32>} : memref<32x128xbf16, #tpu.memory_space<vmem>>, vector<16x32xbf16>,
    %166 = vector.extract_strided_slice %153 {offsets = [3, 0, 0], sizes = [1, 16, 32], strides = [1, 1, 1]} : vector<8x16x32xf32> to vector<1x16x32xf32>
    %167 = vector.shape_cast %166 : vector<1x16x32xf32> to vector<16x32xf32>
    %168 = arith.truncf %167 : vector<16x32xf32> to vector<16x32xbf16>
    %c0_105 = arith.constant 0 : index
    %c96 = arith.constant 96 : index
    %169 = vector.load %arg23[%c0_105, %c96] : memref<32x128xbf16, #tpu.memory_space<vmem>>, vector<16x32xbf16>
    tpu.vector_store %arg23[%c0_105, %c96], %168 {strides = array<i32>} : memref<32x128xbf16, #tpu.memory_space<vmem>>, vector<16x32xbf16>,
    %170 = vector.extract_strided_slice %153 {offsets = [4, 0, 0], sizes = [1, 16, 32], strides = [1, 1, 1]} : vector<8x16x32xf32> to vector<1x16x32xf32>
    %171 = vector.shape_cast %170 : vector<1x16x32xf32> to vector<16x32xf32>
    %172 = arith.truncf %171 : vector<16x32xf32> to vector<16x32xbf16>
    %c16 = arith.constant 16 : index
    %c0_106 = arith.constant 0 : index
    %173 = vector.load %arg23[%c16, %c0_106] : memref<32x128xbf16, #tpu.memory_space<vmem>>, vector<16x32xbf16>
    tpu.vector_store %arg23[%c16, %c0_106], %172 {strides = array<i32>} : memref<32x128xbf16, #tpu.memory_space<vmem>>, vector<16x32xbf16>,
    %174 = vector.extract_strided_slice %153 {offsets = [5, 0, 0], sizes = [1, 16, 32], strides = [1, 1, 1]} : vector<8x16x32xf32> to vector<1x16x32xf32>
    %175 = vector.shape_cast %174 : vector<1x16x32xf32> to vector<16x32xf32>
    %176 = arith.truncf %175 : vector<16x32xf32> to vector<16x32xbf16>
    %c16_107 = arith.constant 16 : index
    %c32_108 = arith.constant 32 : index
    %177 = vector.load %arg23[%c16_107, %c32_108] : memref<32x128xbf16, #tpu.memory_space<vmem>>, vector<16x32xbf16>
    tpu.vector_store %arg23[%c16_107, %c32_108], %176 {strides = array<i32>} : memref<32x128xbf16, #tpu.memory_space<vmem>>, vector<16x32xbf16>,
    %178 = vector.extract_strided_slice %153 {offsets = [6, 0, 0], sizes = [1, 16, 32], strides = [1, 1, 1]} : vector<8x16x32xf32> to vector<1x16x32xf32>
    %179 = vector.shape_cast %178 : vector<1x16x32xf32> to vector<16x32xf32>
    %180 = arith.truncf %179 : vector<16x32xf32> to vector<16x32xbf16>
    %c16_109 = arith.constant 16 : index
    %c64_110 = arith.constant 64 : index
    %181 = vector.load %arg23[%c16_109, %c64_110] : memref<32x128xbf16, #tpu.memory_space<vmem>>, vector<16x32xbf16>
    tpu.vector_store %arg23[%c16_109, %c64_110], %180 {strides = array<i32>} : memref<32x128xbf16, #tpu.memory_space<vmem>>, vector<16x32xbf16>,
    %182 = vector.extract_strided_slice %153 {offsets = [7, 0, 0], sizes = [1, 16, 32], strides = [1, 1, 1]} : vector<8x16x32xf32> to vector<1x16x32xf32>
    %183 = vector.shape_cast %182 : vector<1x16x32xf32> to vector<16x32xf32>
    %184 = arith.truncf %183 : vector<16x32xf32> to vector<16x32xbf16>
    %c16_111 = arith.constant 16 : index
    %c96_112 = arith.constant 96 : index
    %185 = vector.load %arg23[%c16_111, %c96_112] : memref<32x128xbf16, #tpu.memory_space<vmem>>, vector<16x32xbf16>
    tpu.vector_store %arg23[%c16_111, %c96_112], %184 {strides = array<i32>} : memref<32x128xbf16, #tpu.memory_space<vmem>>, vector<16x32xbf16>,
    %c0_113 = arith.constant 0 : index
    %c0_114 = arith.constant 0 : index
    %186 = vector.load %arg23[%c0_113, %c0_114] : memref<32x128xbf16, #tpu.memory_space<vmem>>, vector<32x128xbf16>
    %c0_115 = arith.constant 0 : index
    %c0_116 = arith.constant 0 : index
    %c0_117 = arith.constant 0 : index
    %187 = vector.load %arg8[%c0_115, %c0_116, %c0_117] : memref<1x128x128xbf16, #tpu.memory_space<vmem>>, vector<1x128x128xbf16>
    %188 = vector.shape_cast %187 : vector<1x128x128xbf16> to vector<128x128xbf16>
    %cst_118 = arith.constant dense<0.000000e+00> : vector<32x128xf32>
    %189 = tpu.matmul %186, %188, %cst_118 {dimension_numbers = #tpu.dot_dimension_numbers<[1], [0], [0], [1], [0, 0, 1, 1], [], []>} : vector<32x128xbf16>, vector<128x128xbf16>, vector<32x128xf32> -> vector<32x128xf32>
    %c0_119 = arith.constant 0 : index
    %c0_120 = arith.constant 0 : index
    %c0_121 = arith.constant 0 : index
    %190 = vector.load %arg9[%c0_119, %c0_120, %c0_121] : memref<1x1x128xf32, #tpu.memory_space<vmem>>, vector<1x1x128xf32>
    %191 = vector.shape_cast %190 : vector<1x1x128xf32> to vector<1x128xf32>
    %192 = vector.broadcast %191 : vector<1x128xf32> to vector<32x128xf32>
    %193 = arith.addf %189, %192 : vector<32x128xf32>
    %194 = arith.addf %3, %193 : vector<32x128xf32>
    %c0_122 = arith.constant 0 : index
    %c0_123 = arith.constant 0 : index
    %c0_124 = arith.constant 0 : index
    %195 = vector.load %arg10[%c0_122, %c0_123, %c0_124] : memref<1x1x128xf32, #tpu.memory_space<vmem>>, vector<1x1x128xf32>
    %196 = vector.shape_cast %195 : vector<1x1x128xf32> to vector<1x128xf32>
    %c0_125 = arith.constant 0 : index
    %c0_126 = arith.constant 0 : index
    %c0_127 = arith.constant 0 : index
    %197 = vector.load %arg11[%c0_125, %c0_126, %c0_127] : memref<1x1x128xf32, #tpu.memory_space<vmem>>, vector<1x1x128xf32>
    %198 = vector.shape_cast %197 : vector<1x1x128xf32> to vector<1x128xf32>
    %cst_128 = arith.constant dense<0.000000e+00> : vector<32xf32>
    %199 = vector.multi_reduction <add>, %194, %cst_128 [1] : vector<32x128xf32> to vector<32xf32>
    %200 = vector.shape_cast %199 : vector<32xf32> to vector<32x1xf32>
    %cst_129 = arith.constant 1.280000e+02 : f32
    %201 = vector.broadcast %cst_129 : f32 to vector<32x1xf32>
    %202 = arith.divf %200, %201 : vector<32x1xf32>
    %203 = vector.broadcast %202 : vector<32x1xf32> to vector<32x128xf32>
    %204 = arith.subf %194, %203 : vector<32x128xf32>
    %205 = arith.mulf %204, %204 : vector<32x128xf32>
    %cst_130 = arith.constant dense<0.000000e+00> : vector<32xf32>
    %206 = vector.multi_reduction <add>, %205, %cst_130 [1] : vector<32x128xf32> to vector<32xf32>
    %207 = vector.shape_cast %206 : vector<32xf32> to vector<32x1xf32>
    %cst_131 = arith.constant 1.280000e+02 : f32
    %208 = vector.broadcast %cst_131 : f32 to vector<32x1xf32>
    %209 = arith.divf %207, %208 : vector<32x1xf32>
    %cst_132 = arith.constant 9.99999974E-6 : f32
    %210 = vector.broadcast %cst_132 : f32 to vector<32x1xf32>
    %211 = arith.addf %209, %210 : vector<32x1xf32>
    %212 = math.rsqrt %211 : vector<32x1xf32>
    %213 = vector.broadcast %212 : vector<32x1xf32> to vector<32x128xf32>
    %214 = arith.mulf %204, %213 : vector<32x128xf32>
    %215 = vector.broadcast %196 : vector<1x128xf32> to vector<32x128xf32>
    %216 = arith.mulf %214, %215 : vector<32x128xf32>
    %217 = vector.broadcast %198 : vector<1x128xf32> to vector<32x128xf32>
    %218 = arith.addf %216, %217 : vector<32x128xf32>
    %219 = arith.truncf %218 : vector<32x128xf32> to vector<32x128xbf16>
    %c0_133 = arith.constant 0 : index
    %c0_134 = arith.constant 0 : index
    %c0_135 = arith.constant 0 : index
    %220 = vector.load %arg12[%c0_133, %c0_134, %c0_135] : memref<1x128x512xbf16, #tpu.memory_space<vmem>>, vector<1x128x512xbf16>
    %221 = vector.shape_cast %220 : vector<1x128x512xbf16> to vector<128x512xbf16>
    %cst_136 = arith.constant dense<0.000000e+00> : vector<32x512xf32>
    %222 = tpu.matmul %219, %221, %cst_136 {dimension_numbers = #tpu.dot_dimension_numbers<[1], [0], [0], [1], [0, 0, 1, 1], [], []>} : vector<32x128xbf16>, vector<128x512xbf16>, vector<32x512xf32> -> vector<32x512xf32>
    %c0_137 = arith.constant 0 : index
    %c0_138 = arith.constant 0 : index
    %c0_139 = arith.constant 0 : index
    %223 = vector.load %arg13[%c0_137, %c0_138, %c0_139] : memref<1x1x512xf32, #tpu.memory_space<vmem>>, vector<1x1x512xf32>
    %224 = vector.shape_cast %223 : vector<1x1x512xf32> to vector<1x512xf32>
    %225 = vector.broadcast %224 : vector<1x512xf32> to vector<32x512xf32>
    %226 = arith.addf %222, %225 : vector<32x512xf32>
    %cst_140 = arith.constant 0.000000e+00 : f32
    %227 = vector.broadcast %cst_140 : f32 to vector<32x512xf32>
    %228 = arith.maximumf %226, %227 : vector<32x512xf32>
    %229 = arith.truncf %228 : vector<32x512xf32> to vector<32x512xbf16>
    %c0_141 = arith.constant 0 : index
    %c0_142 = arith.constant 0 : index
    %c0_143 = arith.constant 0 : index
    %230 = vector.load %arg14[%c0_141, %c0_142, %c0_143] : memref<1x512x128xbf16, #tpu.memory_space<vmem>>, vector<1x512x128xbf16>
    %231 = vector.shape_cast %230 : vector<1x512x128xbf16> to vector<512x128xbf16>
    %cst_144 = arith.constant dense<0.000000e+00> : vector<32x128xf32>
    %232 = tpu.matmul %229, %231, %cst_144 {dimension_numbers = #tpu.dot_dimension_numbers<[1], [0], [0], [1], [0, 0, 1, 1], [], []>} : vector<32x512xbf16>, vector<512x128xbf16>, vector<32x128xf32> -> vector<32x128xf32>
    %c0_145 = arith.constant 0 : index
    %c0_146 = arith.constant 0 : index
    %c0_147 = arith.constant 0 : index
    %233 = vector.load %arg15[%c0_145, %c0_146, %c0_147] : memref<1x1x128xf32, #tpu.memory_space<vmem>>, vector<1x1x128xf32>
    %234 = vector.shape_cast %233 : vector<1x1x128xf32> to vector<1x128xf32>
    %235 = vector.broadcast %234 : vector<1x128xf32> to vector<32x128xf32>
    %236 = arith.addf %232, %235 : vector<32x128xf32>
    %237 = arith.addf %194, %236 : vector<32x128xf32>
    %c0_148 = arith.constant 0 : index
    %c0_149 = arith.constant 0 : index
    %238 = vector.load %arg19[%c0_148, %c0_149] : memref<32x128xf32, #tpu.memory_space<vmem>>, vector<32x128xf32>
    tpu.vector_store %arg19[%c0_148, %c0_149], %237 {strides = array<i32>} : memref<32x128xf32, #tpu.memory_space<vmem>>, vector<32x128xf32>,
    %c1_i32 = arith.constant 1 : i32
    %239 = arith.cmpi eq, %arg1, %c1_i32 : i32
    %240 = arith.extui %239 : i1 to i32
    %c0_i32_150 = arith.constant 0 : i32
    %241 = arith.cmpi ne, %240, %c0_i32_150 : i32
    scf.if %241 {
      %c0_151 = arith.constant 0 : index
      %c0_152 = arith.constant 0 : index
      %242 = vector.load %arg16[%c0_151, %c0_152] : memref<1x128xf32, #tpu.memory_space<vmem>>, vector<1x128xf32>
      %c0_153 = arith.constant 0 : index
      %c0_154 = arith.constant 0 : index
      %243 = vector.load %arg17[%c0_153, %c0_154] : memref<1x128xf32, #tpu.memory_space<vmem>>, vector<1x128xf32>
      %cst_155 = arith.constant dense<0.000000e+00> : vector<32xf32>
      %244 = vector.multi_reduction <add>, %237, %cst_155 [1] : vector<32x128xf32> to vector<32xf32>
      %245 = vector.shape_cast %244 : vector<32xf32> to vector<32x1xf32>
      %cst_156 = arith.constant 1.280000e+02 : f32
      %246 = vector.broadcast %cst_156 : f32 to vector<32x1xf32>
      %247 = arith.divf %245, %246 : vector<32x1xf32>
      %248 = vector.broadcast %247 : vector<32x1xf32> to vector<32x128xf32>
      %249 = arith.subf %237, %248 : vector<32x128xf32>
      %250 = arith.mulf %249, %249 : vector<32x128xf32>
      %cst_157 = arith.constant dense<0.000000e+00> : vector<32xf32>
      %251 = vector.multi_reduction <add>, %250, %cst_157 [1] : vector<32x128xf32> to vector<32xf32>
      %252 = vector.shape_cast %251 : vector<32xf32> to vector<32x1xf32>
      %cst_158 = arith.constant 1.280000e+02 : f32
      %253 = vector.broadcast %cst_158 : f32 to vector<32x1xf32>
      %254 = arith.divf %252, %253 : vector<32x1xf32>
      %cst_159 = arith.constant 9.99999974E-6 : f32
      %255 = vector.broadcast %cst_159 : f32 to vector<32x1xf32>
      %256 = arith.addf %254, %255 : vector<32x1xf32>
      %257 = math.rsqrt %256 : vector<32x1xf32>
      %258 = vector.broadcast %257 : vector<32x1xf32> to vector<32x128xf32>
      %259 = arith.mulf %249, %258 : vector<32x128xf32>
      %260 = vector.broadcast %242 : vector<1x128xf32> to vector<32x128xf32>
      %261 = arith.mulf %259, %260 : vector<32x128xf32>
      %262 = vector.broadcast %243 : vector<1x128xf32> to vector<32x128xf32>
      %263 = arith.addf %261, %262 : vector<32x128xf32>
      %264 = vector.shape_cast %263 : vector<32x128xf32> to vector<2x16x128xf32>
      %c0_160 = arith.constant 0 : index
      %c0_161 = arith.constant 0 : index
      %c0_162 = arith.constant 0 : index
      %265 = vector.load %arg18[%c0_160, %c0_161, %c0_162] : memref<2x16x128xf32, #tpu.memory_space<vmem>>, vector<2x16x128xf32>
      tpu.vector_store %arg18[%c0_160, %c0_161, %c0_162], %264 {strides = array<i32>} : memref<2x16x128xf32, #tpu.memory_space<vmem>>, vector<2x16x128xf32>,
    } else {
    }
    return
  }
  func.func @transform_0(%arg0: i32, %arg1: i32) -> (i32, i32, i32) {
    %c0_i32 = arith.constant 0 : i32
    %c0_i32_0 = arith.constant 0 : i32
    %c0_i32_1 = arith.constant 0 : i32
    return %arg0, %c0_i32, %c0_i32_0 : i32, i32, i32
  }
  func.func @transform_1(%arg0: i32, %arg1: i32) -> (i32, i32, i32) {
    %c0_i32 = arith.constant 0 : i32
    %c0_i32_0 = arith.constant 0 : i32
    %c0_i32_1 = arith.constant 0 : i32
    return %arg0, %c0_i32, %c0_i32_0 : i32, i32, i32
  }
  func.func @transform_2(%arg0: i32, %arg1: i32) -> (i32, i32, i32) {
    %c0_i32 = arith.constant 0 : i32
    %c0_i32_0 = arith.constant 0 : i32
    %c0_i32_1 = arith.constant 0 : i32
    return %arg1, %c0_i32, %c0_i32_0 : i32, i32, i32
  }
  func.func @transform_3(%arg0: i32, %arg1: i32) -> (i32, i32, i32) {
    %c0_i32 = arith.constant 0 : i32
    %c0_i32_0 = arith.constant 0 : i32
    %c0_i32_1 = arith.constant 0 : i32
    return %arg1, %c0_i32, %c0_i32_0 : i32, i32, i32
  }
  func.func @transform_4(%arg0: i32, %arg1: i32) -> (i32, i32, i32) {
    %c0_i32 = arith.constant 0 : i32
    %c0_i32_0 = arith.constant 0 : i32
    %c0_i32_1 = arith.constant 0 : i32
    return %arg1, %c0_i32, %c0_i32_0 : i32, i32, i32
  }
  func.func @transform_5(%arg0: i32, %arg1: i32) -> (i32, i32, i32) {
    %c0_i32 = arith.constant 0 : i32
    %c0_i32_0 = arith.constant 0 : i32
    %c0_i32_1 = arith.constant 0 : i32
    return %arg1, %c0_i32, %c0_i32_0 : i32, i32, i32
  }
  func.func @transform_6(%arg0: i32, %arg1: i32) -> (i32, i32, i32) {
    %c0_i32 = arith.constant 0 : i32
    %c0_i32_0 = arith.constant 0 : i32
    %c0_i32_1 = arith.constant 0 : i32
    return %arg1, %c0_i32, %c0_i32_0 : i32, i32, i32
  }
  func.func @transform_7(%arg0: i32, %arg1: i32) -> (i32, i32, i32) {
    %c0_i32 = arith.constant 0 : i32
    %c0_i32_0 = arith.constant 0 : i32
    %c0_i32_1 = arith.constant 0 : i32
    return %arg1, %c0_i32, %c0_i32_0 : i32, i32, i32
  }
  func.func @transform_8(%arg0: i32, %arg1: i32) -> (i32, i32, i32) {
    %c0_i32 = arith.constant 0 : i32
    %c0_i32_0 = arith.constant 0 : i32
    %c0_i32_1 = arith.constant 0 : i32
    return %arg1, %c0_i32, %c0_i32_0 : i32, i32, i32
  }
  func.func @transform_9(%arg0: i32, %arg1: i32) -> (i32, i32, i32) {
    %c0_i32 = arith.constant 0 : i32
    %c0_i32_0 = arith.constant 0 : i32
    %c0_i32_1 = arith.constant 0 : i32
    return %arg1, %c0_i32, %c0_i32_0 : i32, i32, i32
  }
  func.func @transform_10(%arg0: i32, %arg1: i32) -> (i32, i32, i32) {
    %c0_i32 = arith.constant 0 : i32
    %c0_i32_0 = arith.constant 0 : i32
    %c0_i32_1 = arith.constant 0 : i32
    return %arg1, %c0_i32, %c0_i32_0 : i32, i32, i32
  }
  func.func @transform_11(%arg0: i32, %arg1: i32) -> (i32, i32, i32) {
    %c0_i32 = arith.constant 0 : i32
    %c0_i32_0 = arith.constant 0 : i32
    %c0_i32_1 = arith.constant 0 : i32
    return %arg1, %c0_i32, %c0_i32_0 : i32, i32, i32
  }
  func.func @transform_12(%arg0: i32, %arg1: i32) -> (i32, i32, i32) {
    %c0_i32 = arith.constant 0 : i32
    %c0_i32_0 = arith.constant 0 : i32
    %c0_i32_1 = arith.constant 0 : i32
    return %arg1, %c0_i32, %c0_i32_0 : i32, i32, i32
  }
  func.func @transform_13(%arg0: i32, %arg1: i32) -> (i32, i32, i32) {
    %c0_i32 = arith.constant 0 : i32
    %c0_i32_0 = arith.constant 0 : i32
    %c0_i32_1 = arith.constant 0 : i32
    return %arg1, %c0_i32, %c0_i32_0 : i32, i32, i32
  }
  func.func @transform_14(%arg0: i32, %arg1: i32) -> (i32, i32) {
    %c0_i32 = arith.constant 0 : i32
    %c0_i32_0 = arith.constant 0 : i32
    %c0_i32_1 = arith.constant 0 : i32
    return %c0_i32, %c0_i32_0 : i32, i32
  }
  func.func @transform_15(%arg0: i32, %arg1: i32) -> (i32, i32) {
    %c0_i32 = arith.constant 0 : i32
    %c0_i32_0 = arith.constant 0 : i32
    %c0_i32_1 = arith.constant 0 : i32
    return %c0_i32, %c0_i32_0 : i32, i32
  }
  func.func @transform_16(%arg0: i32, %arg1: i32) -> (i32, i32, i32) {
    %c0_i32 = arith.constant 0 : i32
    %c0_i32_0 = arith.constant 0 : i32
    %c0_i32_1 = arith.constant 0 : i32
    return %arg0, %c0_i32, %c0_i32_0 : i32, i32, i32
  }
}

</mosaic_0001>

<llo_original>
// kernel: tpu_custom_call.1
$region0: #{tpu_custom_call.1}
  #allocation0 [shape = 'u32[]', space=smem, size = 0x4, offset = 0x4, fixed_abs, tag = 'smem constant byte address 0x4 - core index']
  #allocation1 [shape = 'u32[144,128]{1,0:T(1,128)}', space=vmem, size = 0x12000, scoped, tag = 'internal scratch']
  #allocation2 [shape = 'f32[32,128]{1,0:T(8,128)}', space=vmem, size = 0x4000, scoped, tag = 'scratch operand']
  #allocation3 [shape = 'bf16[8,16,32]{2,1,0:T(16,128)(2,1)}', space=vmem, size = 0x8000, scoped, tag = 'scratch operand']
  #allocation4 [shape = 'bf16[8,16,32]{2,1,0:T(16,128)(2,1)}', space=vmem, size = 0x8000, scoped, tag = 'scratch operand']
  #allocation5 [shape = 'bf16[8,16,32]{2,1,0:T(16,128)(2,1)}', space=vmem, size = 0x8000, scoped, tag = 'scratch operand']
  #allocation6 [shape = 'bf16[32,128]{1,0:T(16,128)(2,1)}', space=vmem, size = 0x2000, scoped, tag = 'scratch operand']
  %s0 = inlined_call_operand.hbm [shape: f32[4,16,128], index: 0, kind: input, shape index: {}]
  %s1 = inlined_call_operand.hbm [shape: f32[16,1,16], index: 1, kind: input, shape index: {}]
  %s2 = inlined_call_operand.hbm [shape: f32[2,1,128], index: 2, kind: input, shape index: {}]
  %s3 = inlined_call_operand.hbm [shape: f32[2,1,128], index: 3, kind: input, shape index: {}]
  %s4 = inlined_call_operand.hbm [shape: bf16[2,128,384], index: 4, kind: input, shape index: {}]
  %s5 = inlined_call_operand.vmem [shape: f32[2,1,384], index: 5, kind: input, shape index: {}]
  %s6 = inlined_call_operand.hbm [shape: bf16[2,128,128], index: 6, kind: input, shape index: {}]
  %s7 = inlined_call_operand.vmem [shape: f32[2,1,128], index: 7, kind: input, shape index: {}]
  %s8 = inlined_call_operand.vmem [shape: f32[2,1,128], index: 8, kind: input, shape index: {}]
  %s9 = inlined_call_operand.vmem [shape: f32[2,1,128], index: 9, kind: input, shape index: {}]
  %s10 = inlined_call_operand.hbm [shape: bf16[2,128,512], index: 10, kind: input, shape index: {}]
  %s11 = inlined_call_operand.vmem [shape: f32[2,1,512], index: 11, kind: input, shape index: {}]
  %s12 = inlined_call_operand.hbm [shape: bf16[2,512,128], index: 12, kind: input, shape index: {}]
  %s13 = inlined_call_operand.vmem [shape: f32[2,1,128], index: 13, kind: input, shape index: {}]
  %s14 = inlined_call_operand.vmem [shape: f32[1,128], index: 14, kind: input, shape index: {}]
  %s15 = inlined_call_operand.vmem [shape: f32[1,128], index: 15, kind: input, shape index: {}]
  %s16 = inlined_call_operand.hbm [shape: f32[4,16,128], index: 16, kind: output, shape index: {}]
  %s17 = sld [smem:[#allocation0]]
  $region137: #{tpu_custom_call.1} parent=0
    _
  %s19 = ssub.s32 1, %s17
  %s20 = scalar_select 0, %s19, %s17
  $region1: #{tpu_custom_call.1} parent=0
    #allocation7 [shape = 'u8[32768]{0}', space=vmem, size = 0x8000, scoped, tag = 'input window, operand 0']
    #allocation8 [shape = 's32[2]{0}', space=sflag, size = 0x8, scoped, tag = 'scoped memory for tpu_custom_call.1']
    #allocation9 [shape = 's32[2]{0}', space=sflag, size = 0x8, scoped, tag = 'scoped memory for tpu_custom_call.1']
    #allocation10 [shape = 'u8[8192]{0}', space=vmem, size = 0x2000, scoped, tag = 'input window, operand 1']
    #allocation11 [shape = 's32[2]{0}', space=sflag, size = 0x8, scoped, tag = 'scoped memory for tpu_custom_call.1']
    #allocation12 [shape = 'u8[1024]{0}', space=vmem, size = 0x400, scoped, tag = 'input window, operand 2']
    #allocation13 [shape = 'u8[1024]{0}', space=vmem, size = 0x400, scoped, tag = 'input window, operand 3']
    #allocation14 [shape = 's32[2]{0}', space=sflag, size = 0x8, scoped, tag = 'scoped memory for tpu_custom_call.1']
    #allocation15 [shape = 'u8[196608]{0}', space=vmem, size = 0x30000, scoped, tag = 'input window, operand 4']
    #allocation16 [shape = 'u8[65536]{0}', space=vmem, size = 0x10000, scoped, tag = 'input window, operand 6']
    #allocation17 [shape = 's32[2]{0}', space=sflag, size = 0x8, scoped, tag = 'scoped memory for tpu_custom_call.1']
    #allocation18 [shape = 'u8[262144]{0}', space=vmem, size = 0x40000, scoped, tag = 'input window, operand 10']
    #allocation19 [shape = 'u8[262144]{0}', space=vmem, size = 0x40000, scoped, tag = 'input window, operand 12']
    #allocation20 [shape = 's32[2]{0}', space=sflag, size = 0x8, scoped, tag = 'scoped memory for tpu_custom_call.1']
    #allocation21 [shape = 'u8[32768]{0}', space=vmem, size = 0x8000, scoped, tag = 'output window, operand 0']
    %21 = vsyncpa [#allocation8], 0
    %s22 = scalar_lea.sflag [#allocation8], 1
    %23 = vsyncpa %s22, 0
    %24 = vsyncpa [#allocation11], 0
    %s25 = scalar_lea.sflag [#allocation11], 1
    %26 = vsyncpa %s25, 0
    %27 = vsyncpa [#allocation14], 0
    %s28 = scalar_lea.sflag [#allocation14], 1
    %29 = vsyncpa %s28, 0
    %30 = vsyncpa [#allocation17], 0
    %s31 = scalar_lea.sflag [#allocation17], 1
    %32 = vsyncpa %s31, 0
    %33 = vsyncpa [#allocation20], 0
    %s34 = scalar_lea.sflag [#allocation20], 1
    %35 = vsyncpa %s34, 0
    %36 = vsyncpa [#allocation9], 0
    %s37 = scalar_lea.sflag [#allocation9], 1
    %38 = vsyncpa %s37, 0
    loop: start=0, step=1, limit=6
    $region2: #{tpu_custom_call.1} parent=1 // loop_pre_header
      _
    $region3: #{tpu_custom_call.1} parent=1 // loop_header
      %s40 = sphi 0, %s44
      %p41 = scmp.ge.s32.totalorder %s40, 6
      %s47 = sphi 0, %s59
      %s48 = sphi 0, %s55
      %s49 = sphi 0, %s47
      %s50 = sphi 0, %s48
      %s51 = sphi 0, %s49
      %s52 = sphi 0, %s50
      %s62 = sphi 0, %s64
      %s65 = sphi 0, %s62
      %s66 = sphi 0, %s65
      %s82 = sphi 0, %s66
      %s88 = sphi 0, %s90
      %s91 = sphi 0, %s88
      %s92 = sphi 0, %s91
      %s108 = sphi 0, %s92
      %s114 = sphi 0, %s116
      %s117 = sphi 0, %s114
      %s118 = sphi 0, %s117
      %s134 = sphi 0, %s118
      %s140 = sphi 0, %s142
      %s143 = sphi 0, %s140
      %s144 = sphi 0, %s143
      %s160 = sphi 0, %s144
      %s166 = sphi 0, %s168
      %s169 = sphi 0, %s166
      %s170 = sphi 0, %s169
      %s186 = sphi 0, %s170
      %s192 = sphi 0, %s194
      %s195 = sphi 0, %s192
      %s196 = sphi 0, %s195
      %s212 = sphi 0, %s196
      %s218 = sphi 0, %s220
      %s221 = sphi 0, %s218
      %s222 = sphi 0, %s221
      %s238 = sphi 0, %s222
      %s244 = sphi 0, %s246
      %s247 = sphi 0, %s244
      %s248 = sphi 0, %s247
      %s264 = sphi 0, %s248
      %s270 = sphi 0, %s272
      %s273 = sphi 0, %s270
      %s274 = sphi 0, %s273
      %s290 = sphi 0, %s274
      %s296 = sphi 0, %s298
      %s299 = sphi 0, %s296
      %s300 = sphi 0, %s299
      %s316 = sphi 0, %s300
      %s322 = sphi 0, %s324
      %s325 = sphi 0, %s322
      %s326 = sphi 0, %s325
      %s342 = sphi 0, %s326
      %s348 = sphi 0, %s350
      %s351 = sphi 0, %s348
      %s352 = sphi 0, %s351
      %s368 = sphi 0, %s352
      %s374 = sphi 0, %s376
      %s377 = sphi 0, %s374
      %s378 = sphi 0, %s377
      %s394 = sphi 0, %s378
      %s400 = sphi 0, %s402
      %s403 = sphi 0, %s400
      %s404 = sphi 0, %s403
      %s420 = sphi 0, %s404
      %s424 = sphi 0, %s424
      %s426 = sphi 0, %s424
      %s427 = sphi 0, %s426
      %s441 = sphi 0, %s427
      %s445 = sphi 0, %s445
      %s447 = sphi 0, %s445
      %s448 = sphi 0, %s447
      %s462 = sphi 0, %s448
      %s468 = sphi 0, %s470
      %s471 = sphi 0, %s468
      %s472 = sphi 0, %s471
      %s488 = sphi 0, %s472
    $region4: #{tpu_custom_call.1} parent=1 // loop_header_branch
      %43 = sbr.rel (%p41) target = $region8
    $region5: #{tpu_custom_call.1} parent=1 // loop_body
      %s45 = ssub.s32 %s40, 1
      %s46 = ssub.s32 %s40, 2
      %s53 = sadd.s32 1, %s48
      %p54 = scmp.ge.s32.totalorder %s53, 2
      %s55 = scalar_select %p54, 0, %s53
      %s56 = sadd.s32 1, %s47
      %s57 = scalar_select %p54, %s56, %s47
      %p58 = scmp.ge.s32.totalorder %s57, 2
      %s59 = scalar_select %p58, 0, %s57
      %s60 = ssub.s32 %s47, %s59
      %p61 = scmp.eq.s32.totalorder %s60, 0
      %s63 = sadd.s32 %s62, 1
      %s64 = scalar_select %p61, %s62, %s63
      %p67 = pneg %p61
      %p68 = scmp.eq.s32.totalorder %s40, 3
      %p69 = por %p67, %p68
      %p70 = scmp.ne.s32.totalorder %s62, %s65
      %p71 = scmp.eq.s32.totalorder %s40, 0
      %p72 = por %p70, %p71
      %p73 = scmp.ne.s32.totalorder %s62, %s65
      %p74 = scmp.eq.s32.totalorder %s45, 3
      %p75 = por %p73, %p74
      %p76 = scmp.ne.s32.totalorder %s65, %s66
      %p77 = scmp.eq.s32.totalorder %s45, 0
      %p78 = por %p76, %p77
      %p79 = scmp.ne.s32.totalorder %s65, %s66
      %p80 = scmp.eq.s32.totalorder %s46, 3
      %p81 = por %p79, %p80
      %p83 = scmp.ne.s32.totalorder %s66, %s82
      %p84 = scmp.eq.s32.totalorder %s46, 0
      %p85 = por %p83, %p84
      %s86 = ssub.s32 %s47, %s59
      %p87 = scmp.eq.s32.totalorder %s86, 0
      %s89 = sadd.s32 %s88, 1
      %s90 = scalar_select %p87, %s88, %s89
      %p93 = pneg %p87
      %p94 = scmp.eq.s32.totalorder %s40, 3
      %p95 = por %p93, %p94
      %p96 = scmp.ne.s32.totalorder %s88, %s91
      %p97 = scmp.eq.s32.totalorder %s40, 0
      %p98 = por %p96, %p97
      %p99 = scmp.ne.s32.totalorder %s88, %s91
      %p100 = scmp.eq.s32.totalorder %s45, 3
      %p101 = por %p99, %p100
      %p102 = scmp.ne.s32.totalorder %s91, %s92
      %p103 = scmp.eq.s32.totalorder %s45, 0
      %p104 = por %p102, %p103
      %p105 = scmp.ne.s32.totalorder %s91, %s92
      %p106 = scmp.eq.s32.totalorder %s46, 3
      %p107 = por %p105, %p106
      %p109 = scmp.ne.s32.totalorder %s92, %s108
      %p110 = scmp.eq.s32.totalorder %s46, 0
      %p111 = por %p109, %p110
      %s112 = ssub.s32 %s48, %s55
      %p113 = scmp.eq.s32.totalorder %s112, 0
      %s115 = sadd.s32 %s114, 1
      %s116 = scalar_select %p113, %s114, %s115
      %p119 = pneg %p113
      %p120 = scmp.eq.s32.totalorder %s40, 3
      %p121 = por %p119, %p120
      %p122 = scmp.ne.s32.totalorder %s114, %s117
      %p123 = scmp.eq.s32.totalorder %s40, 0
      %p124 = por %p122, %p123
      %p125 = scmp.ne.s32.totalorder %s114, %s117
      %p126 = scmp.eq.s32.totalorder %s45, 3
      %p127 = por %p125, %p126
      %p128 = scmp.ne.s32.totalorder %s117, %s118
      %p129 = scmp.eq.s32.totalorder %s45, 0
      %p130 = por %p128, %p129
      %p131 = scmp.ne.s32.totalorder %s117, %s118
      %p132 = scmp.eq.s32.totalorder %s46, 3
      %p133 = por %p131, %p132
      %p135 = scmp.ne.s32.totalorder %s118, %s134
      %p136 = scmp.eq.s32.totalorder %s46, 0
      %p137 = por %p135, %p136
      %s138 = ssub.s32 %s48, %s55
      %p139 = scmp.eq.s32.totalorder %s138, 0
      %s141 = sadd.s32 %s140, 1
      %s142 = scalar_select %p139, %s140, %s141
      %p145 = pneg %p139
      %p146 = scmp.eq.s32.totalorder %s40, 3
      %p147 = por %p145, %p146
      %p148 = scmp.ne.s32.totalorder %s140, %s143
      %p149 = scmp.eq.s32.totalorder %s40, 0
      %p150 = por %p148, %p149
      %p151 = scmp.ne.s32.totalorder %s140, %s143
      %p152 = scmp.eq.s32.totalorder %s45, 3
      %p153 = por %p151, %p152
      %p154 = scmp.ne.s32.totalorder %s143, %s144
      %p155 = scmp.eq.s32.totalorder %s45, 0
      %p156 = por %p154, %p155
      %p157 = scmp.ne.s32.totalorder %s143, %s144
      %p158 = scmp.eq.s32.totalorder %s46, 3
      %p159 = por %p157, %p158
      %p161 = scmp.ne.s32.totalorder %s144, %s160
      %p162 = scmp.eq.s32.totalorder %s46, 0
      %p163 = por %p161, %p162
      %s164 = ssub.s32 %s48, %s55
      %p165 = scmp.eq.s32.totalorder %s164, 0
      %s167 = sadd.s32 %s166, 1
      %s168 = scalar_select %p165, %s166, %s167
      %p171 = pneg %p165
      %p172 = scmp.eq.s32.totalorder %s40, 3
      %p173 = por %p171, %p172
      %p174 = scmp.ne.s32.totalorder %s166, %s169
      %p175 = scmp.eq.s32.totalorder %s40, 0
      %p176 = por %p174, %p175
      %p177 = scmp.ne.s32.totalorder %s166, %s169
      %p178 = scmp.eq.s32.totalorder %s45, 3
      %p179 = por %p177, %p178
      %p180 = scmp.ne.s32.totalorder %s169, %s170
      %p181 = scmp.eq.s32.totalorder %s45, 0
      %p182 = por %p180, %p181
      %p183 = scmp.ne.s32.totalorder %s169, %s170
      %p184 = scmp.eq.s32.totalorder %s46, 3
      %p185 = por %p183, %p184
      %p187 = scmp.ne.s32.totalorder %s170, %s186
      %p188 = scmp.eq.s32.totalorder %s46, 0
      %p189 = por %p187, %p188
      %s190 = ssub.s32 %s48, %s55
      %p191 = scmp.eq.s32.totalorder %s190, 0
      %s193 = sadd.s32 %s192, 1
      %s194 = scalar_select %p191, %s192, %s193
      %p197 = pneg %p191
      %p198 = scmp.eq.s32.totalorder %s40, 3
      %p199 = por %p197, %p198
      %p200 = scmp.ne.s32.totalorder %s192, %s195
      %p201 = scmp.eq.s32.totalorder %s40, 0
      %p202 = por %p200, %p201
      %p203 = scmp.ne.s32.totalorder %s192, %s195
      %p204 = scmp.eq.s32.totalorder %s45, 3
      %p205 = por %p203, %p204
      %p206 = scmp.ne.s32.totalorder %s195, %s196
      %p207 = scmp.eq.s32.totalorder %s45, 0
      %p208 = por %p206, %p207
      %p209 = scmp.ne.s32.totalorder %s195, %s196
      %p210 = scmp.eq.s32.totalorder %s46, 3
      %p211 = por %p209, %p210
      %p213 = scmp.ne.s32.totalorder %s196, %s212
      %p214 = scmp.eq.s32.totalorder %s46, 0
      %p215 = por %p213, %p214
      %s216 = ssub.s32 %s48, %s55
      %p217 = scmp.eq.s32.totalorder %s216, 0
      %s219 = sadd.s32 %s218, 1
      %s220 = scalar_select %p217, %s218, %s219
      %p223 = pneg %p217
      %p224 = scmp.eq.s32.totalorder %s40, 3
      %p225 = por %p223, %p224
      %p226 = scmp.ne.s32.totalorder %s218, %s221
      %p227 = scmp.eq.s32.totalorder %s40, 0
      %p228 = por %p226, %p227
      %p229 = scmp.ne.s32.totalorder %s218, %s221
      %p230 = scmp.eq.s32.totalorder %s45, 3
      %p231 = por %p229, %p230
      %p232 = scmp.ne.s32.totalorder %s221, %s222
      %p233 = scmp.eq.s32.totalorder %s45, 0
      %p234 = por %p232, %p233
      %p235 = scmp.ne.s32.totalorder %s221, %s222
      %p236 = scmp.eq.s32.totalorder %s46, 3
      %p237 = por %p235, %p236
      %p239 = scmp.ne.s32.totalorder %s222, %s238
      %p240 = scmp.eq.s32.totalorder %s46, 0
      %p241 = por %p239, %p240
      %s242 = ssub.s32 %s48, %s55
      %p243 = scmp.eq.s32.totalorder %s242, 0
      %s245 = sadd.s32 %s244, 1
      %s246 = scalar_select %p243, %s244, %s245
      %p249 = pneg %p243
      %p250 = scmp.eq.s32.totalorder %s40, 3
      %p251 = por %p249, %p250
      %p252 = scmp.ne.s32.totalorder %s244, %s247
      %p253 = scmp.eq.s32.totalorder %s40, 0
      %p254 = por %p252, %p253
      %p255 = scmp.ne.s32.totalorder %s244, %s247
      %p256 = scmp.eq.s32.totalorder %s45, 3
      %p257 = por %p255, %p256
      %p258 = scmp.ne.s32.totalorder %s247, %s248
      %p259 = scmp.eq.s32.totalorder %s45, 0
      %p260 = por %p258, %p259
      %p261 = scmp.ne.s32.totalorder %s247, %s248
      %p262 = scmp.eq.s32.totalorder %s46, 3
      %p263 = por %p261, %p262
      %p265 = scmp.ne.s32.totalorder %s248, %s264
      %p266 = scmp.eq.s32.totalorder %s46, 0
      %p267 = por %p265, %p266
      %s268 = ssub.s32 %s48, %s55
      %p269 = scmp.eq.s32.totalorder %s268, 0
      %s271 = sadd.s32 %s270, 1
      %s272 = scalar_select %p269, %s270, %s271
      %p275 = pneg %p269
      %p276 = scmp.eq.s32.totalorder %s40, 3
      %p277 = por %p275, %p276
      %p278 = scmp.ne.s32.totalorder %s270, %s273
      %p279 = scmp.eq.s32.totalorder %s40, 0
      %p280 = por %p278, %p279
      %p281 = scmp.ne.s32.totalorder %s270, %s273
      %p282 = scmp.eq.s32.totalorder %s45, 3
      %p283 = por %p281, %p282
      %p284 = scmp.ne.s32.totalorder %s273, %s274
      %p285 = scmp.eq.s32.totalorder %s45, 0
      %p286 = por %p284, %p285
      %p287 = scmp.ne.s32.totalorder %s273, %s274
      %p288 = scmp.eq.s32.totalorder %s46, 3
      %p289 = por %p287, %p288
      %p291 = scmp.ne.s32.totalorder %s274, %s290
      %p292 = scmp.eq.s32.totalorder %s46, 0
      %p293 = por %p291, %p292
      %s294 = ssub.s32 %s48, %s55
      %p295 = scmp.eq.s32.totalorder %s294, 0
      %s297 = sadd.s32 %s296, 1
      %s298 = scalar_select %p295, %s296, %s297
      %p301 = pneg %p295
      %p302 = scmp.eq.s32.totalorder %s40, 3
      %p303 = por %p301, %p302
      %p304 = scmp.ne.s32.totalorder %s296, %s299
      %p305 = scmp.eq.s32.totalorder %s40, 0
      %p306 = por %p304, %p305
      %p307 = scmp.ne.s32.totalorder %s296, %s299
      %p308 = scmp.eq.s32.totalorder %s45, 3
      %p309 = por %p307, %p308
      %p310 = scmp.ne.s32.totalorder %s299, %s300
      %p311 = scmp.eq.s32.totalorder %s45, 0
      %p312 = por %p310, %p311
      %p313 = scmp.ne.s32.totalorder %s299, %s300
      %p314 = scmp.eq.s32.totalorder %s46, 3
      %p315 = por %p313, %p314
      %p317 = scmp.ne.s32.totalorder %s300, %s316
      %p318 = scmp.eq.s32.totalorder %s46, 0
      %p319 = por %p317, %p318
      %s320 = ssub.s32 %s48, %s55
      %p321 = scmp.eq.s32.totalorder %s320, 0
      %s323 = sadd.s32 %s322, 1
      %s324 = scalar_select %p321, %s322, %s323
      %p327 = pneg %p321
      %p328 = scmp.eq.s32.totalorder %s40, 3
      %p329 = por %p327, %p328
      %p330 = scmp.ne.s32.totalorder %s322, %s325
      %p331 = scmp.eq.s32.totalorder %s40, 0
      %p332 = por %p330, %p331
      %p333 = scmp.ne.s32.totalorder %s322, %s325
      %p334 = scmp.eq.s32.totalorder %s45, 3
      %p335 = por %p333, %p334
      %p336 = scmp.ne.s32.totalorder %s325, %s326
      %p337 = scmp.eq.s32.totalorder %s45, 0
      %p338 = por %p336, %p337
      %p339 = scmp.ne.s32.totalorder %s325, %s326
      %p340 = scmp.eq.s32.totalorder %s46, 3
      %p341 = por %p339, %p340
      %p343 = scmp.ne.s32.totalorder %s326, %s342
      %p344 = scmp.eq.s32.totalorder %s46, 0
      %p345 = por %p343, %p344
      %s346 = ssub.s32 %s48, %s55
      %p347 = scmp.eq.s32.totalorder %s346, 0
      %s349 = sadd.s32 %s348, 1
      %s350 = scalar_select %p347, %s348, %s349
      %p353 = pneg %p347
      %p354 = scmp.eq.s32.totalorder %s40, 3
      %p355 = por %p353, %p354
      %p356 = scmp.ne.s32.totalorder %s348, %s351
      %p357 = scmp.eq.s32.totalorder %s40, 0
      %p358 = por %p356, %p357
      %p359 = scmp.ne.s32.totalorder %s348, %s351
      %p360 = scmp.eq.s32.totalorder %s45, 3
      %p361 = por %p359, %p360
      %p362 = scmp.ne.s32.totalorder %s351, %s352
      %p363 = scmp.eq.s32.totalorder %s45, 0
      %p364 = por %p362, %p363
      %p365 = scmp.ne.s32.totalorder %s351, %s352
      %p366 = scmp.eq.s32.totalorder %s46, 3
      %p367 = por %p365, %p366
      %p369 = scmp.ne.s32.totalorder %s352, %s368
      %p370 = scmp.eq.s32.totalorder %s46, 0
      %p371 = por %p369, %p370
      %s372 = ssub.s32 %s48, %s55
      %p373 = scmp.eq.s32.totalorder %s372, 0
      %s375 = sadd.s32 %s374, 1
      %s376 = scalar_select %p373, %s374, %s375
      %p379 = pneg %p373
      %p380 = scmp.eq.s32.totalorder %s40, 3
      %p381 = por %p379, %p380
      %p382 = scmp.ne.s32.totalorder %s374, %s377
      %p383 = scmp.eq.s32.totalorder %s40, 0
      %p384 = por %p382, %p383
      %p385 = scmp.ne.s32.totalorder %s374, %s377
      %p386 = scmp.eq.s32.totalorder %s45, 3
      %p387 = por %p385, %p386
      %p388 = scmp.ne.s32.totalorder %s377, %s378
      %p389 = scmp.eq.s32.totalorder %s45, 0
      %p390 = por %p388, %p389
      %p391 = scmp.ne.s32.totalorder %s377, %s378
      %p392 = scmp.eq.s32.totalorder %s46, 3
      %p393 = por %p391, %p392
      %p395 = scmp.ne.s32.totalorder %s378, %s394
      %p396 = scmp.eq.s32.totalorder %s46, 0
      %p397 = por %p395, %p396
      %s398 = ssub.s32 %s48, %s55
      %p399 = scmp.eq.s32.totalorder %s398, 0
      %s401 = sadd.s32 %s400, 1
      %s402 = scalar_select %p399, %s400, %s401
      %p405 = pneg %p399
      %p406 = scmp.eq.s32.totalorder %s40, 3
      %p407 = por %p405, %p406
      %p408 = scmp.ne.s32.totalorder %s400, %s403
      %p409 = scmp.eq.s32.totalorder %s40, 0
      %p410 = por %p408, %p409
      %p411 = scmp.ne.s32.totalorder %s400, %s403
      %p412 = scmp.eq.s32.totalorder %s45, 3
      %p413 = por %p411, %p412
      %p414 = scmp.ne.s32.totalorder %s403, %s404
      %p415 = scmp.eq.s32.totalorder %s45, 0
      %p416 = por %p414, %p415
      %p417 = scmp.ne.s32.totalorder %s403, %s404
      %p418 = scmp.eq.s32.totalorder %s46, 3
      %p419 = por %p417, %p418
      %p421 = scmp.ne.s32.totalorder %s404, %s420
      %p422 = scmp.eq.s32.totalorder %s46, 0
      %p423 = por %p421, %p422
      %s425 = sadd.s32 %s424, 1
      %p428 = scmp.eq.s32.totalorder %s40, 3
      %p429 = scmp.ne.s32.totalorder %s424, %s426
      %p430 = scmp.eq.s32.totalorder %s40, 0
      %p431 = por %p429, %p430
      %p432 = scmp.ne.s32.totalorder %s424, %s426
      %p433 = scmp.eq.s32.totalorder %s45, 3
      %p434 = por %p432, %p433
      %p435 = scmp.ne.s32.totalorder %s426, %s427
      %p436 = scmp.eq.s32.totalorder %s45, 0
      %p437 = por %p435, %p436
      %p438 = scmp.ne.s32.totalorder %s426, %s427
      %p439 = scmp.eq.s32.totalorder %s46, 3
      %p440 = por %p438, %p439
      %p442 = scmp.ne.s32.totalorder %s427, %s441
      %p443 = scmp.eq.s32.totalorder %s46, 0
      %p444 = por %p442, %p443
      %s446 = sadd.s32 %s445, 1
      %p449 = scmp.eq.s32.totalorder %s40, 3
      %p450 = scmp.ne.s32.totalorder %s445, %s447
      %p451 = scmp.eq.s32.totalorder %s40, 0
      %p452 = por %p450, %p451
      %p453 = scmp.ne.s32.totalorder %s445, %s447
      %p454 = scmp.eq.s32.totalorder %s45, 3
      %p455 = por %p453, %p454
      %p456 = scmp.ne.s32.totalorder %s447, %s448
      %p457 = scmp.eq.s32.totalorder %s45, 0
      %p458 = por %p456, %p457
      %p459 = scmp.ne.s32.totalorder %s447, %s448
      %p460 = scmp.eq.s32.totalorder %s46, 3
      %p461 = por %p459, %p460
      %p463 = scmp.ne.s32.totalorder %s448, %s462
      %p464 = scmp.eq.s32.totalorder %s46, 0
      %p465 = por %p463, %p464
      %s466 = ssub.s32 %s47, %s59
      %p467 = scmp.eq.s32.totalorder %s466, 0
      %s469 = sadd.s32 %s468, 1
      %s470 = scalar_select %p467, %s468, %s469
      %p473 = pneg %p467
      %p474 = scmp.eq.s32.totalorder %s40, 3
      %p475 = por %p473, %p474
      %p476 = scmp.ne.s32.totalorder %s468, %s471
      %p477 = scmp.eq.s32.totalorder %s40, 0
      %p478 = por %p476, %p477
      %p479 = scmp.ne.s32.totalorder %s468, %s471
      %p480 = scmp.eq.s32.totalorder %s45, 3
      %p481 = por %p479, %p480
      %p482 = scmp.ne.s32.totalorder %s471, %s472
      %p483 = scmp.eq.s32.totalorder %s45, 0
      %p484 = por %p482, %p483
      %p485 = scmp.ne.s32.totalorder %s471, %s472
      %p486 = scmp.eq.s32.totalorder %s46, 3
      %p487 = por %p485, %p486
      %p489 = scmp.ne.s32.totalorder %s472, %s488
      %p490 = scmp.eq.s32.totalorder %s46, 0
      %p491 = por %p489, %p490
      %p492 = scmp.le.s32.totalorder 1, %s40
      %p493 = scmp.lt.s32.totalorder %s40, 5
      %p494 = pnand %p492, %p493
      %p495 = pneg %p494
      // Predicated region
      $region9: #{tpu_custom_call.1} parent=5 // pred_check
        _
      $region10: #{tpu_custom_call.1} parent=5 // pred_check_branch
        %497 = sbr.rel (%p494) target = $region12
      $region11: #{tpu_custom_call.1} parent=5 // pred_region
        %s498 = ssub.s32 %s40, 1
        // Predicated region
        $region13: #{tpu_custom_call.1} parent=11 // pred_check
          %p499 = pneg %p437
        $region14: #{tpu_custom_call.1} parent=11 // pred_check_branch
          %501 = sbr.rel (%p499) target = $region16
        $region15: #{tpu_custom_call.1} parent=11 // pred_region
          _
        $region16: #{tpu_custom_call.1} parent=11 // pred_fallthru
          _
        // Predicated region
        $region17: #{tpu_custom_call.1} parent=11 // pred_check
          %p502 = pneg %p458
        $region18: #{tpu_custom_call.1} parent=11 // pred_check_branch
          %504 = sbr.rel (%p502) target = $region20
        $region19: #{tpu_custom_call.1} parent=11 // pred_region
          _
        $region20: #{tpu_custom_call.1} parent=11 // pred_fallthru
          _
      $region12: #{tpu_custom_call.1} parent=5 // pred_fallthru
        _
      %p505 = scmp.lt.s32.totalorder %s40, 4
      // Predicated region
      $region21: #{tpu_custom_call.1} parent=5 // pred_check
        %p506 = pneg %p505
      $region22: #{tpu_custom_call.1} parent=5 // pred_check_branch
        %508 = sbr.rel (%p506) target = $region24
      $region23: #{tpu_custom_call.1} parent=5 // pred_region
        // Predicated region
        $region25: #{tpu_custom_call.1} parent=23 // pred_check
          %p509 = pneg %p72
        $region26: #{tpu_custom_call.1} parent=23 // pred_check_branch
          %511 = sbr.rel (%p509) target = $region28
        $region27: #{tpu_custom_call.1} parent=23 // pred_region
          %s512 = sand.u32 %s62, 1
          %s513 = scalar_lea.sflag [#allocation8], %s512
          %s514 = sand.u32 %s62, 1
          %s515 = smul.addr %s514, 32
          %s516 = scalar_lea.vmem [#allocation7], %s515
          %s517 = smul.u32 2, %s47
          %s519 = ssub.s32 512, 512
          %520 = vsyncadd %s513, %s519
          %s521 = smul.addr %s517, 2
          %s522 = smul.addr %s521, 128
          %s523 = scalar_lea.hbm %s0, %s522
          %s524 = sshll.u32 %s516, 4
          %s525 = int_to_ptr.vmem [resolvable:$true] %s524
          %530 = dma.hbm_to_vmem [thread:$0]  %s523, 512, %s525, %s513, 128, 128, 8
        $region28: #{tpu_custom_call.1} parent=23 // pred_fallthru
          _
        // Predicated region
        $region29: #{tpu_custom_call.1} parent=23 // pred_check
          %p531 = pneg %p98
        $region30: #{tpu_custom_call.1} parent=23 // pred_check_branch
          %533 = sbr.rel (%p531) target = $region32
        $region31: #{tpu_custom_call.1} parent=23 // pred_region
          %s534 = sand.u32 %s40, 1
          %s535 = scalar_lea.sflag [#allocation11], %s534
          %s536 = sand.u32 %s88, 1
          %s537 = smul.addr %s536, 8
          %s538 = scalar_lea.vmem [#allocation10], %s537
          %s539 = smul.u32 8, %s47
          %s541 = ssub.s32 128, 128
          %542 = vsyncadd %s535, %s541
          %s543 = smul.addr %s539, 16
          %s544 = scalar_lea.hbm %s1, %s543
          %s545 = sshll.u32 %s538, 4
          %s546 = int_to_ptr.vmem [resolvable:$true] %s545
          %551 = dma.hbm_to_vmem [thread:$0]  %s544, 128, %s546, %s535, 16, 16, 1
        $region32: #{tpu_custom_call.1} parent=23 // pred_fallthru
          _
        // Predicated region
        $region33: #{tpu_custom_call.1} parent=23 // pred_check
          %p552 = pneg %p124
        $region34: #{tpu_custom_call.1} parent=23 // pred_check_branch
          %554 = sbr.rel (%p552) target = $region36
        $region35: #{tpu_custom_call.1} parent=23 // pred_region
          %s555 = sand.u32 %s40, 1
          %s556 = scalar_lea.sflag [#allocation11], %s555
          %s557 = sand.u32 %s114, 1
          %s558 = scalar_lea.vmem [#allocation12], %s557
          %s560 = ssub.s32 16, 16
          %561 = vsyncadd %s556, %s560
          %s562 = smul.addr %s48, 16
          %s563 = scalar_lea.hbm %s2, %s562
          %s565 = sshll.u32 %s558, 4
          %s566 = int_to_ptr.vmem [resolvable:$true] %s565
          %568 = dma.hbm_to_vmem [thread:$0]  %s563, 16, %s566, %s556
        $region36: #{tpu_custom_call.1} parent=23 // pred_fallthru
          _
        // Predicated region
        $region37: #{tpu_custom_call.1} parent=23 // pred_check
          %p569 = pneg %p150
        $region38: #{tpu_custom_call.1} parent=23 // pred_check_branch
          %571 = sbr.rel (%p569) target = $region40
        $region39: #{tpu_custom_call.1} parent=23 // pred_region
          %s572 = sand.u32 %s40, 1
          %s573 = scalar_lea.sflag [#allocation14], %s572
          %s574 = sand.u32 %s140, 1
          %s575 = scalar_lea.vmem [#allocation13], %s574
          %s577 = ssub.s32 16, 16
          %578 = vsyncadd %s573, %s577
          %s579 = smul.addr %s48, 16
          %s580 = scalar_lea.hbm %s3, %s579
          %s582 = sshll.u32 %s575, 4
          %s583 = int_to_ptr.vmem [resolvable:$true] %s582
          %585 = dma.hbm_to_vmem [thread:$0]  %s580, 16, %s583, %s573
        $region40: #{tpu_custom_call.1} parent=23 // pred_fallthru
          _
        // Predicated region
        $region41: #{tpu_custom_call.1} parent=23 // pred_check
          %p586 = pneg %p176
        $region42: #{tpu_custom_call.1} parent=23 // pred_check_branch
          %588 = sbr.rel (%p586) target = $region44
        $region43: #{tpu_custom_call.1} parent=23 // pred_region
          %s589 = sand.u32 %s40, 1
          %s590 = scalar_lea.sflag [#allocation14], %s589
          %s591 = sand.u32 %s166, 1
          %s592 = smul.addr %s591, 192
          %s593 = scalar_lea.vmem [#allocation15], %s592
          %s595 = ssub.s32 3072, 3072
          %596 = vsyncadd %s590, %s595
          %s597 = smul.addr %s48, 48
          %s598 = smul.addr %s597, 64
          %s599 = scalar_lea.hbm %s4, %s598
          %s600 = sshll.u32 %s593, 4
          %s601 = int_to_ptr.vmem [resolvable:$true] %s600
          %606 = dma.hbm_to_vmem [thread:$0]  %s599, 3072, %s601, %s590, 192, 192, 12
        $region44: #{tpu_custom_call.1} parent=23 // pred_fallthru
          _
        // Predicated region
        $region45: #{tpu_custom_call.1} parent=23 // pred_check
          %p607 = pneg %p202
        $region46: #{tpu_custom_call.1} parent=23 // pred_check_branch
          %609 = sbr.rel (%p607) target = $region48
        $region47: #{tpu_custom_call.1} parent=23 // pred_region
          %p610 = scmp.lt.s32.totalorder %s48, 1
          %s611 = scalar_select %p610, %s48, 1
          %s612 = smul.addr %s611, 3
          %s613 = scalar_lea.vmem %s5, %s612
        $region48: #{tpu_custom_call.1} parent=23 // pred_fallthru
          _
        // Predicated region
        $region49: #{tpu_custom_call.1} parent=23 // pred_check
          %p614 = pneg %p228
        $region50: #{tpu_custom_call.1} parent=23 // pred_check_branch
          %616 = sbr.rel (%p614) target = $region52
        $region51: #{tpu_custom_call.1} parent=23 // pred_region
          %s617 = sand.u32 %s40, 1
          %s618 = scalar_lea.sflag [#allocation17], %s617
          %s619 = sand.u32 %s218, 1
          %s620 = smul.addr %s619, 64
          %s621 = scalar_lea.vmem [#allocation16], %s620
          %s623 = ssub.s32 1024, 1024
          %624 = vsyncadd %s618, %s623
          %s625 = smul.addr %s48, 16
          %s626 = smul.addr %s625, 64
          %s627 = scalar_lea.hbm %s6, %s626
          %s628 = sshll.u32 %s621, 4
          %s629 = int_to_ptr.vmem [resolvable:$true] %s628
          %634 = dma.hbm_to_vmem [thread:$0]  %s627, 1024, %s629, %s618, 64, 64, 4
        $region52: #{tpu_custom_call.1} parent=23 // pred_fallthru
          _
        // Predicated region
        $region53: #{tpu_custom_call.1} parent=23 // pred_check
          %p635 = pneg %p254
        $region54: #{tpu_custom_call.1} parent=23 // pred_check_branch
          %637 = sbr.rel (%p635) target = $region56
        $region55: #{tpu_custom_call.1} parent=23 // pred_region
          %p638 = scmp.lt.s32.totalorder %s48, 1
          %s639 = scalar_select %p638, %s48, 1
          %s640 = scalar_lea.vmem %s7, %s639
        $region56: #{tpu_custom_call.1} parent=23 // pred_fallthru
          _
        // Predicated region
        $region57: #{tpu_custom_call.1} parent=23 // pred_check
          %p641 = pneg %p280
        $region58: #{tpu_custom_call.1} parent=23 // pred_check_branch
          %643 = sbr.rel (%p641) target = $region60
        $region59: #{tpu_custom_call.1} parent=23 // pred_region
          %p644 = scmp.lt.s32.totalorder %s48, 1
          %s645 = scalar_select %p644, %s48, 1
          %s646 = scalar_lea.vmem %s8, %s645
        $region60: #{tpu_custom_call.1} parent=23 // pred_fallthru
          _
        // Predicated region
        $region61: #{tpu_custom_call.1} parent=23 // pred_check
          %p647 = pneg %p306
        $region62: #{tpu_custom_call.1} parent=23 // pred_check_branch
          %649 = sbr.rel (%p647) target = $region64
        $region63: #{tpu_custom_call.1} parent=23 // pred_region
          %p650 = scmp.lt.s32.totalorder %s48, 1
          %s651 = scalar_select %p650, %s48, 1
          %s652 = scalar_lea.vmem %s9, %s651
        $region64: #{tpu_custom_call.1} parent=23 // pred_fallthru
          _
        // Predicated region
        $region65: #{tpu_custom_call.1} parent=23 // pred_check
          %p653 = pneg %p332
        $region66: #{tpu_custom_call.1} parent=23 // pred_check_branch
          %655 = sbr.rel (%p653) target = $region68
        $region67: #{tpu_custom_call.1} parent=23 // pred_region
          %s656 = sand.u32 %s40, 1
          %s657 = scalar_lea.sflag [#allocation17], %s656
          %s658 = sand.u32 %s322, 1
          %s659 = smul.addr %s658, 256
          %s660 = scalar_lea.vmem [#allocation18], %s659
          %s662 = ssub.s32 4096, 4096
          %663 = vsyncadd %s657, %s662
          %s664 = smul.addr %s48, 64
          %s665 = smul.addr %s664, 64
          %s666 = scalar_lea.hbm %s10, %s665
          %s667 = sshll.u32 %s660, 4
          %s668 = int_to_ptr.vmem [resolvable:$true] %s667
          %673 = dma.hbm_to_vmem [thread:$0]  %s666, 4096, %s668, %s657, 256, 256, 16
        $region68: #{tpu_custom_call.1} parent=23 // pred_fallthru
          _
        // Predicated region
        $region69: #{tpu_custom_call.1} parent=23 // pred_check
          %p674 = pneg %p358
        $region70: #{tpu_custom_call.1} parent=23 // pred_check_branch
          %676 = sbr.rel (%p674) target = $region72
        $region71: #{tpu_custom_call.1} parent=23 // pred_region
          %p677 = scmp.lt.s32.totalorder %s48, 1
          %s678 = scalar_select %p677, %s48, 1
          %s679 = smul.addr %s678, 4
          %s680 = scalar_lea.vmem %s11, %s679
        $region72: #{tpu_custom_call.1} parent=23 // pred_fallthru
          _
        // Predicated region
        $region73: #{tpu_custom_call.1} parent=23 // pred_check
          %p681 = pneg %p384
        $region74: #{tpu_custom_call.1} parent=23 // pred_check_branch
          %683 = sbr.rel (%p681) target = $region76
        $region75: #{tpu_custom_call.1} parent=23 // pred_region
          %s684 = sand.u32 %s374, 1
          %s685 = scalar_lea.sflag [#allocation20], %s684
          %s686 = sand.u32 %s374, 1
          %s687 = smul.addr %s686, 256
          %s688 = scalar_lea.vmem [#allocation19], %s687
          %s690 = ssub.s32 4096, 4096
          %691 = vsyncadd %s685, %s690
          %s692 = smul.addr %s48, 64
          %s693 = smul.addr %s692, 64
          %s694 = scalar_lea.hbm %s12, %s693
          %s695 = sshll.u32 %s688, 4
          %s696 = int_to_ptr.vmem [resolvable:$true] %s695
          %701 = dma.hbm_to_vmem [thread:$0]  %s694, 4096, %s696, %s685, 64, 64, 4
        $region76: #{tpu_custom_call.1} parent=23 // pred_fallthru
          _
        // Predicated region
        $region77: #{tpu_custom_call.1} parent=23 // pred_check
          %p702 = pneg %p410
        $region78: #{tpu_custom_call.1} parent=23 // pred_check_branch
          %704 = sbr.rel (%p702) target = $region80
        $region79: #{tpu_custom_call.1} parent=23 // pred_region
          %p705 = scmp.lt.s32.totalorder %s48, 1
          %s706 = scalar_select %p705, %s48, 1
          %s707 = scalar_lea.vmem %s13, %s706
        $region80: #{tpu_custom_call.1} parent=23 // pred_fallthru
          _
      $region24: #{tpu_custom_call.1} parent=5 // pred_fallthru
        _
      %p708 = scmp.le.s32.totalorder 1, %s40
      %p709 = scmp.lt.s32.totalorder %s40, 5
      %p710 = pnand %p708, %p709
      %p711 = pneg %p710
      // Predicated region
      $region81: #{tpu_custom_call.1} parent=5 // pred_check
        _
      $region82: #{tpu_custom_call.1} parent=5 // pred_check_branch
        %713 = sbr.rel (%p710) target = $region84
      $region83: #{tpu_custom_call.1} parent=5 // pred_region
        %s714 = ssub.s32 %s40, 1
        %s715 = sand.u32 %s65, 1
        %s716 = scalar_lea.sflag [#allocation8], %s715
        %s717 = sand.u32 %s65, 1
        %s718 = smul.addr %s717, 32
        %s719 = scalar_lea.vmem [#allocation7], %s718
        // Predicated region
        $region85: #{tpu_custom_call.1} parent=83 // pred_check
          %p720 = pneg %p78
        $region86: #{tpu_custom_call.1} parent=83 // pred_check_branch
          %722 = sbr.rel (%p720) target = $region88
        $region87: #{tpu_custom_call.1} parent=83 // pred_region
          %723 = dma.done %s716, 512
        $region88: #{tpu_custom_call.1} parent=83 // pred_fallthru
          _
        %s724 = sand.u32 %s45, 1
        %s725 = scalar_lea.sflag [#allocation11], %s724
        %s726 = sand.u32 %s91, 1
        %s727 = smul.addr %s726, 8
        %s728 = scalar_lea.vmem [#allocation10], %s727
        // Predicated region
        $region89: #{tpu_custom_call.1} parent=83 // pred_check
          %p729 = pneg %p104
        $region90: #{tpu_custom_call.1} parent=83 // pred_check_branch
          %731 = sbr.rel (%p729) target = $region92
        $region91: #{tpu_custom_call.1} parent=83 // pred_region
          %732 = dma.done %s725, 128
        $region92: #{tpu_custom_call.1} parent=83 // pred_fallthru
          _
        %s733 = sand.u32 %s45, 1
        %s734 = scalar_lea.sflag [#allocation11], %s733
        %s735 = sand.u32 %s117, 1
        %s736 = scalar_lea.vmem [#allocation12], %s735
        // Predicated region
        $region93: #{tpu_custom_call.1} parent=83 // pred_check
          %p737 = pneg %p130
        $region94: #{tpu_custom_call.1} parent=83 // pred_check_branch
          %739 = sbr.rel (%p737) target = $region96
        $region95: #{tpu_custom_call.1} parent=83 // pred_region
          %740 = dma.done %s734, 16
        $region96: #{tpu_custom_call.1} parent=83 // pred_fallthru
          _
        %s741 = sand.u32 %s45, 1
        %s742 = scalar_lea.sflag [#allocation14], %s741
        %s743 = sand.u32 %s143, 1
        %s744 = scalar_lea.vmem [#allocation13], %s743
        // Predicated region
        $region97: #{tpu_custom_call.1} parent=83 // pred_check
          %p745 = pneg %p156
        $region98: #{tpu_custom_call.1} parent=83 // pred_check_branch
          %747 = sbr.rel (%p745) target = $region100
        $region99: #{tpu_custom_call.1} parent=83 // pred_region
          %748 = dma.done %s742, 16
        $region100: #{tpu_custom_call.1} parent=83 // pred_fallthru
          _
        %s749 = sand.u32 %s45, 1
        %s750 = scalar_lea.sflag [#allocation14], %s749
        %s751 = sand.u32 %s169, 1
        %s752 = smul.addr %s751, 192
        %s753 = scalar_lea.vmem [#allocation15], %s752
        // Predicated region
        $region101: #{tpu_custom_call.1} parent=83 // pred_check
          %p754 = pneg %p182
        $region102: #{tpu_custom_call.1} parent=83 // pred_check_branch
          %756 = sbr.rel (%p754) target = $region104
        $region103: #{tpu_custom_call.1} parent=83 // pred_region
          %757 = dma.done %s750, 3072
        $region104: #{tpu_custom_call.1} parent=83 // pred_fallthru
          _
        %s758 = sand.u32 %s45, 1
        %s759 = scalar_lea.sflag [#allocation17], %s758
        %s760 = sand.u32 %s221, 1
        %s761 = smul.addr %s760, 64
        %s762 = scalar_lea.vmem [#allocation16], %s761
        // Predicated region
        $region105: #{tpu_custom_call.1} parent=83 // pred_check
          %p763 = pneg %p234
        $region106: #{tpu_custom_call.1} parent=83 // pred_check_branch
          %765 = sbr.rel (%p763) target = $region108
        $region107: #{tpu_custom_call.1} parent=83 // pred_region
          %766 = dma.done %s759, 1024
        $region108: #{tpu_custom_call.1} parent=83 // pred_fallthru
          _
        %s767 = sand.u32 %s45, 1
        %s768 = scalar_lea.sflag [#allocation17], %s767
        %s769 = sand.u32 %s325, 1
        %s770 = smul.addr %s769, 256
        %s771 = scalar_lea.vmem [#allocation18], %s770
        // Predicated region
        $region109: #{tpu_custom_call.1} parent=83 // pred_check
          %p772 = pneg %p338
        $region110: #{tpu_custom_call.1} parent=83 // pred_check_branch
          %774 = sbr.rel (%p772) target = $region112
        $region111: #{tpu_custom_call.1} parent=83 // pred_region
          %775 = dma.done %s768, 4096
        $region112: #{tpu_custom_call.1} parent=83 // pred_fallthru
          _
        %s776 = sand.u32 %s377, 1
        %s777 = scalar_lea.sflag [#allocation20], %s776
        %s778 = sand.u32 %s377, 1
        %s779 = smul.addr %s778, 256
        %s780 = scalar_lea.vmem [#allocation19], %s779
        // Predicated region
        $region113: #{tpu_custom_call.1} parent=83 // pred_check
          %p781 = pneg %p390
        $region114: #{tpu_custom_call.1} parent=83 // pred_check_branch
          %783 = sbr.rel (%p781) target = $region116
        $region115: #{tpu_custom_call.1} parent=83 // pred_region
          %784 = dma.done %s777, 4096
        $region116: #{tpu_custom_call.1} parent=83 // pred_fallthru
          _
        %s785 = sand.u32 %s65, 1
        %s786 = scalar_lea.sflag [#allocation8], %s785
        %s787 = sand.u32 %s65, 1
        %s788 = smul.addr %s787, 32
        %s789 = scalar_lea.vmem [#allocation7], %s788
        %p790 = pneg %p78
        %p791 = pneg %p75
        %s792 = sand.u32 %s45, 1
        %s793 = scalar_lea.sflag [#allocation11], %s792
        %s794 = sand.u32 %s91, 1
        %s795 = smul.addr %s794, 8
        %s796 = scalar_lea.vmem [#allocation10], %s795
        %p797 = pneg %p104
        %p798 = pneg %p101
        %s799 = sand.u32 %s45, 1
        %s800 = scalar_lea.sflag [#allocation11], %s799
        %s801 = sand.u32 %s117, 1
        %s802 = scalar_lea.vmem [#allocation12], %s801
        %p803 = pneg %p130
        %p804 = pneg %p127
        %s805 = sand.u32 %s45, 1
        %s806 = scalar_lea.sflag [#allocation14], %s805
        %s807 = sand.u32 %s143, 1
        %s808 = scalar_lea.vmem [#allocation13], %s807
        %p809 = pneg %p156
        %p810 = pneg %p153
        %s811 = sand.u32 %s45, 1
        %s812 = scalar_lea.sflag [#allocation14], %s811
        %s813 = sand.u32 %s169, 1
        %s814 = smul.addr %s813, 192
        %s815 = scalar_lea.vmem [#allocation15], %s814
        %p816 = pneg %p182
        %p817 = pneg %p179
        %p818 = scmp.lt.s32.totalorder %s50, 1
        %s819 = scalar_select %p818, %s50, 1
        %s820 = smul.addr %s819, 3
        %s821 = scalar_lea.vmem %s5, %s820
        %p822 = pneg %p208
        %p823 = pneg %p205
        %s824 = sand.u32 %s45, 1
        %s825 = scalar_lea.sflag [#allocation17], %s824
        %s826 = sand.u32 %s221, 1
        %s827 = smul.addr %s826, 64
        %s828 = scalar_lea.vmem [#allocation16], %s827
        %p829 = pneg %p234
        %p830 = pneg %p231
        %p831 = scmp.lt.s32.totalorder %s50, 1
        %s832 = scalar_select %p831, %s50, 1
        %s833 = scalar_lea.vmem %s7, %s832
        %p834 = pneg %p260
        %p835 = pneg %p257
        %p836 = scmp.lt.s32.totalorder %s50, 1
        %s837 = scalar_select %p836, %s50, 1
        %s838 = scalar_lea.vmem %s8, %s837
        %p839 = pneg %p286
        %p840 = pneg %p283
        %p841 = scmp.lt.s32.totalorder %s50, 1
        %s842 = scalar_select %p841, %s50, 1
        %s843 = scalar_lea.vmem %s9, %s842
        %p844 = pneg %p312
        %p845 = pneg %p309
        %s846 = sand.u32 %s45, 1
        %s847 = scalar_lea.sflag [#allocation17], %s846
        %s848 = sand.u32 %s325, 1
        %s849 = smul.addr %s848, 256
        %s850 = scalar_lea.vmem [#allocation18], %s849
        %p851 = pneg %p338
        %p852 = pneg %p335
        %p853 = scmp.lt.s32.totalorder %s50, 1
        %s854 = scalar_select %p853, %s50, 1
        %s855 = smul.addr %s854, 4
        %s856 = scalar_lea.vmem %s11, %s855
        %p857 = pneg %p364
        %p858 = pneg %p361
        %s859 = sand.u32 %s377, 1
        %s860 = scalar_lea.sflag [#allocation20], %s859
        %s861 = sand.u32 %s377, 1
        %s862 = smul.addr %s861, 256
        %s863 = scalar_lea.vmem [#allocation19], %s862
        %p864 = pneg %p390
        %p865 = pneg %p387
        %p866 = scmp.lt.s32.totalorder %s50, 1
        %s867 = scalar_select %p866, %s50, 1
        %s868 = scalar_lea.vmem %s13, %s867
        %p869 = pneg %p416
        %p870 = pneg %p413
        %p871 = pneg %p437
        %p872 = pneg %p434
        %p873 = pneg %p458
        %p874 = pneg %p455
        %p875 = pneg %p484
        %p876 = pneg %p481
        %s877 = sand.u32 %s471, 1
        %s878 = scalar_lea.sflag [#allocation9], %s877
        %s879 = sand.u32 %s471, 1
        %s880 = smul.addr %s879, 32
        %s881 = scalar_lea.vmem [#allocation21], %s880
        %s882 = smul.u32 2, %s49
        %s883 = smul.u32 8, %s49
        %p884 = scmp.lt.s32.totalorder %s50, 1
        %s885 = scalar_select %p884, %s50, 1
        %s886 = smul.addr %s885, 3
        %s887 = scalar_lea.vmem %s5, %s886
        %p888 = scmp.lt.s32.totalorder %s50, 1
        %s889 = scalar_select %p888, %s50, 1
        %s890 = scalar_lea.vmem %s7, %s889
        %p891 = scmp.lt.s32.totalorder %s50, 1
        %s892 = scalar_select %p891, %s50, 1
        %s893 = scalar_lea.vmem %s8, %s892
        %p894 = scmp.lt.s32.totalorder %s50, 1
        %s895 = scalar_select %p894, %s50, 1
        %s896 = scalar_lea.vmem %s9, %s895
        %p897 = scmp.lt.s32.totalorder %s50, 1
        %s898 = scalar_select %p897, %s50, 1
        %s899 = smul.addr %s898, 4
        %s900 = scalar_lea.vmem %s11, %s899
        %p901 = scmp.lt.s32.totalorder %s50, 1
        %s902 = scalar_select %p901, %s50, 1
        %s903 = scalar_lea.vmem %s13, %s902
        %s904 = smul.u32 2, %s49
        %p906 = scmp.eq.s32.totalorder %s50, 0
        // Predicated region
        $region117: #{tpu_custom_call.1} parent=83 // pred_check
          %p907 = pneg %p906
        $region118: #{tpu_custom_call.1} parent=83 // pred_check_branch
          %909 = sbr.rel (%p907) target = $region120
        $region119: #{tpu_custom_call.1} parent=83 // pred_region
          %v910 = vld [vmem:[%s719] sm:$0xff]
          %v911 = vld [vmem:[%s719 + $0x8] sm:$0xff]
          %v912 = vld [vmem:[%s719 + $0x10] sm:$0xff]
          %v913 = vld [vmem:[%s719 + $0x18] sm:$0xff]
          %914 = vst [vmem:[#allocation2] sm:$0xff] %v910
          %915 = vst [vmem:[#allocation2 + $0x8] sm:$0xff] %v911
          %916 = vst [vmem:[#allocation2 + $0x10] sm:$0xff] %v912
          %917 = vst [vmem:[#allocation2 + $0x18] sm:$0xff] %v913
        $region120: #{tpu_custom_call.1} parent=83 // pred_fallthru
          _
        %v918 = vld [vmem:[#allocation2] sm:$0xff]
        %v919 = vld [vmem:[#allocation2 + $0x8] sm:$0xff]
        %v920 = vld [vmem:[#allocation2 + $0x10] sm:$0xff]
        %v921 = vld [vmem:[#allocation2 + $0x18] sm:$0xff]
        %v922 = vld [vmem:[%s736] sm:$0x1]
        %v923 = vld [vmem:[%s744] sm:$0x1]
        %924 = vadd.xlane.f32.xlu0 %v918
        %v925 = vpop.xlane.xlu0 %924
        %926 = vadd.xlane.f32.xlu0 %v919
        %v927 = vpop.xlane.xlu0 %926
        %928 = vadd.xlane.f32.xlu0 %v920
        %v929 = vpop.xlane.xlu0 %928
        %930 = vadd.xlane.f32.xlu0 %v921
        %v931 = vpop.xlane.xlu0 %930
        %v932 = vrcp.pop 128.0
        %v933 = vmul.f32 %v925, %v932
        %v934 = vmul.f32 %v927, %v932
        %v935 = vmul.f32 %v929, %v932
        %v936 = vmul.f32 %v931, %v932
        %v937 = vsub.f32 %v918, %v933
        %v938 = vsub.f32 %v919, %v934
        %v939 = vsub.f32 %v920, %v935
        %v940 = vsub.f32 %v921, %v936
        %v941 = vmul.f32 %v937, %v937
        %v942 = vmul.f32 %v938, %v938
        %v943 = vmul.f32 %v939, %v939
        %v944 = vmul.f32 %v940, %v940
        %945 = vadd.xlane.f32.xlu0 %v941
        %v946 = vpop.xlane.xlu0 %945
        %947 = vadd.xlane.f32.xlu0 %v942
        %v948 = vpop.xlane.xlu0 %947
        %949 = vadd.xlane.f32.xlu0 %v943
        %v950 = vpop.xlane.xlu0 %949
        %951 = vadd.xlane.f32.xlu0 %v944
        %v952 = vpop.xlane.xlu0 %951
        %v953 = vmul.f32 %v946, %v932
        %v954 = vmul.f32 %v948, %v932
        %v955 = vmul.f32 %v950, %v932
        %v956 = vmul.f32 %v952, %v932
        %v957 = vadd.f32 %v953, 1e-05
        %v958 = vadd.f32 %v954, 1e-05
        %v959 = vadd.f32 %v955, 1e-05
        %v960 = vadd.f32 %v956, 1e-05
        %v961 = vrsqrt.pop %v957
        %v962 = vrsqrt.pop %v958
        %v963 = vrsqrt.pop %v959
        %v964 = vrsqrt.pop %v960
        %v965 = vmul.f32 %v937, %v961
        %v966 = vmul.f32 %v938, %v962
        %v967 = vmul.f32 %v939, %v963
        %v968 = vmul.f32 %v940, %v964
        %v970 = vlaneseq
        %v971 = vshrl.u32 %v970, 7
        %v972 = vsub.s32 0, %v971
        %v973 = vrot.slane %v922, %v972
        %v975 = vmul.f32 %v965, %v973
        %v976 = vmul.f32 %v966, %v973
        %v977 = vmul.f32 %v967, %v973
        %v978 = vmul.f32 %v968, %v973
        %v980 = vlaneseq
        %v981 = vshrl.u32 %v980, 7
        %v982 = vsub.s32 0, %v981
        %v983 = vrot.slane %v923, %v982
        %v985 = vadd.f32 %v975, %v983
        %v986 = vadd.f32 %v976, %v983
        %v987 = vadd.f32 %v977, %v983
        %v988 = vadd.f32 %v978, %v983
        %v989 = vpack.c.bf16 %v986, %v985
        %v990 = vpack.c.bf16 %v988, %v987
        %v991 = vld [vmem:[%s753] sm:$0xff]
        %v992 = vld [vmem:[%s753 + $0x8] sm:$0xf]
        %v993 = vld [vmem:[%s753 + $0xc] sm:$0xff]
        %v994 = vld [vmem:[%s753 + $0x14] sm:$0xf]
        %v995 = vld [vmem:[%s753 + $0x18] sm:$0xff]
        %v996 = vld [vmem:[%s753 + $0x20] sm:$0xf]
        %v997 = vld [vmem:[%s753 + $0x24] sm:$0xff]
        %v998 = vld [vmem:[%s753 + $0x2c] sm:$0xf]
        %v999 = vld [vmem:[%s753 + $0x30] sm:$0xff]
        %v1000 = vld [vmem:[%s753 + $0x38] sm:$0xf]
        %v1001 = vld [vmem:[%s753 + $0x3c] sm:$0xff]
        %v1002 = vld [vmem:[%s753 + $0x44] sm:$0xf]
        %v1003 = vld [vmem:[%s753 + $0x48] sm:$0xff]
        %v1004 = vld [vmem:[%s753 + $0x50] sm:$0xf]
        %v1005 = vld [vmem:[%s753 + $0x54] sm:$0xff]
        %v1006 = vld [vmem:[%s753 + $0x5c] sm:$0xf]
        %v1007 = vld [vmem:[%s753 + $0x60] sm:$0xff]
        %v1008 = vld [vmem:[%s753 + $0x68] sm:$0xf]
        %v1009 = vld [vmem:[%s753 + $0x6c] sm:$0xff]
        %v1010 = vld [vmem:[%s753 + $0x74] sm:$0xf]
        %v1011 = vld [vmem:[%s753 + $0x78] sm:$0xff]
        %v1012 = vld [vmem:[%s753 + $0x80] sm:$0xf]
        %v1013 = vld [vmem:[%s753 + $0x84] sm:$0xff]
        %v1014 = vld [vmem:[%s753 + $0x8c] sm:$0xf]
        %v1015 = vld [vmem:[%s753 + $0x90] sm:$0xff]
        %v1016 = vld [vmem:[%s753 + $0x98] sm:$0xf]
        %v1017 = vld [vmem:[%s753 + $0x9c] sm:$0xff]
        %v1018 = vld [vmem:[%s753 + $0xa4] sm:$0xf]
        %v1019 = vld [vmem:[%s753 + $0xa8] sm:$0xff]
        %v1020 = vld [vmem:[%s753 + $0xb0] sm:$0xf]
        %v1021 = vld [vmem:[%s753 + $0xb4] sm:$0xff]
        %v1022 = vld [vmem:[%s753 + $0xbc] sm:$0xf]
        %v1023 = vld [vmem:[%s887] sm:$0x7]
        %v1025 = vlaneseq
        %v1026 = vshrl.u32 %v1025, 7
        %v1027 = vsub.s32 0, %v1026
        %v1028 = vrot.slane %v1023, %v1027
        %v1029 = vlaneseq
        %v1030 = vshrl.u32 %v1029, 7
        %v1031 = vsub.s32 1, %v1030
        %v1032 = vrot.slane %v1023, %v1031
        %v1033 = vlaneseq
        %v1034 = vshrl.u32 %v1033, 7
        %v1035 = vsub.s32 2, %v1034
        %v1036 = vrot.slane %v1023, %v1035
        %v1072 = vunpack.c.l.b16 %v991
        %v1073 = vunpack.c.h.b16 %v991
        %v1074 = vunpack.c.l.b16 %v992
        %v1075 = vunpack.c.l.b16 %v993
        %v1076 = vunpack.c.h.b16 %v993
        %v1077 = vunpack.c.l.b16 %v994
        %v1078 = vunpack.c.l.b16 %v995
        %v1079 = vunpack.c.h.b16 %v995
        %v1080 = vunpack.c.l.b16 %v996
        %v1081 = vunpack.c.l.b16 %v997
        %v1082 = vunpack.c.h.b16 %v997
        %v1083 = vunpack.c.l.b16 %v998
        %v1084 = vunpack.c.l.b16 %v999
        %v1085 = vunpack.c.h.b16 %v999
        %v1086 = vunpack.c.l.b16 %v1000
        %v1087 = vunpack.c.l.b16 %v1001
        %v1088 = vunpack.c.h.b16 %v1001
        %v1089 = vunpack.c.l.b16 %v1002
        %v1090 = vunpack.c.l.b16 %v1003
        %v1091 = vunpack.c.h.b16 %v1003
        %v1092 = vunpack.c.l.b16 %v1004
        %v1093 = vunpack.c.l.b16 %v1005
        %v1094 = vunpack.c.h.b16 %v1005
        %v1095 = vunpack.c.l.b16 %v1006
        %v1096 = vunpack.c.l.b16 %v1007
        %v1097 = vunpack.c.h.b16 %v1007
        %v1098 = vunpack.c.l.b16 %v1008
        %v1099 = vunpack.c.l.b16 %v1009
        %v1100 = vunpack.c.h.b16 %v1009
        %v1101 = vunpack.c.l.b16 %v1010
        %v1102 = vunpack.c.l.b16 %v1011
        %v1103 = vunpack.c.h.b16 %v1011
        %v1104 = vunpack.c.l.b16 %v1012
        %v1105 = vunpack.c.l.b16 %v1013
        %v1106 = vunpack.c.h.b16 %v1013
        %v1107 = vunpack.c.l.b16 %v1014
        %v1108 = vunpack.c.l.b16 %v1015
        %v1109 = vunpack.c.h.b16 %v1015
        %v1110 = vunpack.c.l.b16 %v1016
        %v1111 = vunpack.c.l.b16 %v1017
        %v1112 = vunpack.c.h.b16 %v1017
        %v1113 = vunpack.c.l.b16 %v1018
        %v1114 = vunpack.c.l.b16 %v1019
        %v1115 = vunpack.c.h.b16 %v1019
        %v1116 = vunpack.c.l.b16 %v1020
        %v1117 = vunpack.c.l.b16 %v1021
        %v1118 = vunpack.c.h.b16 %v1021
        %v1119 = vunpack.c.l.b16 %v1022
        %v1120 = vpack.c.b16 %v1075, %v1072
        %v1121 = vpack.c.b16 %v1076, %v1073
        %v1122 = vpack.c.b16 %v1077, %v1074
        %v1123 = vpack.c.b16 %v1081, %v1078
        %v1124 = vpack.c.b16 %v1082, %v1079
        %v1125 = vpack.c.b16 %v1083, %v1080
        %v1126 = vpack.c.b16 %v1087, %v1084
        %v1127 = vpack.c.b16 %v1088, %v1085
        %v1128 = vpack.c.b16 %v1089, %v1086
        %v1129 = vpack.c.b16 %v1093, %v1090
        %v1130 = vpack.c.b16 %v1094, %v1091
        %v1131 = vpack.c.b16 %v1095, %v1092
        %v1132 = vpack.c.b16 %v1099, %v1096
        %v1133 = vpack.c.b16 %v1100, %v1097
        %v1134 = vpack.c.b16 %v1101, %v1098
        %v1135 = vpack.c.b16 %v1105, %v1102
        %v1136 = vpack.c.b16 %v1106, %v1103
        %v1137 = vpack.c.b16 %v1107, %v1104
        %v1138 = vpack.c.b16 %v1111, %v1108
        %v1139 = vpack.c.b16 %v1112, %v1109
        %v1140 = vpack.c.b16 %v1113, %v1110
        %v1141 = vpack.c.b16 %v1117, %v1114
        %v1142 = vpack.c.b16 %v1118, %v1115
        %v1143 = vpack.c.b16 %v1119, %v1116
        %1168 = vmatprep.subr.bf16.mxu0 %v1121
        %1169 = vmatpush1.bf16.msra.mxu0 %v1120
        %1170 = vmatprep.subr.bf16.mxu0 %v1124
        %1171 = vmatpush1.bf16.msra.mxu0 %v1123
        %1172 = vmatprep.subr.bf16.mxu0 %v1127
        %1173 = vmatpush1.bf16.msra.mxu0 %v1126
        %1174 = vmatprep.subr.bf16.mxu0 %v1130
        %1175 = vmatpush1.bf16.msra.mxu0 %v1129
        %1176 = vmatprep.subr.bf16.mxu0 %v1133
        %1177 = vmatpush1.bf16.msra.mxu0 %v1132
        %1178 = vmatprep.subr.bf16.mxu0 %v1136
        %1179 = vmatpush1.bf16.msra.mxu0 %v1135
        %1180 = vmatprep.subr.bf16.mxu0 %v1139
        %1181 = vmatpush1.bf16.msra.mxu0 %v1138
        %1182 = vmatprep.subr.bf16.mxu0 %v1142
        %1183 = vmatpush1.bf16.msra.mxu0 %v1141
        %1184 = vmatprep.subr.bf16.mxu0 0
        %1185 = vmatpush1.bf16.msra.mxu0 0
        %1186 = vmatprep.subr.bf16.mxu0 0
        %1187 = vmatpush1.bf16.msra.mxu0 0
        %1188 = vmatprep.subr.bf16.mxu0 0
        %1189 = vmatpush1.bf16.msra.mxu0 0
        %1190 = vmatprep.subr.bf16.mxu0 0
        %1191 = vmatpush1.bf16.msra.mxu0 0
        %1192 = vmatprep.subr.bf16.mxu0 0
        %1193 = vmatpush1.bf16.msra.mxu0 0
        %1194 = vmatprep.subr.bf16.mxu0 0
        %1195 = vmatpush1.bf16.msra.mxu0 0
        %1196 = vmatprep.subr.bf16.mxu0 0
        %1197 = vmatpush1.bf16.msra.mxu0 0
        %1198 = vmatprep.subr.bf16.mxu0 0
        %1199 = vmatpush1.bf16.msra.mxu0 0
        %1200 = vmatprep.mubr.bf16.mxu0 0
        %1201 = vmatmul.mubr.bf16.gmra.mrb[0].mxu0 %v989
        %v1202 = vpop.f32.mrb[0].mxu0
        %v1203 = vadd.f32 %v1028, %v1202
        %v1204 = vpop.f32.mrb[0].mxu0
        %v1205 = vadd.f32 %v1032, %v1204
        %v1206 = vpop.f32.mrb[0].mxu0
        %v1207 = vadd.f32 %v1028, %v1206
        %v1208 = vpop.f32.mrb[0].mxu0
        %v1209 = vadd.f32 %v1032, %v1208
        %1210 = vmatprep.mubr.bf16.mxu0 0
        %1211 = vmatmul.mubr.bf16.gmra.mrb[0].mxu0 %v990
        %v1212 = vpop.f32.mrb[0].mxu0
        %v1213 = vadd.f32 %v1028, %v1212
        %v1214 = vpop.f32.mrb[0].mxu0
        %v1215 = vadd.f32 %v1032, %v1214
        %v1216 = vpop.f32.mrb[0].mxu0
        %v1217 = vadd.f32 %v1028, %v1216
        %v1218 = vpop.f32.mrb[0].mxu0
        %v1219 = vadd.f32 %v1032, %v1218
        %1220 = vdwg.mxu0
        %1221 = vmatprep.subr.bf16.mxu0 0
        %1222 = vmatpush1.bf16.msra.mxu0 %v1122
        %1223 = vmatprep.subr.bf16.mxu0 0
        %1224 = vmatpush1.bf16.msra.mxu0 %v1125
        %1225 = vmatprep.subr.bf16.mxu0 0
        %1226 = vmatpush1.bf16.msra.mxu0 %v1128
        %1227 = vmatprep.subr.bf16.mxu0 0
        %1228 = vmatpush1.bf16.msra.mxu0 %v1131
        %1229 = vmatprep.subr.bf16.mxu0 0
        %1230 = vmatpush1.bf16.msra.mxu0 %v1134
        %1231 = vmatprep.subr.bf16.mxu0 0
        %1232 = vmatpush1.bf16.msra.mxu0 %v1137
        %1233 = vmatprep.subr.bf16.mxu0 0
        %1234 = vmatpush1.bf16.msra.mxu0 %v1140
        %1235 = vmatprep.subr.bf16.mxu0 0
        %1236 = vmatpush1.bf16.msra.mxu0 %v1143
        %1237 = vmatprep.subr.bf16.mxu0 0
        %1238 = vmatpush1.bf16.msra.mxu0 0
        %1239 = vmatprep.subr.bf16.mxu0 0
        %1240 = vmatpush1.bf16.msra.mxu0 0
        %1241 = vmatprep.subr.bf16.mxu0 0
        %1242 = vmatpush1.bf16.msra.mxu0 0
        %1243 = vmatprep.subr.bf16.mxu0 0
        %1244 = vmatpush1.bf16.msra.mxu0 0
        %1245 = vmatprep.subr.bf16.mxu0 0
        %1246 = vmatpush1.bf16.msra.mxu0 0
        %1247 = vmatprep.subr.bf16.mxu0 0
        %1248 = vmatpush1.bf16.msra.mxu0 0
        %1249 = vmatprep.subr.bf16.mxu0 0
        %1250 = vmatpush1.bf16.msra.mxu0 0
        %1251 = vmatprep.subr.bf16.mxu0 0
        %1252 = vmatpush1.bf16.msra.mxu0 0
        %1253 = vmatprep.mubr.bf16.mxu0 0
        %1254 = vmatmul.mubr.bf16.gmra.mrb[0].mxu0 %v989
        %v1255 = vpop.f32.mrb[0].mxu0
        %v1256 = vadd.f32 %v1036, %v1255
        %v1257 = vpop.f32.mrb[0].mxu0
        %v1258 = vpop.f32.mrb[0].mxu0
        %v1259 = vadd.f32 %v1036, %v1258
        %v1260 = vpop.f32.mrb[0].mxu0
        %1261 = vmatprep.mubr.bf16.mxu0 0
        %1262 = vmatmul.mubr.bf16.gmra.mrb[0].mxu0 %v990
        %v1263 = vpop.f32.mrb[0].mxu0
        %v1264 = vadd.f32 %v1036, %v1263
        %v1265 = vpop.f32.mrb[0].mxu0
        %v1266 = vpop.f32.mrb[0].mxu0
        %v1267 = vadd.f32 %v1036, %v1266
        %v1268 = vpop.f32.mrb[0].mxu0
        %1269 = vdwg.mxu0
        %v1270 = vpack.c.bf16 %v1207, %v1203
        %v1271 = vpack.c.bf16 %v1209, %v1205
        %v1272 = vpack.c.bf16 %v1259, %v1256
        %v1273 = vpack.c.bf16 %v1217, %v1213
        %v1274 = vpack.c.bf16 %v1219, %v1215
        %v1275 = vpack.c.bf16 %v1267, %v1264
        %vm1276 = vcmask 261120
        %1277 = vst.msk [vmem:[#allocation3] sm:$0xff] %vm1276, %v1270
        %1278 = vst.msk [vmem:[#allocation4] sm:$0xff] %vm1276, %v1271
        %1279 = vst.msk [vmem:[#allocation5] sm:$0xff] %vm1276, %v1272
        %1281 = vrot.lane.b32.xlu0 %v1270, 96
        %v1282 = vpop.permute.xlu0 %1281
        %s1284 = scalar_lea.vmem [#allocation3], 8
        %1285 = vst.msk [vmem:[%s1284] sm:$0xff] %vm1276, %v1282
        %1287 = vrot.lane.b32.xlu0 %v1271, 96
        %v1288 = vpop.permute.xlu0 %1287
        %s1290 = scalar_lea.vmem [#allocation4], 8
        %1291 = vst.msk [vmem:[%s1290] sm:$0xff] %vm1276, %v1288
        %1293 = vrot.lane.b32.xlu0 %v1272, 96
        %v1294 = vpop.permute.xlu0 %1293
        %s1296 = scalar_lea.vmem [#allocation5], 8
        %1297 = vst.msk [vmem:[%s1296] sm:$0xff] %vm1276, %v1294
        %1298 = vrot.lane.b32.xlu0 %v1270, 64
        %v1299 = vpop.permute.xlu0 %1298
        %s1301 = scalar_lea.vmem [#allocation3], 16
        %1302 = vst.msk [vmem:[%s1301] sm:$0xff] %vm1276, %v1299
        %1303 = vrot.lane.b32.xlu0 %v1271, 64
        %v1304 = vpop.permute.xlu0 %1303
        %s1306 = scalar_lea.vmem [#allocation4], 16
        %1307 = vst.msk [vmem:[%s1306] sm:$0xff] %vm1276, %v1304
        %1308 = vrot.lane.b32.xlu0 %v1272, 64
        %v1309 = vpop.permute.xlu0 %1308
        %s1311 = scalar_lea.vmem [#allocation5], 16
        %1312 = vst.msk [vmem:[%s1311] sm:$0xff] %vm1276, %v1309
        %1313 = vrot.lane.b32.xlu0 %v1270, 32
        %v1314 = vpop.permute.xlu0 %1313
        %s1316 = scalar_lea.vmem [#allocation3], 24
        %1317 = vst.msk [vmem:[%s1316] sm:$0xff] %vm1276, %v1314
        %1318 = vrot.lane.b32.xlu0 %v1271, 32
        %v1319 = vpop.permute.xlu0 %1318
        %s1321 = scalar_lea.vmem [#allocation4], 24
        %1322 = vst.msk [vmem:[%s1321] sm:$0xff] %vm1276, %v1319
        %1323 = vrot.lane.b32.xlu0 %v1272, 32
        %v1324 = vpop.permute.xlu0 %1323
        %s1326 = scalar_lea.vmem [#allocation5], 24
        %1327 = vst.msk [vmem:[%s1326] sm:$0xff] %vm1276, %v1324
        %s1328 = scalar_lea.vmem [#allocation3], 32
        %1329 = vst.msk [vmem:[%s1328] sm:$0xff] %vm1276, %v1273
        %s1330 = scalar_lea.vmem [#allocation4], 32
        %1331 = vst.msk [vmem:[%s1330] sm:$0xff] %vm1276, %v1274
        %s1332 = scalar_lea.vmem [#allocation5], 32
        %1333 = vst.msk [vmem:[%s1332] sm:$0xff] %vm1276, %v1275
        %1335 = vrot.lane.b32.xlu0 %v1273, 96
        %v1336 = vpop.permute.xlu0 %1335
        %s1338 = scalar_lea.vmem [#allocation3], 40
        %1339 = vst.msk [vmem:[%s1338] sm:$0xff] %vm1276, %v1336
        %1341 = vrot.lane.b32.xlu0 %v1274, 96
        %v1342 = vpop.permute.xlu0 %1341
        %s1344 = scalar_lea.vmem [#allocation4], 40
        %1345 = vst.msk [vmem:[%s1344] sm:$0xff] %vm1276, %v1342
        %1347 = vrot.lane.b32.xlu0 %v1275, 96
        %v1348 = vpop.permute.xlu0 %1347
        %s1350 = scalar_lea.vmem [#allocation5], 40
        %1351 = vst.msk [vmem:[%s1350] sm:$0xff] %vm1276, %v1348
        %1352 = vrot.lane.b32.xlu0 %v1273, 64
        %v1353 = vpop.permute.xlu0 %1352
        %s1355 = scalar_lea.vmem [#allocation3], 48
        %1356 = vst.msk [vmem:[%s1355] sm:$0xff] %vm1276, %v1353
        %1357 = vrot.lane.b32.xlu0 %v1274, 64
        %v1358 = vpop.permute.xlu0 %1357
        %s1360 = scalar_lea.vmem [#allocation4], 48
        %1361 = vst.msk [vmem:[%s1360] sm:$0xff] %vm1276, %v1358
        %1362 = vrot.lane.b32.xlu0 %v1275, 64
        %v1363 = vpop.permute.xlu0 %1362
        %s1365 = scalar_lea.vmem [#allocation5], 48
        %1366 = vst.msk [vmem:[%s1365] sm:$0xff] %vm1276, %v1363
        %1367 = vrot.lane.b32.xlu0 %v1273, 32
        %v1368 = vpop.permute.xlu0 %1367
        %s1370 = scalar_lea.vmem [#allocation3], 56
        %1371 = vst.msk [vmem:[%s1370] sm:$0xff] %vm1276, %v1368
        %1372 = vrot.lane.b32.xlu0 %v1274, 32
        %v1373 = vpop.permute.xlu0 %1372
        %s1375 = scalar_lea.vmem [#allocation4], 56
        %1376 = vst.msk [vmem:[%s1375] sm:$0xff] %vm1276, %v1373
        %1377 = vrot.lane.b32.xlu0 %v1275, 32
        %v1378 = vpop.permute.xlu0 %1377
        %s1380 = scalar_lea.vmem [#allocation5], 56
        %1381 = vst.msk [vmem:[%s1380] sm:$0xff] %vm1276, %v1378
        %v1382 = vld [vmem:[#allocation3] sm:$0xff]
        %v1383 = vld [vmem:[#allocation3 + $0x8] sm:$0xff]
        %v1384 = vld [vmem:[#allocation3 + $0x10] sm:$0xff]
        %v1385 = vld [vmem:[#allocation3 + $0x18] sm:$0xff]
        %v1386 = vld [vmem:[#allocation3 + $0x20] sm:$0xff]
        %v1387 = vld [vmem:[#allocation3 + $0x28] sm:$0xff]
        %v1388 = vld [vmem:[#allocation3 + $0x30] sm:$0xff]
        %v1389 = vld [vmem:[#allocation3 + $0x38] sm:$0xff]
        %v1390 = vld [vmem:[#allocation4] sm:$0xff]
        %v1391 = vld [vmem:[#allocation4 + $0x8] sm:$0xff]
        %v1392 = vld [vmem:[#allocation4 + $0x10] sm:$0xff]
        %v1393 = vld [vmem:[#allocation4 + $0x18] sm:$0xff]
        %v1394 = vld [vmem:[#allocation4 + $0x20] sm:$0xff]
        %v1395 = vld [vmem:[#allocation4 + $0x28] sm:$0xff]
        %v1396 = vld [vmem:[#allocation4 + $0x30] sm:$0xff]
        %v1397 = vld [vmem:[#allocation4 + $0x38] sm:$0xff]
        %v1399 = vsel %vm1276, %v1382, 0
        %v1402 = vsel %vm1276, %v1390, 0
        %1404 = vmatprep.subr.bf16.mxu0 0
        %1405 = vmatpush1.bf16.xpose.msra.mxu0 %v1402
        %1406 = vmatprep.subr.bf16.mxu0 0
        %1407 = vmatpush1.bf16.xpose.msra.mxu0 0
        %1408 = vmatprep.subr.bf16.mxu0 0
        %1409 = vmatpush1.bf16.xpose.msra.mxu0 0
        %1410 = vmatprep.subr.bf16.mxu0 0
        %1411 = vmatpush1.bf16.xpose.msra.mxu0 0
        %1412 = vmatprep.subr.bf16.mxu0 0
        %1413 = vmatpush1.bf16.xpose.msra.mxu0 0
        %1414 = vmatprep.subr.bf16.mxu0 0
        %1415 = vmatpush1.bf16.xpose.msra.mxu0 0
        %1416 = vmatprep.subr.bf16.mxu0 0
        %1417 = vmatpush1.bf16.xpose.msra.mxu0 0
        %1418 = vmatprep.subr.bf16.mxu0 0
        %1419 = vmatpush1.bf16.xpose.msra.mxu0 0
        %1420 = vmatprep.subr.bf16.mxu0 0
        %1421 = vmatpush1.bf16.xpose.msra.mxu0 0
        %1422 = vmatprep.subr.bf16.mxu0 0
        %1423 = vmatpush1.bf16.xpose.msra.mxu0 0
        %1424 = vmatprep.subr.bf16.mxu0 0
        %1425 = vmatpush1.bf16.xpose.msra.mxu0 0
        %1426 = vmatprep.subr.bf16.mxu0 0
        %1427 = vmatpush1.bf16.xpose.msra.mxu0 0
        %1428 = vmatprep.subr.bf16.mxu0 0
        %1429 = vmatpush1.bf16.xpose.msra.mxu0 0
        %1430 = vmatprep.subr.bf16.mxu0 0
        %1431 = vmatpush1.bf16.xpose.msra.mxu0 0
        %1432 = vmatprep.subr.bf16.mxu0 0
        %1433 = vmatpush1.bf16.xpose.msra.mxu0 0
        %1434 = vmatprep.subr.bf16.mxu0 0
        %1435 = vmatpush1.bf16.xpose.msra.mxu0 0
        %1436 = vmatprep.mubr.bf16.mxu0 0
        %1437 = vmatmul.mubr.bf16.gmra.mrb[0].mxu0 %v1399
        %v1438 = vpop.f32.mrb[0].mxu0
        %v1439 = vadd.f32 0.0, %v1438
        %v1440 = vpop.f32.mrb[0].mxu0
        %v1441 = vpop.f32.mrb[0].mxu0
        %v1442 = vadd.f32 0.0, %v1441
        %v1443 = vpop.f32.mrb[0].mxu0
        %1444 = vdwg.mxu0
        %v1446 = vsel %vm1276, %v1383, 0
        %v1449 = vsel %vm1276, %v1391, 0
        %1451 = vmatprep.subr.bf16.mxu0 0
        %1452 = vmatpush1.bf16.xpose.msra.mxu0 %v1449
        %1453 = vmatprep.subr.bf16.mxu0 0
        %1454 = vmatpush1.bf16.xpose.msra.mxu0 0
        %1455 = vmatprep.subr.bf16.mxu0 0
        %1456 = vmatpush1.bf16.xpose.msra.mxu0 0
        %1457 = vmatprep.subr.bf16.mxu0 0
        %1458 = vmatpush1.bf16.xpose.msra.mxu0 0
        %1459 = vmatprep.subr.bf16.mxu0 0
        %1460 = vmatpush1.bf16.xpose.msra.mxu0 0
        %1461 = vmatprep.subr.bf16.mxu0 0
        %1462 = vmatpush1.bf16.xpose.msra.mxu0 0
        %1463 = vmatprep.subr.bf16.mxu0 0
        %1464 = vmatpush1.bf16.xpose.msra.mxu0 0
        %1465 = vmatprep.subr.bf16.mxu0 0
        %1466 = vmatpush1.bf16.xpose.msra.mxu0 0
        %1467 = vmatprep.subr.bf16.mxu0 0
        %1468 = vmatpush1.bf16.xpose.msra.mxu0 0
        %1469 = vmatprep.subr.bf16.mxu0 0
        %1470 = vmatpush1.bf16.xpose.msra.mxu0 0
        %1471 = vmatprep.subr.bf16.mxu0 0
        %1472 = vmatpush1.bf16.xpose.msra.mxu0 0
        %1473 = vmatprep.subr.bf16.mxu0 0
        %1474 = vmatpush1.bf16.xpose.msra.mxu0 0
        %1475 = vmatprep.subr.bf16.mxu0 0
        %1476 = vmatpush1.bf16.xpose.msra.mxu0 0
        %1477 = vmatprep.subr.bf16.mxu0 0
        %1478 = vmatpush1.bf16.xpose.msra.mxu0 0
        %1479 = vmatprep.subr.bf16.mxu0 0
        %1480 = vmatpush1.bf16.xpose.msra.mxu0 0
        %1481 = vmatprep.subr.bf16.mxu0 0
        %1482 = vmatpush1.bf16.xpose.msra.mxu0 0
        %1483 = vmatprep.mubr.bf16.mxu0 0
        %1484 = vmatmul.mubr.bf16.gmra.mrb[0].mxu0 %v1446
        %v1485 = vpop.f32.mrb[0].mxu0
        %v1486 = vadd.f32 0.0, %v1485
        %v1487 = vpop.f32.mrb[0].mxu0
        %v1488 = vpop.f32.mrb[0].mxu0
        %v1489 = vadd.f32 0.0, %v1488
        %v1490 = vpop.f32.mrb[0].mxu0
        %1491 = vdwg.mxu0
        %v1493 = vsel %vm1276, %v1384, 0
        %v1496 = vsel %vm1276, %v1392, 0
        %1498 = vmatprep.subr.bf16.mxu0 0
        %1499 = vmatpush1.bf16.xpose.msra.mxu0 %v1496
        %1500 = vmatprep.subr.bf16.mxu0 0
        %1501 = vmatpush1.bf16.xpose.msra.mxu0 0
        %1502 = vmatprep.subr.bf16.mxu0 0
        %1503 = vmatpush1.bf16.xpose.msra.mxu0 0
        %1504 = vmatprep.subr.bf16.mxu0 0
        %1505 = vmatpush1.bf16.xpose.msra.mxu0 0
        %1506 = vmatprep.subr.bf16.mxu0 0
        %1507 = vmatpush1.bf16.xpose.msra.mxu0 0
        %1508 = vmatprep.subr.bf16.mxu0 0
        %1509 = vmatpush1.bf16.xpose.msra.mxu0 0
        %1510 = vmatprep.subr.bf16.mxu0 0
        %1511 = vmatpush1.bf16.xpose.msra.mxu0 0
        %1512 = vmatprep.subr.bf16.mxu0 0
        %1513 = vmatpush1.bf16.xpose.msra.mxu0 0
        %1514 = vmatprep.subr.bf16.mxu0 0
        %1515 = vmatpush1.bf16.xpose.msra.mxu0 0
        %1516 = vmatprep.subr.bf16.mxu0 0
        %1517 = vmatpush1.bf16.xpose.msra.mxu0 0
        %1518 = vmatprep.subr.bf16.mxu0 0
        %1519 = vmatpush1.bf16.xpose.msra.mxu0 0
        %1520 = vmatprep.subr.bf16.mxu0 0
        %1521 = vmatpush1.bf16.xpose.msra.mxu0 0
        %1522 = vmatprep.subr.bf16.mxu0 0
        %1523 = vmatpush1.bf16.xpose.msra.mxu0 0
        %1524 = vmatprep.subr.bf16.mxu0 0
        %1525 = vmatpush1.bf16.xpose.msra.mxu0 0
        %1526 = vmatprep.subr.bf16.mxu0 0
        %1527 = vmatpush1.bf16.xpose.msra.mxu0 0
        %1528 = vmatprep.subr.bf16.mxu0 0
        %1529 = vmatpush1.bf16.xpose.msra.mxu0 0
        %1530 = vmatprep.mubr.bf16.mxu0 0
        %1531 = vmatmul.mubr.bf16.gmra.mrb[0].mxu0 %v1493
        %v1532 = vpop.f32.mrb[0].mxu0
        %v1533 = vadd.f32 0.0, %v1532
        %v1534 = vpop.f32.mrb[0].mxu0
        %v1535 = vpop.f32.mrb[0].mxu0
        %v1536 = vadd.f32 0.0, %v1535
        %v1537 = vpop.f32.mrb[0].mxu0
        %1538 = vdwg.mxu0
        %v1540 = vsel %vm1276, %v1385, 0
        %v1543 = vsel %vm1276, %v1393, 0
        %1545 = vmatprep.subr.bf16.mxu0 0
        %1546 = vmatpush1.bf16.xpose.msra.mxu0 %v1543
        %1547 = vmatprep.subr.bf16.mxu0 0
        %1548 = vmatpush1.bf16.xpose.msra.mxu0 0
        %1549 = vmatprep.subr.bf16.mxu0 0
        %1550 = vmatpush1.bf16.xpose.msra.mxu0 0
        %1551 = vmatprep.subr.bf16.mxu0 0
        %1552 = vmatpush1.bf16.xpose.msra.mxu0 0
        %1553 = vmatprep.subr.bf16.mxu0 0
        %1554 = vmatpush1.bf16.xpose.msra.mxu0 0
        %1555 = vmatprep.subr.bf16.mxu0 0
        %1556 = vmatpush1.bf16.xpose.msra.mxu0 0
        %1557 = vmatprep.subr.bf16.mxu0 0
        %1558 = vmatpush1.bf16.xpose.msra.mxu0 0
        %1559 = vmatprep.subr.bf16.mxu0 0
        %1560 = vmatpush1.bf16.xpose.msra.mxu0 0
        %1561 = vmatprep.subr.bf16.mxu0 0
        %1562 = vmatpush1.bf16.xpose.msra.mxu0 0
        %1563 = vmatprep.subr.bf16.mxu0 0
        %1564 = vmatpush1.bf16.xpose.msra.mxu0 0
        %1565 = vmatprep.subr.bf16.mxu0 0
        %1566 = vmatpush1.bf16.xpose.msra.mxu0 0
        %1567 = vmatprep.subr.bf16.mxu0 0
        %1568 = vmatpush1.bf16.xpose.msra.mxu0 0
        %1569 = vmatprep.subr.bf16.mxu0 0
        %1570 = vmatpush1.bf16.xpose.msra.mxu0 0
        %1571 = vmatprep.subr.bf16.mxu0 0
        %1572 = vmatpush1.bf16.xpose.msra.mxu0 0
        %1573 = vmatprep.subr.bf16.mxu0 0
        %1574 = vmatpush1.bf16.xpose.msra.mxu0 0
        %1575 = vmatprep.subr.bf16.mxu0 0
        %1576 = vmatpush1.bf16.xpose.msra.mxu0 0
        %1577 = vmatprep.mubr.bf16.mxu0 0
        %1578 = vmatmul.mubr.bf16.gmra.mrb[0].mxu0 %v1540
        %v1579 = vpop.f32.mrb[0].mxu0
        %v1580 = vadd.f32 0.0, %v1579
        %v1581 = vpop.f32.mrb[0].mxu0
        %v1582 = vpop.f32.mrb[0].mxu0
        %v1583 = vadd.f32 0.0, %v1582
        %v1584 = vpop.f32.mrb[0].mxu0
        %1585 = vdwg.mxu0
        %v1587 = vsel %vm1276, %v1386, 0
        %v1590 = vsel %vm1276, %v1394, 0
        %1592 = vmatprep.subr.bf16.mxu0 0
        %1593 = vmatpush1.bf16.xpose.msra.mxu0 %v1590
        %1594 = vmatprep.subr.bf16.mxu0 0
        %1595 = vmatpush1.bf16.xpose.msra.mxu0 0
        %1596 = vmatprep.subr.bf16.mxu0 0
        %1597 = vmatpush1.bf16.xpose.msra.mxu0 0
        %1598 = vmatprep.subr.bf16.mxu0 0
        %1599 = vmatpush1.bf16.xpose.msra.mxu0 0
        %1600 = vmatprep.subr.bf16.mxu0 0
        %1601 = vmatpush1.bf16.xpose.msra.mxu0 0
        %1602 = vmatprep.subr.bf16.mxu0 0
        %1603 = vmatpush1.bf16.xpose.msra.mxu0 0
        %1604 = vmatprep.subr.bf16.mxu0 0
        %1605 = vmatpush1.bf16.xpose.msra.mxu0 0
        %1606 = vmatprep.subr.bf16.mxu0 0
        %1607 = vmatpush1.bf16.xpose.msra.mxu0 0
        %1608 = vmatprep.subr.bf16.mxu0 0
        %1609 = vmatpush1.bf16.xpose.msra.mxu0 0
        %1610 = vmatprep.subr.bf16.mxu0 0
        %1611 = vmatpush1.bf16.xpose.msra.mxu0 0
        %1612 = vmatprep.subr.bf16.mxu0 0
        %1613 = vmatpush1.bf16.xpose.msra.mxu0 0
        %1614 = vmatprep.subr.bf16.mxu0 0
        %1615 = vmatpush1.bf16.xpose.msra.mxu0 0
        %1616 = vmatprep.subr.bf16.mxu0 0
        %1617 = vmatpush1.bf16.xpose.msra.mxu0 0
        %1618 = vmatprep.subr.bf16.mxu0 0
        %1619 = vmatpush1.bf16.xpose.msra.mxu0 0
        %1620 = vmatprep.subr.bf16.mxu0 0
        %1621 = vmatpush1.bf16.xpose.msra.mxu0 0
        %1622 = vmatprep.subr.bf16.mxu0 0
        %1623 = vmatpush1.bf16.xpose.msra.mxu0 0
        %1624 = vmatprep.mubr.bf16.mxu0 0
        %1625 = vmatmul.mubr.bf16.gmra.mrb[0].mxu0 %v1587
        %v1626 = vpop.f32.mrb[0].mxu0
        %v1627 = vadd.f32 0.0, %v1626
        %v1628 = vpop.f32.mrb[0].mxu0
        %v1629 = vpop.f32.mrb[0].mxu0
        %v1630 = vadd.f32 0.0, %v1629
        %v1631 = vpop.f32.mrb[0].mxu0
        %1632 = vdwg.mxu0
        %v1634 = vsel %vm1276, %v1387, 0
        %v1637 = vsel %vm1276, %v1395, 0
        %1639 = vmatprep.subr.bf16.mxu0 0
        %1640 = vmatpush1.bf16.xpose.msra.mxu0 %v1637
        %1641 = vmatprep.subr.bf16.mxu0 0
        %1642 = vmatpush1.bf16.xpose.msra.mxu0 0
        %1643 = vmatprep.subr.bf16.mxu0 0
        %1644 = vmatpush1.bf16.xpose.msra.mxu0 0
        %1645 = vmatprep.subr.bf16.mxu0 0
        %1646 = vmatpush1.bf16.xpose.msra.mxu0 0
        %1647 = vmatprep.subr.bf16.mxu0 0
        %1648 = vmatpush1.bf16.xpose.msra.mxu0 0
        %1649 = vmatprep.subr.bf16.mxu0 0
        %1650 = vmatpush1.bf16.xpose.msra.mxu0 0
        %1651 = vmatprep.subr.bf16.mxu0 0
        %1652 = vmatpush1.bf16.xpose.msra.mxu0 0
        %1653 = vmatprep.subr.bf16.mxu0 0
        %1654 = vmatpush1.bf16.xpose.msra.mxu0 0
        %1655 = vmatprep.subr.bf16.mxu0 0
        %1656 = vmatpush1.bf16.xpose.msra.mxu0 0
        %1657 = vmatprep.subr.bf16.mxu0 0
        %1658 = vmatpush1.bf16.xpose.msra.mxu0 0
        %1659 = vmatprep.subr.bf16.mxu0 0
        %1660 = vmatpush1.bf16.xpose.msra.mxu0 0
        %1661 = vmatprep.subr.bf16.mxu0 0
        %1662 = vmatpush1.bf16.xpose.msra.mxu0 0
        %1663 = vmatprep.subr.bf16.mxu0 0
        %1664 = vmatpush1.bf16.xpose.msra.mxu0 0
        %1665 = vmatprep.subr.bf16.mxu0 0
        %1666 = vmatpush1.bf16.xpose.msra.mxu0 0
        %1667 = vmatprep.subr.bf16.mxu0 0
        %1668 = vmatpush1.bf16.xpose.msra.mxu0 0
        %1669 = vmatprep.subr.bf16.mxu0 0
        %1670 = vmatpush1.bf16.xpose.msra.mxu0 0
        %1671 = vmatprep.mubr.bf16.mxu0 0
        %1672 = vmatmul.mubr.bf16.gmra.mrb[0].mxu0 %v1634
        %v1673 = vpop.f32.mrb[0].mxu0
        %v1674 = vadd.f32 0.0, %v1673
        %v1675 = vpop.f32.mrb[0].mxu0
        %v1676 = vpop.f32.mrb[0].mxu0
        %v1677 = vadd.f32 0.0, %v1676
        %v1678 = vpop.f32.mrb[0].mxu0
        %1679 = vdwg.mxu0
        %v1681 = vsel %vm1276, %v1388, 0
        %v1684 = vsel %vm1276, %v1396, 0
        %1686 = vmatprep.subr.bf16.mxu0 0
        %1687 = vmatpush1.bf16.xpose.msra.mxu0 %v1684
        %1688 = vmatprep.subr.bf16.mxu0 0
        %1689 = vmatpush1.bf16.xpose.msra.mxu0 0
        %1690 = vmatprep.subr.bf16.mxu0 0
        %1691 = vmatpush1.bf16.xpose.msra.mxu0 0
        %1692 = vmatprep.subr.bf16.mxu0 0
        %1693 = vmatpush1.bf16.xpose.msra.mxu0 0
        %1694 = vmatprep.subr.bf16.mxu0 0
        %1695 = vmatpush1.bf16.xpose.msra.mxu0 0
        %1696 = vmatprep.subr.bf16.mxu0 0
        %1697 = vmatpush1.bf16.xpose.msra.mxu0 0
        %1698 = vmatprep.subr.bf16.mxu0 0
        %1699 = vmatpush1.bf16.xpose.msra.mxu0 0
        %1700 = vmatprep.subr.bf16.mxu0 0
        %1701 = vmatpush1.bf16.xpose.msra.mxu0 0
        %1702 = vmatprep.subr.bf16.mxu0 0
        %1703 = vmatpush1.bf16.xpose.msra.mxu0 0
        %1704 = vmatprep.subr.bf16.mxu0 0
        %1705 = vmatpush1.bf16.xpose.msra.mxu0 0
        %1706 = vmatprep.subr.bf16.mxu0 0
        %1707 = vmatpush1.bf16.xpose.msra.mxu0 0
        %1708 = vmatprep.subr.bf16.mxu0 0
        %1709 = vmatpush1.bf16.xpose.msra.mxu0 0
        %1710 = vmatprep.subr.bf16.mxu0 0
        %1711 = vmatpush1.bf16.xpose.msra.mxu0 0
        %1712 = vmatprep.subr.bf16.mxu0 0
        %1713 = vmatpush1.bf16.xpose.msra.mxu0 0
        %1714 = vmatprep.subr.bf16.mxu0 0
        %1715 = vmatpush1.bf16.xpose.msra.mxu0 0
        %1716 = vmatprep.subr.bf16.mxu0 0
        %1717 = vmatpush1.bf16.xpose.msra.mxu0 0
        %1718 = vmatprep.mubr.bf16.mxu0 0
        %1719 = vmatmul.mubr.bf16.gmra.mrb[0].mxu0 %v1681
        %v1720 = vpop.f32.mrb[0].mxu0
        %v1721 = vadd.f32 0.0, %v1720
        %v1722 = vpop.f32.mrb[0].mxu0
        %v1723 = vpop.f32.mrb[0].mxu0
        %v1724 = vadd.f32 0.0, %v1723
        %v1725 = vpop.f32.mrb[0].mxu0
        %1726 = vdwg.mxu0
        %v1728 = vsel %vm1276, %v1389, 0
        %v1731 = vsel %vm1276, %v1397, 0
        %1733 = vmatprep.subr.bf16.mxu0 0
        %1734 = vmatpush1.bf16.xpose.msra.mxu0 %v1731
        %1735 = vmatprep.subr.bf16.mxu0 0
        %1736 = vmatpush1.bf16.xpose.msra.mxu0 0
        %1737 = vmatprep.subr.bf16.mxu0 0
        %1738 = vmatpush1.bf16.xpose.msra.mxu0 0
        %1739 = vmatprep.subr.bf16.mxu0 0
        %1740 = vmatpush1.bf16.xpose.msra.mxu0 0
        %1741 = vmatprep.subr.bf16.mxu0 0
        %1742 = vmatpush1.bf16.xpose.msra.mxu0 0
        %1743 = vmatprep.subr.bf16.mxu0 0
        %1744 = vmatpush1.bf16.xpose.msra.mxu0 0
        %1745 = vmatprep.subr.bf16.mxu0 0
        %1746 = vmatpush1.bf16.xpose.msra.mxu0 0
        %1747 = vmatprep.subr.bf16.mxu0 0
        %1748 = vmatpush1.bf16.xpose.msra.mxu0 0
        %1749 = vmatprep.subr.bf16.mxu0 0
        %1750 = vmatpush1.bf16.xpose.msra.mxu0 0
        %1751 = vmatprep.subr.bf16.mxu0 0
        %1752 = vmatpush1.bf16.xpose.msra.mxu0 0
        %1753 = vmatprep.subr.bf16.mxu0 0
        %1754 = vmatpush1.bf16.xpose.msra.mxu0 0
        %1755 = vmatprep.subr.bf16.mxu0 0
        %1756 = vmatpush1.bf16.xpose.msra.mxu0 0
        %1757 = vmatprep.subr.bf16.mxu0 0
        %1758 = vmatpush1.bf16.xpose.msra.mxu0 0
        %1759 = vmatprep.subr.bf16.mxu0 0
        %1760 = vmatpush1.bf16.xpose.msra.mxu0 0
        %1761 = vmatprep.subr.bf16.mxu0 0
        %1762 = vmatpush1.bf16.xpose.msra.mxu0 0
        %1763 = vmatprep.subr.bf16.mxu0 0
        %1764 = vmatpush1.bf16.xpose.msra.mxu0 0
        %1765 = vmatprep.mubr.bf16.mxu0 0
        %1766 = vmatmul.mubr.bf16.gmra.mrb[0].mxu0 %v1728
        %v1767 = vpop.f32.mrb[0].mxu0
        %v1768 = vadd.f32 0.0, %v1767
        %v1769 = vpop.f32.mrb[0].mxu0
        %v1770 = vpop.f32.mrb[0].mxu0
        %v1771 = vadd.f32 0.0, %v1770
        %v1772 = vpop.f32.mrb[0].mxu0
        %1773 = vdwg.mxu0
        %v1774 = vmul.f32 %v1439, 0.17677669
        %v1775 = vmul.f32 %v1442, 0.17677669
        %v1776 = vmul.f32 %v1486, 0.17677669
        %v1777 = vmul.f32 %v1489, 0.17677669
        %v1778 = vmul.f32 %v1533, 0.17677669
        %v1779 = vmul.f32 %v1536, 0.17677669
        %v1780 = vmul.f32 %v1580, 0.17677669
        %v1781 = vmul.f32 %v1583, 0.17677669
        %v1782 = vmul.f32 %v1627, 0.17677669
        %v1783 = vmul.f32 %v1630, 0.17677669
        %v1784 = vmul.f32 %v1674, 0.17677669
        %v1785 = vmul.f32 %v1677, 0.17677669
        %v1786 = vmul.f32 %v1721, 0.17677669
        %v1787 = vmul.f32 %v1724, 0.17677669
        %v1788 = vmul.f32 %v1768, 0.17677669
        %v1789 = vmul.f32 %v1771, 0.17677669
        %v1790 = vld [vmem:[%s728] sm:$0x1]
        %v1791 = vld [vmem:[%s728 + $0x1] sm:$0x1]
        %v1792 = vld [vmem:[%s728 + $0x2] sm:$0x1]
        %v1793 = vld [vmem:[%s728 + $0x3] sm:$0x1]
        %v1794 = vld [vmem:[%s728 + $0x4] sm:$0x1]
        %v1795 = vld [vmem:[%s728 + $0x5] sm:$0x1]
        %v1796 = vld [vmem:[%s728 + $0x6] sm:$0x1]
        %v1797 = vld [vmem:[%s728 + $0x7] sm:$0x1]
        %v1806 = vlaneseq
        %v1807 = vshrl.u32 %v1806, 7
        %v1808 = vsub.s32 0, %v1807
        %v1809 = vrot.slane %v1790, %v1808
        %v1810 = vlaneseq
        %v1811 = vshrl.u32 %v1810, 7
        %v1812 = vsub.s32 0, %v1811
        %v1813 = vrot.slane %v1791, %v1812
        %v1814 = vlaneseq
        %v1815 = vshrl.u32 %v1814, 7
        %v1816 = vsub.s32 0, %v1815
        %v1817 = vrot.slane %v1792, %v1816
        %v1818 = vlaneseq
        %v1819 = vshrl.u32 %v1818, 7
        %v1820 = vsub.s32 0, %v1819
        %v1821 = vrot.slane %v1793, %v1820
        %v1822 = vlaneseq
        %v1823 = vshrl.u32 %v1822, 7
        %v1824 = vsub.s32 0, %v1823
        %v1825 = vrot.slane %v1794, %v1824
        %v1826 = vlaneseq
        %v1827 = vshrl.u32 %v1826, 7
        %v1828 = vsub.s32 0, %v1827
        %v1829 = vrot.slane %v1795, %v1828
        %v1830 = vlaneseq
        %v1831 = vshrl.u32 %v1830, 7
        %v1832 = vsub.s32 0, %v1831
        %v1833 = vrot.slane %v1796, %v1832
        %v1834 = vlaneseq
        %v1835 = vshrl.u32 %v1834, 7
        %v1836 = vsub.s32 0, %v1835
        %v1837 = vrot.slane %v1797, %v1836
        %v1846 = vadd.f32 %v1774, %v1809
        %v1847 = vadd.f32 %v1775, %v1809
        %v1848 = vadd.f32 %v1776, %v1813
        %v1849 = vadd.f32 %v1777, %v1813
        %v1850 = vadd.f32 %v1778, %v1817
        %v1851 = vadd.f32 %v1779, %v1817
        %v1852 = vadd.f32 %v1780, %v1821
        %v1853 = vadd.f32 %v1781, %v1821
        %v1854 = vadd.f32 %v1782, %v1825
        %v1855 = vadd.f32 %v1783, %v1825
        %v1856 = vadd.f32 %v1784, %v1829
        %v1857 = vadd.f32 %v1785, %v1829
        %v1858 = vadd.f32 %v1786, %v1833
        %v1859 = vadd.f32 %v1787, %v1833
        %v1860 = vadd.f32 %v1788, %v1837
        %v1861 = vadd.f32 %v1789, %v1837
        %vm1862 = vcmask 130048
        %v1863 = vsel %vm1862, %v1846, -inf
        %1864 = vmax.xlane.f32.xlu0 %v1863
        %v1865 = vpop.xlane.xlu0 %1864
        %v1866 = vsel %vm1862, %v1847, -inf
        %1867 = vmax.xlane.f32.xlu0 %v1866
        %v1868 = vpop.xlane.xlu0 %1867
        %v1869 = vsel %vm1862, %v1848, -inf
        %1870 = vmax.xlane.f32.xlu0 %v1869
        %v1871 = vpop.xlane.xlu0 %1870
        %v1872 = vsel %vm1862, %v1849, -inf
        %1873 = vmax.xlane.f32.xlu0 %v1872
        %v1874 = vpop.xlane.xlu0 %1873
        %v1875 = vsel %vm1862, %v1850, -inf
        %1876 = vmax.xlane.f32.xlu0 %v1875
        %v1877 = vpop.xlane.xlu0 %1876
        %v1878 = vsel %vm1862, %v1851, -inf
        %1879 = vmax.xlane.f32.xlu0 %v1878
        %v1880 = vpop.xlane.xlu0 %1879
        %v1881 = vsel %vm1862, %v1852, -inf
        %1882 = vmax.xlane.f32.xlu0 %v1881
        %v1883 = vpop.xlane.xlu0 %1882
        %v1884 = vsel %vm1862, %v1853, -inf
        %1885 = vmax.xlane.f32.xlu0 %v1884
        %v1886 = vpop.xlane.xlu0 %1885
        %v1887 = vsel %vm1862, %v1854, -inf
        %1888 = vmax.xlane.f32.xlu0 %v1887
        %v1889 = vpop.xlane.xlu0 %1888
        %v1890 = vsel %vm1862, %v1855, -inf
        %1891 = vmax.xlane.f32.xlu0 %v1890
        %v1892 = vpop.xlane.xlu0 %1891
        %v1893 = vsel %vm1862, %v1856, -inf
        %1894 = vmax.xlane.f32.xlu0 %v1893
        %v1895 = vpop.xlane.xlu0 %1894
        %v1896 = vsel %vm1862, %v1857, -inf
        %1897 = vmax.xlane.f32.xlu0 %v1896
        %v1898 = vpop.xlane.xlu0 %1897
        %v1899 = vsel %vm1862, %v1858, -inf
        %1900 = vmax.xlane.f32.xlu0 %v1899
        %v1901 = vpop.xlane.xlu0 %1900
        %v1902 = vsel %vm1862, %v1859, -inf
        %1903 = vmax.xlane.f32.xlu0 %v1902
        %v1904 = vpop.xlane.xlu0 %1903
        %v1905 = vsel %vm1862, %v1860, -inf
        %1906 = vmax.xlane.f32.xlu0 %v1905
        %v1907 = vpop.xlane.xlu0 %1906
        %v1908 = vsel %vm1862, %v1861, -inf
        %1909 = vmax.xlane.f32.xlu0 %v1908
        %v1910 = vpop.xlane.xlu0 %1909
        %v1911 = vsub.f32 %v1846, %v1865
        %v1912 = vsub.f32 %v1847, %v1868
        %v1913 = vsub.f32 %v1848, %v1871
        %v1914 = vsub.f32 %v1849, %v1874
        %v1915 = vsub.f32 %v1850, %v1877
        %v1916 = vsub.f32 %v1851, %v1880
        %v1917 = vsub.f32 %v1852, %v1883
        %v1918 = vsub.f32 %v1853, %v1886
        %v1919 = vsub.f32 %v1854, %v1889
        %v1920 = vsub.f32 %v1855, %v1892
        %v1921 = vsub.f32 %v1856, %v1895
        %v1922 = vsub.f32 %v1857, %v1898
        %v1923 = vsub.f32 %v1858, %v1901
        %v1924 = vsub.f32 %v1859, %v1904
        %v1925 = vsub.f32 %v1860, %v1907
        %v1926 = vsub.f32 %v1861, %v1910
        %v1927 = vmul.f32 %v1911, 1.442695
        %v1928 = vpow.pop %v1927
        %v1929 = vmul.f32 %v1912, 1.442695
        %v1930 = vpow.pop %v1929
        %v1931 = vmul.f32 %v1913, 1.442695
        %v1932 = vpow.pop %v1931
        %v1933 = vmul.f32 %v1914, 1.442695
        %v1934 = vpow.pop %v1933
        %v1935 = vmul.f32 %v1915, 1.442695
        %v1936 = vpow.pop %v1935
        %v1937 = vmul.f32 %v1916, 1.442695
        %v1938 = vpow.pop %v1937
        %v1939 = vmul.f32 %v1917, 1.442695
        %v1940 = vpow.pop %v1939
        %v1941 = vmul.f32 %v1918, 1.442695
        %v1942 = vpow.pop %v1941
        %v1943 = vmul.f32 %v1919, 1.442695
        %v1944 = vpow.pop %v1943
        %v1945 = vmul.f32 %v1920, 1.442695
        %v1946 = vpow.pop %v1945
        %v1947 = vmul.f32 %v1921, 1.442695
        %v1948 = vpow.pop %v1947
        %v1949 = vmul.f32 %v1922, 1.442695
        %v1950 = vpow.pop %v1949
        %v1951 = vmul.f32 %v1923, 1.442695
        %v1952 = vpow.pop %v1951
        %v1953 = vmul.f32 %v1924, 1.442695
        %v1954 = vpow.pop %v1953
        %v1955 = vmul.f32 %v1925, 1.442695
        %v1956 = vpow.pop %v1955
        %v1957 = vmul.f32 %v1926, 1.442695
        %v1958 = vpow.pop %v1957
        %v1959 = vsel %vm1862, %v1928, 0.0
        %1960 = vadd.xlane.f32.xlu0 %v1959
        %v1961 = vpop.xlane.xlu0 %1960
        %v1962 = vsel %vm1862, %v1930, 0.0
        %1963 = vadd.xlane.f32.xlu0 %v1962
        %v1964 = vpop.xlane.xlu0 %1963
        %v1965 = vsel %vm1862, %v1932, 0.0
        %1966 = vadd.xlane.f32.xlu0 %v1965
        %v1967 = vpop.xlane.xlu0 %1966
        %v1968 = vsel %vm1862, %v1934, 0.0
        %1969 = vadd.xlane.f32.xlu0 %v1968
        %v1970 = vpop.xlane.xlu0 %1969
        %v1971 = vsel %vm1862, %v1936, 0.0
        %1972 = vadd.xlane.f32.xlu0 %v1971
        %v1973 = vpop.xlane.xlu0 %1972
        %v1974 = vsel %vm1862, %v1938, 0.0
        %1975 = vadd.xlane.f32.xlu0 %v1974
        %v1976 = vpop.xlane.xlu0 %1975
        %v1977 = vsel %vm1862, %v1940, 0.0
        %1978 = vadd.xlane.f32.xlu0 %v1977
        %v1979 = vpop.xlane.xlu0 %1978
        %v1980 = vsel %vm1862, %v1942, 0.0
        %1981 = vadd.xlane.f32.xlu0 %v1980
        %v1982 = vpop.xlane.xlu0 %1981
        %v1983 = vsel %vm1862, %v1944, 0.0
        %1984 = vadd.xlane.f32.xlu0 %v1983
        %v1985 = vpop.xlane.xlu0 %1984
        %v1986 = vsel %vm1862, %v1946, 0.0
        %1987 = vadd.xlane.f32.xlu0 %v1986
        %v1988 = vpop.xlane.xlu0 %1987
        %v1989 = vsel %vm1862, %v1948, 0.0
        %1990 = vadd.xlane.f32.xlu0 %v1989
        %v1991 = vpop.xlane.xlu0 %1990
        %v1992 = vsel %vm1862, %v1950, 0.0
        %1993 = vadd.xlane.f32.xlu0 %v1992
        %v1994 = vpop.xlane.xlu0 %1993
        %v1995 = vsel %vm1862, %v1952, 0.0
        %1996 = vadd.xlane.f32.xlu0 %v1995
        %v1997 = vpop.xlane.xlu0 %1996
        %v1998 = vsel %vm1862, %v1954, 0.0
        %1999 = vadd.xlane.f32.xlu0 %v1998
        %v2000 = vpop.xlane.xlu0 %1999
        %v2001 = vsel %vm1862, %v1956, 0.0
        %2002 = vadd.xlane.f32.xlu0 %v2001
        %v2003 = vpop.xlane.xlu0 %2002
        %v2004 = vsel %vm1862, %v1958, 0.0
        %2005 = vadd.xlane.f32.xlu0 %v2004
        %v2006 = vpop.xlane.xlu0 %2005
        %v2007 = vrcp.pop %v1961
        %v2008 = vrcp.pop %v1964
        %v2009 = vrcp.pop %v1967
        %v2010 = vrcp.pop %v1970
        %v2011 = vrcp.pop %v1973
        %v2012 = vrcp.pop %v1976
        %v2013 = vrcp.pop %v1979
        %v2014 = vrcp.pop %v1982
        %v2015 = vrcp.pop %v1985
        %v2016 = vrcp.pop %v1988
        %v2017 = vrcp.pop %v1991
        %v2018 = vrcp.pop %v1994
        %v2019 = vrcp.pop %v1997
        %v2020 = vrcp.pop %v2000
        %v2021 = vrcp.pop %v2003
        %v2022 = vrcp.pop %v2006
        %v2023 = vmul.f32 %v1928, %v2007
        %v2024 = vmul.f32 %v1930, %v2008
        %v2025 = vmul.f32 %v1932, %v2009
        %v2026 = vmul.f32 %v1934, %v2010
        %v2027 = vmul.f32 %v1936, %v2011
        %v2028 = vmul.f32 %v1938, %v2012
        %v2029 = vmul.f32 %v1940, %v2013
        %v2030 = vmul.f32 %v1942, %v2014
        %v2031 = vmul.f32 %v1944, %v2015
        %v2032 = vmul.f32 %v1946, %v2016
        %v2033 = vmul.f32 %v1948, %v2017
        %v2034 = vmul.f32 %v1950, %v2018
        %v2035 = vmul.f32 %v1952, %v2019
        %v2036 = vmul.f32 %v1954, %v2020
        %v2037 = vmul.f32 %v1956, %v2021
        %v2038 = vmul.f32 %v1958, %v2022
        %v2039 = vpack.c.bf16 %v2024, %v2023
        %v2040 = vpack.c.bf16 %v2026, %v2025
        %v2041 = vpack.c.bf16 %v2028, %v2027
        %v2042 = vpack.c.bf16 %v2030, %v2029
        %v2043 = vpack.c.bf16 %v2032, %v2031
        %v2044 = vpack.c.bf16 %v2034, %v2033
        %v2045 = vpack.c.bf16 %v2036, %v2035
        %v2046 = vpack.c.bf16 %v2038, %v2037
        %v2047 = vld [vmem:[#allocation5] sm:$0xff]
        %v2048 = vld [vmem:[#allocation5 + $0x8] sm:$0xff]
        %v2049 = vld [vmem:[#allocation5 + $0x10] sm:$0xff]
        %v2050 = vld [vmem:[#allocation5 + $0x18] sm:$0xff]
        %v2051 = vld [vmem:[#allocation5 + $0x20] sm:$0xff]
        %v2052 = vld [vmem:[#allocation5 + $0x28] sm:$0xff]
        %v2053 = vld [vmem:[#allocation5 + $0x30] sm:$0xff]
        %v2054 = vld [vmem:[#allocation5 + $0x38] sm:$0xff]
        %v2056 = vsel %vm1862, %v2039, 0
        %2058 = vmatprep.subr.bf16.mxu0 0
        %2059 = vmatpush1.bf16.msra.mxu0 %v2047
        %2060 = vmatprep.subr.bf16.mxu0 0
        %2061 = vmatpush1.bf16.msra.mxu0 0
        %2062 = vmatprep.subr.bf16.mxu0 0
        %2063 = vmatpush1.bf16.msra.mxu0 0
        %2064 = vmatprep.subr.bf16.mxu0 0
        %2065 = vmatpush1.bf16.msra.mxu0 0
        %2066 = vmatprep.subr.bf16.mxu0 0
        %2067 = vmatpush1.bf16.msra.mxu0 0
        %2068 = vmatprep.subr.bf16.mxu0 0
        %2069 = vmatpush1.bf16.msra.mxu0 0
        %2070 = vmatprep.subr.bf16.mxu0 0
        %2071 = vmatpush1.bf16.msra.mxu0 0
        %2072 = vmatprep.subr.bf16.mxu0 0
        %2073 = vmatpush1.bf16.msra.mxu0 0
        %2074 = vmatprep.subr.bf16.mxu0 0
        %2075 = vmatpush1.bf16.msra.mxu0 0
        %2076 = vmatprep.subr.bf16.mxu0 0
        %2077 = vmatpush1.bf16.msra.mxu0 0
        %2078 = vmatprep.subr.bf16.mxu0 0
        %2079 = vmatpush1.bf16.msra.mxu0 0
        %2080 = vmatprep.subr.bf16.mxu0 0
        %2081 = vmatpush1.bf16.msra.mxu0 0
        %2082 = vmatprep.subr.bf16.mxu0 0
        %2083 = vmatpush1.bf16.msra.mxu0 0
        %2084 = vmatprep.subr.bf16.mxu0 0
        %2085 = vmatpush1.bf16.msra.mxu0 0
        %2086 = vmatprep.subr.bf16.mxu0 0
        %2087 = vmatpush1.bf16.msra.mxu0 0
        %2088 = vmatprep.subr.bf16.mxu0 0
        %2089 = vmatpush1.bf16.msra.mxu0 0
        %2090 = vmatprep.mubr.bf16.mxu0 0
        %2091 = vmatmul.mubr.bf16.gmra.mrb[0].mxu0 %v2056
        %v2092 = vpop.f32.mrb[0].mxu0
        %v2093 = vadd.f32 0.0, %v2092
        %v2094 = vpop.f32.mrb[0].mxu0
        %v2095 = vpop.f32.mrb[0].mxu0
        %v2096 = vadd.f32 0.0, %v2095
        %v2097 = vpop.f32.mrb[0].mxu0
        %2098 = vdwg.mxu0
        %v2100 = vsel %vm1862, %v2040, 0
        %2102 = vmatprep.subr.bf16.mxu0 0
        %2103 = vmatpush1.bf16.msra.mxu0 %v2048
        %2104 = vmatprep.subr.bf16.mxu0 0
        %2105 = vmatpush1.bf16.msra.mxu0 0
        %2106 = vmatprep.subr.bf16.mxu0 0
        %2107 = vmatpush1.bf16.msra.mxu0 0
        %2108 = vmatprep.subr.bf16.mxu0 0
        %2109 = vmatpush1.bf16.msra.mxu0 0
        %2110 = vmatprep.subr.bf16.mxu0 0
        %2111 = vmatpush1.bf16.msra.mxu0 0
        %2112 = vmatprep.subr.bf16.mxu0 0
        %2113 = vmatpush1.bf16.msra.mxu0 0
        %2114 = vmatprep.subr.bf16.mxu0 0
        %2115 = vmatpush1.bf16.msra.mxu0 0
        %2116 = vmatprep.subr.bf16.mxu0 0
        %2117 = vmatpush1.bf16.msra.mxu0 0
        %2118 = vmatprep.subr.bf16.mxu0 0
        %2119 = vmatpush1.bf16.msra.mxu0 0
        %2120 = vmatprep.subr.bf16.mxu0 0
        %2121 = vmatpush1.bf16.msra.mxu0 0
        %2122 = vmatprep.subr.bf16.mxu0 0
        %2123 = vmatpush1.bf16.msra.mxu0 0
        %2124 = vmatprep.subr.bf16.mxu0 0
        %2125 = vmatpush1.bf16.msra.mxu0 0
        %2126 = vmatprep.subr.bf16.mxu0 0
        %2127 = vmatpush1.bf16.msra.mxu0 0
        %2128 = vmatprep.subr.bf16.mxu0 0
        %2129 = vmatpush1.bf16.msra.mxu0 0
        %2130 = vmatprep.subr.bf16.mxu0 0
        %2131 = vmatpush1.bf16.msra.mxu0 0
        %2132 = vmatprep.subr.bf16.mxu0 0
        %2133 = vmatpush1.bf16.msra.mxu0 0
        %2134 = vmatprep.mubr.bf16.mxu0 0
        %2135 = vmatmul.mubr.bf16.gmra.mrb[0].mxu0 %v2100
        %v2136 = vpop.f32.mrb[0].mxu0
        %v2137 = vadd.f32 0.0, %v2136
        %v2138 = vpop.f32.mrb[0].mxu0
        %v2139 = vpop.f32.mrb[0].mxu0
        %v2140 = vadd.f32 0.0, %v2139
        %v2141 = vpop.f32.mrb[0].mxu0
        %2142 = vdwg.mxu0
        %v2144 = vsel %vm1862, %v2041, 0
        %2146 = vmatprep.subr.bf16.mxu0 0
        %2147 = vmatpush1.bf16.msra.mxu0 %v2049
        %2148 = vmatprep.subr.bf16.mxu0 0
        %2149 = vmatpush1.bf16.msra.mxu0 0
        %2150 = vmatprep.subr.bf16.mxu0 0
        %2151 = vmatpush1.bf16.msra.mxu0 0
        %2152 = vmatprep.subr.bf16.mxu0 0
        %2153 = vmatpush1.bf16.msra.mxu0 0
        %2154 = vmatprep.subr.bf16.mxu0 0
        %2155 = vmatpush1.bf16.msra.mxu0 0
        %2156 = vmatprep.subr.bf16.mxu0 0
        %2157 = vmatpush1.bf16.msra.mxu0 0
        %2158 = vmatprep.subr.bf16.mxu0 0
        %2159 = vmatpush1.bf16.msra.mxu0 0
        %2160 = vmatprep.subr.bf16.mxu0 0
        %2161 = vmatpush1.bf16.msra.mxu0 0
        %2162 = vmatprep.subr.bf16.mxu0 0
        %2163 = vmatpush1.bf16.msra.mxu0 0
        %2164 = vmatprep.subr.bf16.mxu0 0
        %2165 = vmatpush1.bf16.msra.mxu0 0
        %2166 = vmatprep.subr.bf16.mxu0 0
        %2167 = vmatpush1.bf16.msra.mxu0 0
        %2168 = vmatprep.subr.bf16.mxu0 0
        %2169 = vmatpush1.bf16.msra.mxu0 0
        %2170 = vmatprep.subr.bf16.mxu0 0
        %2171 = vmatpush1.bf16.msra.mxu0 0
        %2172 = vmatprep.subr.bf16.mxu0 0
        %2173 = vmatpush1.bf16.msra.mxu0 0
        %2174 = vmatprep.subr.bf16.mxu0 0
        %2175 = vmatpush1.bf16.msra.mxu0 0
        %2176 = vmatprep.subr.bf16.mxu0 0
        %2177 = vmatpush1.bf16.msra.mxu0 0
        %2178 = vmatprep.mubr.bf16.mxu0 0
        %2179 = vmatmul.mubr.bf16.gmra.mrb[0].mxu0 %v2144
        %v2180 = vpop.f32.mrb[0].mxu0
        %v2181 = vadd.f32 0.0, %v2180
        %v2182 = vpop.f32.mrb[0].mxu0
        %v2183 = vpop.f32.mrb[0].mxu0
        %v2184 = vadd.f32 0.0, %v2183
        %v2185 = vpop.f32.mrb[0].mxu0
        %2186 = vdwg.mxu0
        %v2188 = vsel %vm1862, %v2042, 0
        %2190 = vmatprep.subr.bf16.mxu0 0
        %2191 = vmatpush1.bf16.msra.mxu0 %v2050
        %2192 = vmatprep.subr.bf16.mxu0 0
        %2193 = vmatpush1.bf16.msra.mxu0 0
        %2194 = vmatprep.subr.bf16.mxu0 0
        %2195 = vmatpush1.bf16.msra.mxu0 0
        %2196 = vmatprep.subr.bf16.mxu0 0
        %2197 = vmatpush1.bf16.msra.mxu0 0
        %2198 = vmatprep.subr.bf16.mxu0 0
        %2199 = vmatpush1.bf16.msra.mxu0 0
        %2200 = vmatprep.subr.bf16.mxu0 0
        %2201 = vmatpush1.bf16.msra.mxu0 0
        %2202 = vmatprep.subr.bf16.mxu0 0
        %2203 = vmatpush1.bf16.msra.mxu0 0
        %2204 = vmatprep.subr.bf16.mxu0 0
        %2205 = vmatpush1.bf16.msra.mxu0 0
        %2206 = vmatprep.subr.bf16.mxu0 0
        %2207 = vmatpush1.bf16.msra.mxu0 0
        %2208 = vmatprep.subr.bf16.mxu0 0
        %2209 = vmatpush1.bf16.msra.mxu0 0
        %2210 = vmatprep.subr.bf16.mxu0 0
        %2211 = vmatpush1.bf16.msra.mxu0 0
        %2212 = vmatprep.subr.bf16.mxu0 0
        %2213 = vmatpush1.bf16.msra.mxu0 0
        %2214 = vmatprep.subr.bf16.mxu0 0
        %2215 = vmatpush1.bf16.msra.mxu0 0
        %2216 = vmatprep.subr.bf16.mxu0 0
        %2217 = vmatpush1.bf16.msra.mxu0 0
        %2218 = vmatprep.subr.bf16.mxu0 0
        %2219 = vmatpush1.bf16.msra.mxu0 0
        %2220 = vmatprep.subr.bf16.mxu0 0
        %2221 = vmatpush1.bf16.msra.mxu0 0
        %2222 = vmatprep.mubr.bf16.mxu0 0
        %2223 = vmatmul.mubr.bf16.gmra.mrb[0].mxu0 %v2188
        %v2224 = vpop.f32.mrb[0].mxu0
        %v2225 = vadd.f32 0.0, %v2224
        %v2226 = vpop.f32.mrb[0].mxu0
        %v2227 = vpop.f32.mrb[0].mxu0
        %v2228 = vadd.f32 0.0, %v2227
        %v2229 = vpop.f32.mrb[0].mxu0
        %2230 = vdwg.mxu0
        %v2232 = vsel %vm1862, %v2043, 0
        %2234 = vmatprep.subr.bf16.mxu0 0
        %2235 = vmatpush1.bf16.msra.mxu0 %v2051
        %2236 = vmatprep.subr.bf16.mxu0 0
        %2237 = vmatpush1.bf16.msra.mxu0 0
        %2238 = vmatprep.subr.bf16.mxu0 0
        %2239 = vmatpush1.bf16.msra.mxu0 0
        %2240 = vmatprep.subr.bf16.mxu0 0
        %2241 = vmatpush1.bf16.msra.mxu0 0
        %2242 = vmatprep.subr.bf16.mxu0 0
        %2243 = vmatpush1.bf16.msra.mxu0 0
        %2244 = vmatprep.subr.bf16.mxu0 0
        %2245 = vmatpush1.bf16.msra.mxu0 0
        %2246 = vmatprep.subr.bf16.mxu0 0
        %2247 = vmatpush1.bf16.msra.mxu0 0
        %2248 = vmatprep.subr.bf16.mxu0 0
        %2249 = vmatpush1.bf16.msra.mxu0 0
        %2250 = vmatprep.subr.bf16.mxu0 0
        %2251 = vmatpush1.bf16.msra.mxu0 0
        %2252 = vmatprep.subr.bf16.mxu0 0
        %2253 = vmatpush1.bf16.msra.mxu0 0
        %2254 = vmatprep.subr.bf16.mxu0 0
        %2255 = vmatpush1.bf16.msra.mxu0 0
        %2256 = vmatprep.subr.bf16.mxu0 0
        %2257 = vmatpush1.bf16.msra.mxu0 0
        %2258 = vmatprep.subr.bf16.mxu0 0
        %2259 = vmatpush1.bf16.msra.mxu0 0
        %2260 = vmatprep.subr.bf16.mxu0 0
        %2261 = vmatpush1.bf16.msra.mxu0 0
        %2262 = vmatprep.subr.bf16.mxu0 0
        %2263 = vmatpush1.bf16.msra.mxu0 0
        %2264 = vmatprep.subr.bf16.mxu0 0
        %2265 = vmatpush1.bf16.msra.mxu0 0
        %2266 = vmatprep.mubr.bf16.mxu0 0
        %2267 = vmatmul.mubr.bf16.gmra.mrb[0].mxu0 %v2232
        %v2268 = vpop.f32.mrb[0].mxu0
        %v2269 = vadd.f32 0.0, %v2268
        %v2270 = vpop.f32.mrb[0].mxu0
        %v2271 = vpop.f32.mrb[0].mxu0
        %v2272 = vadd.f32 0.0, %v2271
        %v2273 = vpop.f32.mrb[0].mxu0
        %2274 = vdwg.mxu0
        %v2276 = vsel %vm1862, %v2044, 0
        %2278 = vmatprep.subr.bf16.mxu0 0
        %2279 = vmatpush1.bf16.msra.mxu0 %v2052
        %2280 = vmatprep.subr.bf16.mxu0 0
        %2281 = vmatpush1.bf16.msra.mxu0 0
        %2282 = vmatprep.subr.bf16.mxu0 0
        %2283 = vmatpush1.bf16.msra.mxu0 0
        %2284 = vmatprep.subr.bf16.mxu0 0
        %2285 = vmatpush1.bf16.msra.mxu0 0
        %2286 = vmatprep.subr.bf16.mxu0 0
        %2287 = vmatpush1.bf16.msra.mxu0 0
        %2288 = vmatprep.subr.bf16.mxu0 0
        %2289 = vmatpush1.bf16.msra.mxu0 0
        %2290 = vmatprep.subr.bf16.mxu0 0
        %2291 = vmatpush1.bf16.msra.mxu0 0
        %2292 = vmatprep.subr.bf16.mxu0 0
        %2293 = vmatpush1.bf16.msra.mxu0 0
        %2294 = vmatprep.subr.bf16.mxu0 0
        %2295 = vmatpush1.bf16.msra.mxu0 0
        %2296 = vmatprep.subr.bf16.mxu0 0
        %2297 = vmatpush1.bf16.msra.mxu0 0
        %2298 = vmatprep.subr.bf16.mxu0 0
        %2299 = vmatpush1.bf16.msra.mxu0 0
        %2300 = vmatprep.subr.bf16.mxu0 0
        %2301 = vmatpush1.bf16.msra.mxu0 0
        %2302 = vmatprep.subr.bf16.mxu0 0
        %2303 = vmatpush1.bf16.msra.mxu0 0
        %2304 = vmatprep.subr.bf16.mxu0 0
        %2305 = vmatpush1.bf16.msra.mxu0 0
        %2306 = vmatprep.subr.bf16.mxu0 0
        %2307 = vmatpush1.bf16.msra.mxu0 0
        %2308 = vmatprep.subr.bf16.mxu0 0
        %2309 = vmatpush1.bf16.msra.mxu0 0
        %2310 = vmatprep.mubr.bf16.mxu0 0
        %2311 = vmatmul.mubr.bf16.gmra.mrb[0].mxu0 %v2276
        %v2312 = vpop.f32.mrb[0].mxu0
        %v2313 = vadd.f32 0.0, %v2312
        %v2314 = vpop.f32.mrb[0].mxu0
        %v2315 = vpop.f32.mrb[0].mxu0
        %v2316 = vadd.f32 0.0, %v2315
        %v2317 = vpop.f32.mrb[0].mxu0
        %2318 = vdwg.mxu0
        %v2320 = vsel %vm1862, %v2045, 0
        %2322 = vmatprep.subr.bf16.mxu0 0
        %2323 = vmatpush1.bf16.msra.mxu0 %v2053
        %2324 = vmatprep.subr.bf16.mxu0 0
        %2325 = vmatpush1.bf16.msra.mxu0 0
        %2326 = vmatprep.subr.bf16.mxu0 0
        %2327 = vmatpush1.bf16.msra.mxu0 0
        %2328 = vmatprep.subr.bf16.mxu0 0
        %2329 = vmatpush1.bf16.msra.mxu0 0
        %2330 = vmatprep.subr.bf16.mxu0 0
        %2331 = vmatpush1.bf16.msra.mxu0 0
        %2332 = vmatprep.subr.bf16.mxu0 0
        %2333 = vmatpush1.bf16.msra.mxu0 0
        %2334 = vmatprep.subr.bf16.mxu0 0
        %2335 = vmatpush1.bf16.msra.mxu0 0
        %2336 = vmatprep.subr.bf16.mxu0 0
        %2337 = vmatpush1.bf16.msra.mxu0 0
        %2338 = vmatprep.subr.bf16.mxu0 0
        %2339 = vmatpush1.bf16.msra.mxu0 0
        %2340 = vmatprep.subr.bf16.mxu0 0
        %2341 = vmatpush1.bf16.msra.mxu0 0
        %2342 = vmatprep.subr.bf16.mxu0 0
        %2343 = vmatpush1.bf16.msra.mxu0 0
        %2344 = vmatprep.subr.bf16.mxu0 0
        %2345 = vmatpush1.bf16.msra.mxu0 0
        %2346 = vmatprep.subr.bf16.mxu0 0
        %2347 = vmatpush1.bf16.msra.mxu0 0
        %2348 = vmatprep.subr.bf16.mxu0 0
        %2349 = vmatpush1.bf16.msra.mxu0 0
        %2350 = vmatprep.subr.bf16.mxu0 0
        %2351 = vmatpush1.bf16.msra.mxu0 0
        %2352 = vmatprep.subr.bf16.mxu0 0
        %2353 = vmatpush1.bf16.msra.mxu0 0
        %2354 = vmatprep.mubr.bf16.mxu0 0
        %2355 = vmatmul.mubr.bf16.gmra.mrb[0].mxu0 %v2320
        %v2356 = vpop.f32.mrb[0].mxu0
        %v2357 = vadd.f32 0.0, %v2356
        %v2358 = vpop.f32.mrb[0].mxu0
        %v2359 = vpop.f32.mrb[0].mxu0
        %v2360 = vadd.f32 0.0, %v2359
        %v2361 = vpop.f32.mrb[0].mxu0
        %2362 = vdwg.mxu0
        %v2364 = vsel %vm1862, %v2046, 0
        %2366 = vmatprep.subr.bf16.mxu0 0
        %2367 = vmatpush1.bf16.msra.mxu0 %v2054
        %2368 = vmatprep.subr.bf16.mxu0 0
        %2369 = vmatpush1.bf16.msra.mxu0 0
        %2370 = vmatprep.subr.bf16.mxu0 0
        %2371 = vmatpush1.bf16.msra.mxu0 0
        %2372 = vmatprep.subr.bf16.mxu0 0
        %2373 = vmatpush1.bf16.msra.mxu0 0
        %2374 = vmatprep.subr.bf16.mxu0 0
        %2375 = vmatpush1.bf16.msra.mxu0 0
        %2376 = vmatprep.subr.bf16.mxu0 0
        %2377 = vmatpush1.bf16.msra.mxu0 0
        %2378 = vmatprep.subr.bf16.mxu0 0
        %2379 = vmatpush1.bf16.msra.mxu0 0
        %2380 = vmatprep.subr.bf16.mxu0 0
        %2381 = vmatpush1.bf16.msra.mxu0 0
        %2382 = vmatprep.subr.bf16.mxu0 0
        %2383 = vmatpush1.bf16.msra.mxu0 0
        %2384 = vmatprep.subr.bf16.mxu0 0
        %2385 = vmatpush1.bf16.msra.mxu0 0
        %2386 = vmatprep.subr.bf16.mxu0 0
        %2387 = vmatpush1.bf16.msra.mxu0 0
        %2388 = vmatprep.subr.bf16.mxu0 0
        %2389 = vmatpush1.bf16.msra.mxu0 0
        %2390 = vmatprep.subr.bf16.mxu0 0
        %2391 = vmatpush1.bf16.msra.mxu0 0
        %2392 = vmatprep.subr.bf16.mxu0 0
        %2393 = vmatpush1.bf16.msra.mxu0 0
        %2394 = vmatprep.subr.bf16.mxu0 0
        %2395 = vmatpush1.bf16.msra.mxu0 0
        %2396 = vmatprep.subr.bf16.mxu0 0
        %2397 = vmatpush1.bf16.msra.mxu0 0
        %2398 = vmatprep.mubr.bf16.mxu0 0
        %2399 = vmatmul.mubr.bf16.gmra.mrb[0].mxu0 %v2364
        %v2400 = vpop.f32.mrb[0].mxu0
        %v2401 = vadd.f32 0.0, %v2400
        %v2402 = vpop.f32.mrb[0].mxu0
        %v2403 = vpop.f32.mrb[0].mxu0
        %v2404 = vadd.f32 0.0, %v2403
        %v2405 = vpop.f32.mrb[0].mxu0
        %2406 = vdwg.mxu0
        %v2407 = vpack.c.bf16 %v2096, %v2093
        %2408 = vst.msk [vmem:[#allocation6] sm:$0xff] %vm1276, %v2407
        %v2409 = vpack.c.bf16 %v2140, %v2137
        %2411 = vrot.lane.b32.xlu0 %v2409, 32
        %v2412 = vpop.permute.xlu0 %2411
        %vm2414 = vcmask 523520
        %2415 = vst.msk [vmem:[#allocation6] sm:$0xff] %vm2414, %v2412
        %v2416 = vpack.c.bf16 %v2184, %v2181
        %2418 = vrot.lane.b32.xlu0 %v2416, 64
        %v2419 = vpop.permute.xlu0 %2418
        %vm2421 = vcmask 785920
        %2422 = vst.msk [vmem:[#allocation6] sm:$0xff] %vm2421, %v2419
        %v2423 = vpack.c.bf16 %v2228, %v2225
        %2425 = vrot.lane.b32.xlu0 %v2423, 96
        %v2426 = vpop.permute.xlu0 %2425
        %vm2428 = vcmask 1048320
        %2429 = vst.msk [vmem:[#allocation6] sm:$0xff] %vm2428, %v2426
        %v2430 = vpack.c.bf16 %v2272, %v2269
        %2431 = vst.msk [vmem:[#allocation6 + $0x8] sm:$0xff] %vm1276, %v2430
        %v2432 = vpack.c.bf16 %v2316, %v2313
        %2434 = vrot.lane.b32.xlu0 %v2432, 32
        %v2435 = vpop.permute.xlu0 %2434
        %2437 = vst.msk [vmem:[#allocation6 + $0x8] sm:$0xff] %vm2414, %v2435
        %v2438 = vpack.c.bf16 %v2360, %v2357
        %2440 = vrot.lane.b32.xlu0 %v2438, 64
        %v2441 = vpop.permute.xlu0 %2440
        %2443 = vst.msk [vmem:[#allocation6 + $0x8] sm:$0xff] %vm2421, %v2441
        %v2444 = vpack.c.bf16 %v2404, %v2401
        %2446 = vrot.lane.b32.xlu0 %v2444, 96
        %v2447 = vpop.permute.xlu0 %2446
        %2449 = vst.msk [vmem:[#allocation6 + $0x8] sm:$0xff] %vm2428, %v2447
        %v2450 = vld [vmem:[#allocation6] sm:$0xff]
        %v2451 = vld [vmem:[#allocation6 + $0x8] sm:$0xff]
        %v2452 = vld [vmem:[%s762] sm:$0xf]
        %v2453 = vld [vmem:[%s762 + $0x4] sm:$0xf]
        %v2454 = vld [vmem:[%s762 + $0x8] sm:$0xf]
        %v2455 = vld [vmem:[%s762 + $0xc] sm:$0xf]
        %v2456 = vld [vmem:[%s762 + $0x10] sm:$0xf]
        %v2457 = vld [vmem:[%s762 + $0x14] sm:$0xf]
        %v2458 = vld [vmem:[%s762 + $0x18] sm:$0xf]
        %v2459 = vld [vmem:[%s762 + $0x1c] sm:$0xf]
        %v2460 = vld [vmem:[%s762 + $0x20] sm:$0xf]
        %v2461 = vld [vmem:[%s762 + $0x24] sm:$0xf]
        %v2462 = vld [vmem:[%s762 + $0x28] sm:$0xf]
        %v2463 = vld [vmem:[%s762 + $0x2c] sm:$0xf]
        %v2464 = vld [vmem:[%s762 + $0x30] sm:$0xf]
        %v2465 = vld [vmem:[%s762 + $0x34] sm:$0xf]
        %v2466 = vld [vmem:[%s762 + $0x38] sm:$0xf]
        %v2467 = vld [vmem:[%s762 + $0x3c] sm:$0xf]
        %v2468 = vld [vmem:[%s890] sm:$0x1]
        %v2470 = vlaneseq
        %v2471 = vshrl.u32 %v2470, 7
        %v2472 = vsub.s32 0, %v2471
        %v2473 = vrot.slane %v2468, %v2472
        %v2491 = vunpack.c.l.b16 %v2452
        %v2492 = vunpack.c.l.b16 %v2453
        %v2493 = vunpack.c.l.b16 %v2454
        %v2494 = vunpack.c.l.b16 %v2455
        %v2495 = vunpack.c.l.b16 %v2456
        %v2496 = vunpack.c.l.b16 %v2457
        %v2497 = vunpack.c.l.b16 %v2458
        %v2498 = vunpack.c.l.b16 %v2459
        %v2499 = vunpack.c.l.b16 %v2460
        %v2500 = vunpack.c.l.b16 %v2461
        %v2501 = vunpack.c.l.b16 %v2462
        %v2502 = vunpack.c.l.b16 %v2463
        %v2503 = vunpack.c.l.b16 %v2464
        %v2504 = vunpack.c.l.b16 %v2465
        %v2505 = vunpack.c.l.b16 %v2466
        %v2506 = vunpack.c.l.b16 %v2467
        %v2507 = vpack.c.b16 %v2492, %v2491
        %v2508 = vpack.c.b16 %v2494, %v2493
        %v2509 = vpack.c.b16 %v2496, %v2495
        %v2510 = vpack.c.b16 %v2498, %v2497
        %v2511 = vpack.c.b16 %v2500, %v2499
        %v2512 = vpack.c.b16 %v2502, %v2501
        %v2513 = vpack.c.b16 %v2504, %v2503
        %v2514 = vpack.c.b16 %v2506, %v2505
        %2523 = vmatprep.subr.bf16.mxu0 0
        %2524 = vmatpush1.bf16.msra.mxu0 %v2507
        %2525 = vmatprep.subr.bf16.mxu0 0
        %2526 = vmatpush1.bf16.msra.mxu0 %v2508
        %2527 = vmatprep.subr.bf16.mxu0 0
        %2528 = vmatpush1.bf16.msra.mxu0 %v2509
        %2529 = vmatprep.subr.bf16.mxu0 0
        %2530 = vmatpush1.bf16.msra.mxu0 %v2510
        %2531 = vmatprep.subr.bf16.mxu0 0
        %2532 = vmatpush1.bf16.msra.mxu0 %v2511
        %2533 = vmatprep.subr.bf16.mxu0 0
        %2534 = vmatpush1.bf16.msra.mxu0 %v2512
        %2535 = vmatprep.subr.bf16.mxu0 0
        %2536 = vmatpush1.bf16.msra.mxu0 %v2513
        %2537 = vmatprep.subr.bf16.mxu0 0
        %2538 = vmatpush1.bf16.msra.mxu0 %v2514
        %2539 = vmatprep.subr.bf16.mxu0 0
        %2540 = vmatpush1.bf16.msra.mxu0 0
        %2541 = vmatprep.subr.bf16.mxu0 0
        %2542 = vmatpush1.bf16.msra.mxu0 0
        %2543 = vmatprep.subr.bf16.mxu0 0
        %2544 = vmatpush1.bf16.msra.mxu0 0
        %2545 = vmatprep.subr.bf16.mxu0 0
        %2546 = vmatpush1.bf16.msra.mxu0 0
        %2547 = vmatprep.subr.bf16.mxu0 0
        %2548 = vmatpush1.bf16.msra.mxu0 0
        %2549 = vmatprep.subr.bf16.mxu0 0
        %2550 = vmatpush1.bf16.msra.mxu0 0
        %2551 = vmatprep.subr.bf16.mxu0 0
        %2552 = vmatpush1.bf16.msra.mxu0 0
        %2553 = vmatprep.subr.bf16.mxu0 0
        %2554 = vmatpush1.bf16.msra.mxu0 0
        %2555 = vmatprep.mubr.bf16.mxu0 0
        %2556 = vmatmul.mubr.bf16.gmra.mrb[0].mxu0 %v2450
        %v2557 = vpop.f32.mrb[0].mxu0
        %v2558 = vadd.f32 %v2473, %v2557
        %v2559 = vpop.f32.mrb[0].mxu0
        %v2560 = vpop.f32.mrb[0].mxu0
        %v2561 = vadd.f32 %v2473, %v2560
        %v2562 = vpop.f32.mrb[0].mxu0
        %2563 = vmatprep.mubr.bf16.mxu0 0
        %2564 = vmatmul.mubr.bf16.gmra.mrb[0].mxu0 %v2451
        %v2565 = vpop.f32.mrb[0].mxu0
        %v2566 = vadd.f32 %v2473, %v2565
        %v2567 = vpop.f32.mrb[0].mxu0
        %v2568 = vpop.f32.mrb[0].mxu0
        %v2569 = vadd.f32 %v2473, %v2568
        %v2570 = vpop.f32.mrb[0].mxu0
        %2571 = vdwg.mxu0
        %v2572 = vadd.f32 %v918, %v2558
        %v2573 = vadd.f32 %v919, %v2561
        %v2574 = vadd.f32 %v920, %v2566
        %v2575 = vadd.f32 %v921, %v2569
        %v2576 = vld [vmem:[%s893] sm:$0x1]
        %v2577 = vld [vmem:[%s896] sm:$0x1]
        %2578 = vadd.xlane.f32.xlu0 %v2572
        %v2579 = vpop.xlane.xlu0 %2578
        %2580 = vadd.xlane.f32.xlu0 %v2573
        %v2581 = vpop.xlane.xlu0 %2580
        %2582 = vadd.xlane.f32.xlu0 %v2574
        %v2583 = vpop.xlane.xlu0 %2582
        %2584 = vadd.xlane.f32.xlu0 %v2575
        %v2585 = vpop.xlane.xlu0 %2584
        %v2586 = vmul.f32 %v2579, %v932
        %v2587 = vmul.f32 %v2581, %v932
        %v2588 = vmul.f32 %v2583, %v932
        %v2589 = vmul.f32 %v2585, %v932
        %v2590 = vsub.f32 %v2572, %v2586
        %v2591 = vsub.f32 %v2573, %v2587
        %v2592 = vsub.f32 %v2574, %v2588
        %v2593 = vsub.f32 %v2575, %v2589
        %v2594 = vmul.f32 %v2590, %v2590
        %v2595 = vmul.f32 %v2591, %v2591
        %v2596 = vmul.f32 %v2592, %v2592
        %v2597 = vmul.f32 %v2593, %v2593
        %2598 = vadd.xlane.f32.xlu0 %v2594
        %v2599 = vpop.xlane.xlu0 %2598
        %2600 = vadd.xlane.f32.xlu0 %v2595
        %v2601 = vpop.xlane.xlu0 %2600
        %2602 = vadd.xlane.f32.xlu0 %v2596
        %v2603 = vpop.xlane.xlu0 %2602
        %2604 = vadd.xlane.f32.xlu0 %v2597
        %v2605 = vpop.xlane.xlu0 %2604
        %v2606 = vmul.f32 %v2599, %v932
        %v2607 = vmul.f32 %v2601, %v932
        %v2608 = vmul.f32 %v2603, %v932
        %v2609 = vmul.f32 %v2605, %v932
        %v2610 = vadd.f32 %v2606, 1e-05
        %v2611 = vadd.f32 %v2607, 1e-05
        %v2612 = vadd.f32 %v2608, 1e-05
        %v2613 = vadd.f32 %v2609, 1e-05
        %v2614 = vrsqrt.pop %v2610
        %v2615 = vrsqrt.pop %v2611
        %v2616 = vrsqrt.pop %v2612
        %v2617 = vrsqrt.pop %v2613
        %v2618 = vmul.f32 %v2590, %v2614
        %v2619 = vmul.f32 %v2591, %v2615
        %v2620 = vmul.f32 %v2592, %v2616
        %v2621 = vmul.f32 %v2593, %v2617
        %v2623 = vlaneseq
        %v2624 = vshrl.u32 %v2623, 7
        %v2625 = vsub.s32 0, %v2624
        %v2626 = vrot.slane %v2576, %v2625
        %v2628 = vmul.f32 %v2618, %v2626
        %v2629 = vmul.f32 %v2619, %v2626
        %v2630 = vmul.f32 %v2620, %v2626
        %v2631 = vmul.f32 %v2621, %v2626
        %v2633 = vlaneseq
        %v2634 = vshrl.u32 %v2633, 7
        %v2635 = vsub.s32 0, %v2634
        %v2636 = vrot.slane %v2577, %v2635
        %v2638 = vadd.f32 %v2628, %v2636
        %v2639 = vadd.f32 %v2629, %v2636
        %v2640 = vadd.f32 %v2630, %v2636
        %v2641 = vadd.f32 %v2631, %v2636
        %v2642 = vpack.c.bf16 %v2639, %v2638
        %v2643 = vpack.c.bf16 %v2641, %v2640
        %v2644 = vld [vmem:[%s771] sm:$0xff]
        %v2645 = vld [vmem:[%s771 + $0x8] sm:$0xff]
        %v2646 = vld [vmem:[%s771 + $0x10] sm:$0xff]
        %v2647 = vld [vmem:[%s771 + $0x18] sm:$0xff]
        %v2648 = vld [vmem:[%s771 + $0x20] sm:$0xff]
        %v2649 = vld [vmem:[%s771 + $0x28] sm:$0xff]
        %v2650 = vld [vmem:[%s771 + $0x30] sm:$0xff]
        %v2651 = vld [vmem:[%s771 + $0x38] sm:$0xff]
        %v2652 = vld [vmem:[%s771 + $0x40] sm:$0xff]
        %v2653 = vld [vmem:[%s771 + $0x48] sm:$0xff]
        %v2654 = vld [vmem:[%s771 + $0x50] sm:$0xff]
        %v2655 = vld [vmem:[%s771 + $0x58] sm:$0xff]
        %v2656 = vld [vmem:[%s771 + $0x60] sm:$0xff]
        %v2657 = vld [vmem:[%s771 + $0x68] sm:$0xff]
        %v2658 = vld [vmem:[%s771 + $0x70] sm:$0xff]
        %v2659 = vld [vmem:[%s771 + $0x78] sm:$0xff]
        %v2660 = vld [vmem:[%s771 + $0x80] sm:$0xff]
        %v2661 = vld [vmem:[%s771 + $0x88] sm:$0xff]
        %v2662 = vld [vmem:[%s771 + $0x90] sm:$0xff]
        %v2663 = vld [vmem:[%s771 + $0x98] sm:$0xff]
        %v2664 = vld [vmem:[%s771 + $0xa0] sm:$0xff]
        %v2665 = vld [vmem:[%s771 + $0xa8] sm:$0xff]
        %v2666 = vld [vmem:[%s771 + $0xb0] sm:$0xff]
        %v2667 = vld [vmem:[%s771 + $0xb8] sm:$0xff]
        %v2668 = vld [vmem:[%s771 + $0xc0] sm:$0xff]
        %v2669 = vld [vmem:[%s771 + $0xc8] sm:$0xff]
        %v2670 = vld [vmem:[%s771 + $0xd0] sm:$0xff]
        %v2671 = vld [vmem:[%s771 + $0xd8] sm:$0xff]
        %v2672 = vld [vmem:[%s771 + $0xe0] sm:$0xff]
        %v2673 = vld [vmem:[%s771 + $0xe8] sm:$0xff]
        %v2674 = vld [vmem:[%s771 + $0xf0] sm:$0xff]
        %v2675 = vld [vmem:[%s771 + $0xf8] sm:$0xff]
        %v2676 = vld [vmem:[%s900] sm:$0xf]
        %v2678 = vlaneseq
        %v2679 = vshrl.u32 %v2678, 7
        %v2680 = vsub.s32 0, %v2679
        %v2681 = vrot.slane %v2676, %v2680
        %v2682 = vlaneseq
        %v2683 = vshrl.u32 %v2682, 7
        %v2684 = vsub.s32 1, %v2683
        %v2685 = vrot.slane %v2676, %v2684
        %v2686 = vlaneseq
        %v2687 = vshrl.u32 %v2686, 7
        %v2688 = vsub.s32 2, %v2687
        %v2689 = vrot.slane %v2676, %v2688
        %v2690 = vlaneseq
        %v2691 = vshrl.u32 %v2690, 7
        %v2692 = vsub.s32 3, %v2691
        %v2693 = vrot.slane %v2676, %v2692
        %v2730 = vunpack.c.l.b16 %v2644
        %v2731 = vunpack.c.h.b16 %v2644
        %v2732 = vunpack.c.l.b16 %v2645
        %v2733 = vunpack.c.h.b16 %v2645
        %v2734 = vunpack.c.l.b16 %v2646
        %v2735 = vunpack.c.h.b16 %v2646
        %v2736 = vunpack.c.l.b16 %v2647
        %v2737 = vunpack.c.h.b16 %v2647
        %v2738 = vunpack.c.l.b16 %v2648
        %v2739 = vunpack.c.h.b16 %v2648
        %v2740 = vunpack.c.l.b16 %v2649
        %v2741 = vunpack.c.h.b16 %v2649
        %v2742 = vunpack.c.l.b16 %v2650
        %v2743 = vunpack.c.h.b16 %v2650
        %v2744 = vunpack.c.l.b16 %v2651
        %v2745 = vunpack.c.h.b16 %v2651
        %v2746 = vunpack.c.l.b16 %v2652
        %v2747 = vunpack.c.h.b16 %v2652
        %v2748 = vunpack.c.l.b16 %v2653
        %v2749 = vunpack.c.h.b16 %v2653
        %v2750 = vunpack.c.l.b16 %v2654
        %v2751 = vunpack.c.h.b16 %v2654
        %v2752 = vunpack.c.l.b16 %v2655
        %v2753 = vunpack.c.h.b16 %v2655
        %v2754 = vunpack.c.l.b16 %v2656
        %v2755 = vunpack.c.h.b16 %v2656
        %v2756 = vunpack.c.l.b16 %v2657
        %v2757 = vunpack.c.h.b16 %v2657
        %v2758 = vunpack.c.l.b16 %v2658
        %v2759 = vunpack.c.h.b16 %v2658
        %v2760 = vunpack.c.l.b16 %v2659
        %v2761 = vunpack.c.h.b16 %v2659
        %v2762 = vunpack.c.l.b16 %v2660
        %v2763 = vunpack.c.h.b16 %v2660
        %v2764 = vunpack.c.l.b16 %v2661
        %v2765 = vunpack.c.h.b16 %v2661
        %v2766 = vunpack.c.l.b16 %v2662
        %v2767 = vunpack.c.h.b16 %v2662
        %v2768 = vunpack.c.l.b16 %v2663
        %v2769 = vunpack.c.h.b16 %v2663
        %v2770 = vunpack.c.l.b16 %v2664
        %v2771 = vunpack.c.h.b16 %v2664
        %v2772 = vunpack.c.l.b16 %v2665
        %v2773 = vunpack.c.h.b16 %v2665
        %v2774 = vunpack.c.l.b16 %v2666
        %v2775 = vunpack.c.h.b16 %v2666
        %v2776 = vunpack.c.l.b16 %v2667
        %v2777 = vunpack.c.h.b16 %v2667
        %v2778 = vunpack.c.l.b16 %v2668
        %v2779 = vunpack.c.h.b16 %v2668
        %v2780 = vunpack.c.l.b16 %v2669
        %v2781 = vunpack.c.h.b16 %v2669
        %v2782 = vunpack.c.l.b16 %v2670
        %v2783 = vunpack.c.h.b16 %v2670
        %v2784 = vunpack.c.l.b16 %v2671
        %v2785 = vunpack.c.h.b16 %v2671
        %v2786 = vunpack.c.l.b16 %v2672
        %v2787 = vunpack.c.h.b16 %v2672
        %v2788 = vunpack.c.l.b16 %v2673
        %v2789 = vunpack.c.h.b16 %v2673
        %v2790 = vunpack.c.l.b16 %v2674
        %v2791 = vunpack.c.h.b16 %v2674
        %v2792 = vunpack.c.l.b16 %v2675
        %v2793 = vunpack.c.h.b16 %v2675
        %v2794 = vpack.c.b16 %v2734, %v2730
        %v2795 = vpack.c.b16 %v2735, %v2731
        %v2796 = vpack.c.b16 %v2736, %v2732
        %v2797 = vpack.c.b16 %v2737, %v2733
        %v2798 = vpack.c.b16 %v2742, %v2738
        %v2799 = vpack.c.b16 %v2743, %v2739
        %v2800 = vpack.c.b16 %v2744, %v2740
        %v2801 = vpack.c.b16 %v2745, %v2741
        %v2802 = vpack.c.b16 %v2750, %v2746
        %v2803 = vpack.c.b16 %v2751, %v2747
        %v2804 = vpack.c.b16 %v2752, %v2748
        %v2805 = vpack.c.b16 %v2753, %v2749
        %v2806 = vpack.c.b16 %v2758, %v2754
        %v2807 = vpack.c.b16 %v2759, %v2755
        %v2808 = vpack.c.b16 %v2760, %v2756
        %v2809 = vpack.c.b16 %v2761, %v2757
        %v2810 = vpack.c.b16 %v2766, %v2762
        %v2811 = vpack.c.b16 %v2767, %v2763
        %v2812 = vpack.c.b16 %v2768, %v2764
        %v2813 = vpack.c.b16 %v2769, %v2765
        %v2814 = vpack.c.b16 %v2774, %v2770
        %v2815 = vpack.c.b16 %v2775, %v2771
        %v2816 = vpack.c.b16 %v2776, %v2772
        %v2817 = vpack.c.b16 %v2777, %v2773
        %v2818 = vpack.c.b16 %v2782, %v2778
        %v2819 = vpack.c.b16 %v2783, %v2779
        %v2820 = vpack.c.b16 %v2784, %v2780
        %v2821 = vpack.c.b16 %v2785, %v2781
        %v2822 = vpack.c.b16 %v2790, %v2786
        %v2823 = vpack.c.b16 %v2791, %v2787
        %v2824 = vpack.c.b16 %v2792, %v2788
        %v2825 = vpack.c.b16 %v2793, %v2789
        %2858 = vmatprep.subr.bf16.mxu0 %v2795
        %2859 = vmatpush1.bf16.msra.mxu0 %v2794
        %2860 = vmatprep.subr.bf16.mxu0 %v2799
        %2861 = vmatpush1.bf16.msra.mxu0 %v2798
        %2862 = vmatprep.subr.bf16.mxu0 %v2803
        %2863 = vmatpush1.bf16.msra.mxu0 %v2802
        %2864 = vmatprep.subr.bf16.mxu0 %v2807
        %2865 = vmatpush1.bf16.msra.mxu0 %v2806
        %2866 = vmatprep.subr.bf16.mxu0 %v2811
        %2867 = vmatpush1.bf16.msra.mxu0 %v2810
        %2868 = vmatprep.subr.bf16.mxu0 %v2815
        %2869 = vmatpush1.bf16.msra.mxu0 %v2814
        %2870 = vmatprep.subr.bf16.mxu0 %v2819
        %2871 = vmatpush1.bf16.msra.mxu0 %v2818
        %2872 = vmatprep.subr.bf16.mxu0 %v2823
        %2873 = vmatpush1.bf16.msra.mxu0 %v2822
        %2874 = vmatprep.subr.bf16.mxu0 0
        %2875 = vmatpush1.bf16.msra.mxu0 0
        %2876 = vmatprep.subr.bf16.mxu0 0
        %2877 = vmatpush1.bf16.msra.mxu0 0
        %2878 = vmatprep.subr.bf16.mxu0 0
        %2879 = vmatpush1.bf16.msra.mxu0 0
        %2880 = vmatprep.subr.bf16.mxu0 0
        %2881 = vmatpush1.bf16.msra.mxu0 0
        %2882 = vmatprep.subr.bf16.mxu0 0
        %2883 = vmatpush1.bf16.msra.mxu0 0
        %2884 = vmatprep.subr.bf16.mxu0 0
        %2885 = vmatpush1.bf16.msra.mxu0 0
        %2886 = vmatprep.subr.bf16.mxu0 0
        %2887 = vmatpush1.bf16.msra.mxu0 0
        %2888 = vmatprep.subr.bf16.mxu0 0
        %2889 = vmatpush1.bf16.msra.mxu0 0
        %2890 = vmatprep.mubr.bf16.mxu0 0
        %2891 = vmatmul.mubr.bf16.gmra.mrb[0].mxu0 %v2642
        %v2892 = vpop.f32.mrb[0].mxu0
        %v2893 = vadd.f32 %v2681, %v2892
        %v2894 = vpop.f32.mrb[0].mxu0
        %v2895 = vadd.f32 %v2685, %v2894
        %v2896 = vpop.f32.mrb[0].mxu0
        %v2897 = vadd.f32 %v2681, %v2896
        %v2898 = vpop.f32.mrb[0].mxu0
        %v2899 = vadd.f32 %v2685, %v2898
        %2900 = vmatprep.mubr.bf16.mxu0 0
        %2901 = vmatmul.mubr.bf16.gmra.mrb[0].mxu0 %v2643
        %v2902 = vpop.f32.mrb[0].mxu0
        %v2903 = vadd.f32 %v2681, %v2902
        %v2904 = vpop.f32.mrb[0].mxu0
        %v2905 = vadd.f32 %v2685, %v2904
        %v2906 = vpop.f32.mrb[0].mxu0
        %v2907 = vadd.f32 %v2681, %v2906
        %v2908 = vpop.f32.mrb[0].mxu0
        %v2909 = vadd.f32 %v2685, %v2908
        %2910 = vdwg.mxu0
        %2911 = vmatprep.subr.bf16.mxu0 %v2797
        %2912 = vmatpush1.bf16.msra.mxu0 %v2796
        %2913 = vmatprep.subr.bf16.mxu0 %v2801
        %2914 = vmatpush1.bf16.msra.mxu0 %v2800
        %2915 = vmatprep.subr.bf16.mxu0 %v2805
        %2916 = vmatpush1.bf16.msra.mxu0 %v2804
        %2917 = vmatprep.subr.bf16.mxu0 %v2809
        %2918 = vmatpush1.bf16.msra.mxu0 %v2808
        %2919 = vmatprep.subr.bf16.mxu0 %v2813
        %2920 = vmatpush1.bf16.msra.mxu0 %v2812
        %2921 = vmatprep.subr.bf16.mxu0 %v2817
        %2922 = vmatpush1.bf16.msra.mxu0 %v2816
        %2923 = vmatprep.subr.bf16.mxu0 %v2821
        %2924 = vmatpush1.bf16.msra.mxu0 %v2820
        %2925 = vmatprep.subr.bf16.mxu0 %v2825
        %2926 = vmatpush1.bf16.msra.mxu0 %v2824
        %2927 = vmatprep.subr.bf16.mxu0 0
        %2928 = vmatpush1.bf16.msra.mxu0 0
        %2929 = vmatprep.subr.bf16.mxu0 0
        %2930 = vmatpush1.bf16.msra.mxu0 0
        %2931 = vmatprep.subr.bf16.mxu0 0
        %2932 = vmatpush1.bf16.msra.mxu0 0
        %2933 = vmatprep.subr.bf16.mxu0 0
        %2934 = vmatpush1.bf16.msra.mxu0 0
        %2935 = vmatprep.subr.bf16.mxu0 0
        %2936 = vmatpush1.bf16.msra.mxu0 0
        %2937 = vmatprep.subr.bf16.mxu0 0
        %2938 = vmatpush1.bf16.msra.mxu0 0
        %2939 = vmatprep.subr.bf16.mxu0 0
        %2940 = vmatpush1.bf16.msra.mxu0 0
        %2941 = vmatprep.subr.bf16.mxu0 0
        %2942 = vmatpush1.bf16.msra.mxu0 0
        %2943 = vmatprep.mubr.bf16.mxu0 0
        %2944 = vmatmul.mubr.bf16.gmra.mrb[0].mxu0 %v2642
        %v2945 = vpop.f32.mrb[0].mxu0
        %v2946 = vadd.f32 %v2689, %v2945
        %v2947 = vpop.f32.mrb[0].mxu0
        %v2948 = vadd.f32 %v2693, %v2947
        %v2949 = vpop.f32.mrb[0].mxu0
        %v2950 = vadd.f32 %v2689, %v2949
        %v2951 = vpop.f32.mrb[0].mxu0
        %v2952 = vadd.f32 %v2693, %v2951
        %2953 = vmatprep.mubr.bf16.mxu0 0
        %2954 = vmatmul.mubr.bf16.gmra.mrb[0].mxu0 %v2643
        %v2955 = vpop.f32.mrb[0].mxu0
        %v2956 = vadd.f32 %v2689, %v2955
        %v2957 = vpop.f32.mrb[0].mxu0
        %v2958 = vadd.f32 %v2693, %v2957
        %v2959 = vpop.f32.mrb[0].mxu0
        %v2960 = vadd.f32 %v2689, %v2959
        %v2961 = vpop.f32.mrb[0].mxu0
        %v2962 = vadd.f32 %v2693, %v2961
        %2963 = vdwg.mxu0
        %v2964 = vmax.f32 %v2893, 0.0
        %v2965 = vmax.f32 %v2895, 0.0
        %v2966 = vmax.f32 %v2946, 0.0
        %v2967 = vmax.f32 %v2948, 0.0
        %v2968 = vmax.f32 %v2897, 0.0
        %v2969 = vmax.f32 %v2899, 0.0
        %v2970 = vmax.f32 %v2950, 0.0
        %v2971 = vmax.f32 %v2952, 0.0
        %v2972 = vmax.f32 %v2903, 0.0
        %v2973 = vmax.f32 %v2905, 0.0
        %v2974 = vmax.f32 %v2956, 0.0
        %v2975 = vmax.f32 %v2958, 0.0
        %v2976 = vmax.f32 %v2907, 0.0
        %v2977 = vmax.f32 %v2909, 0.0
        %v2978 = vmax.f32 %v2960, 0.0
        %v2979 = vmax.f32 %v2962, 0.0
        %v2980 = vpack.c.bf16 %v2968, %v2964
        %v2981 = vpack.c.bf16 %v2969, %v2965
        %v2982 = vpack.c.bf16 %v2970, %v2966
        %v2983 = vpack.c.bf16 %v2971, %v2967
        %v2984 = vpack.c.bf16 %v2976, %v2972
        %v2985 = vpack.c.bf16 %v2977, %v2973
        %v2986 = vpack.c.bf16 %v2978, %v2974
        %v2987 = vpack.c.bf16 %v2979, %v2975
        %v2988 = vld [vmem:[%s780] sm:$0xf]
        %v2989 = vld [vmem:[%s780 + $0x4] sm:$0xf]
        %v2990 = vld [vmem:[%s780 + $0x8] sm:$0xf]
        %v2991 = vld [vmem:[%s780 + $0xc] sm:$0xf]
        %v2992 = vld [vmem:[%s780 + $0x10] sm:$0xf]
        %v2993 = vld [vmem:[%s780 + $0x14] sm:$0xf]
        %v2994 = vld [vmem:[%s780 + $0x18] sm:$0xf]
        %v2995 = vld [vmem:[%s780 + $0x1c] sm:$0xf]
        %v2996 = vld [vmem:[%s780 + $0x20] sm:$0xf]
        %v2997 = vld [vmem:[%s780 + $0x24] sm:$0xf]
        %v2998 = vld [vmem:[%s780 + $0x28] sm:$0xf]
        %v2999 = vld [vmem:[%s780 + $0x2c] sm:$0xf]
        %v3000 = vld [vmem:[%s780 + $0x30] sm:$0xf]
        %v3001 = vld [vmem:[%s780 + $0x34] sm:$0xf]
        %v3002 = vld [vmem:[%s780 + $0x38] sm:$0xf]
        %v3003 = vld [vmem:[%s780 + $0x3c] sm:$0xf]
        %v3004 = vld [vmem:[%s780 + $0x40] sm:$0xf]
        %v3005 = vld [vmem:[%s780 + $0x44] sm:$0xf]
        %v3006 = vld [vmem:[%s780 + $0x48] sm:$0xf]
        %v3007 = vld [vmem:[%s780 + $0x4c] sm:$0xf]
        %v3008 = vld [vmem:[%s780 + $0x50] sm:$0xf]
        %v3009 = vld [vmem:[%s780 + $0x54] sm:$0xf]
        %v3010 = vld [vmem:[%s780 + $0x58] sm:$0xf]
        %v3011 = vld [vmem:[%s780 + $0x5c] sm:$0xf]
        %v3012 = vld [vmem:[%s780 + $0x60] sm:$0xf]
        %v3013 = vld [vmem:[%s780 + $0x64] sm:$0xf]
        %v3014 = vld [vmem:[%s780 + $0x68] sm:$0xf]
        %v3015 = vld [vmem:[%s780 + $0x6c] sm:$0xf]
        %v3016 = vld [vmem:[%s780 + $0x70] sm:$0xf]
        %v3017 = vld [vmem:[%s780 + $0x74] sm:$0xf]
        %v3018 = vld [vmem:[%s780 + $0x78] sm:$0xf]
        %v3019 = vld [vmem:[%s780 + $0x7c] sm:$0xf]
        %v3020 = vld [vmem:[%s780 + $0x80] sm:$0xf]
        %v3021 = vld [vmem:[%s780 + $0x84] sm:$0xf]
        %v3022 = vld [vmem:[%s780 + $0x88] sm:$0xf]
        %v3023 = vld [vmem:[%s780 + $0x8c] sm:$0xf]
        %v3024 = vld [vmem:[%s780 + $0x90] sm:$0xf]
        %v3025 = vld [vmem:[%s780 + $0x94] sm:$0xf]
        %v3026 = vld [vmem:[%s780 + $0x98] sm:$0xf]
        %v3027 = vld [vmem:[%s780 + $0x9c] sm:$0xf]
        %v3028 = vld [vmem:[%s780 + $0xa0] sm:$0xf]
        %v3029 = vld [vmem:[%s780 + $0xa4] sm:$0xf]
        %v3030 = vld [vmem:[%s780 + $0xa8] sm:$0xf]
        %v3031 = vld [vmem:[%s780 + $0xac] sm:$0xf]
        %v3032 = vld [vmem:[%s780 + $0xb0] sm:$0xf]
        %v3033 = vld [vmem:[%s780 + $0xb4] sm:$0xf]
        %v3034 = vld [vmem:[%s780 + $0xb8] sm:$0xf]
        %v3035 = vld [vmem:[%s780 + $0xbc] sm:$0xf]
        %v3036 = vld [vmem:[%s780 + $0xc0] sm:$0xf]
        %v3037 = vld [vmem:[%s780 + $0xc4] sm:$0xf]
        %v3038 = vld [vmem:[%s780 + $0xc8] sm:$0xf]
        %v3039 = vld [vmem:[%s780 + $0xcc] sm:$0xf]
        %v3040 = vld [vmem:[%s780 + $0xd0] sm:$0xf]
        %v3041 = vld [vmem:[%s780 + $0xd4] sm:$0xf]
        %v3042 = vld [vmem:[%s780 + $0xd8] sm:$0xf]
        %v3043 = vld [vmem:[%s780 + $0xdc] sm:$0xf]
        %v3044 = vld [vmem:[%s780 + $0xe0] sm:$0xf]
        %v3045 = vld [vmem:[%s780 + $0xe4] sm:$0xf]
        %v3046 = vld [vmem:[%s780 + $0xe8] sm:$0xf]
        %v3047 = vld [vmem:[%s780 + $0xec] sm:$0xf]
        %v3048 = vld [vmem:[%s780 + $0xf0] sm:$0xf]
        %v3049 = vld [vmem:[%s780 + $0xf4] sm:$0xf]
        %v3050 = vld [vmem:[%s780 + $0xf8] sm:$0xf]
        %v3051 = vld [vmem:[%s780 + $0xfc] sm:$0xf]
        %v3052 = vld [vmem:[%s903] sm:$0x1]
        %v3054 = vlaneseq
        %v3055 = vshrl.u32 %v3054, 7
        %v3056 = vsub.s32 0, %v3055
        %v3057 = vrot.slane %v3052, %v3056
        %v3123 = vunpack.c.l.b16 %v2988
        %v3124 = vunpack.c.l.b16 %v2989
        %v3125 = vunpack.c.l.b16 %v2990
        %v3126 = vunpack.c.l.b16 %v2991
        %v3127 = vunpack.c.l.b16 %v2992
        %v3128 = vunpack.c.l.b16 %v2993
        %v3129 = vunpack.c.l.b16 %v2994
        %v3130 = vunpack.c.l.b16 %v2995
        %v3131 = vunpack.c.l.b16 %v2996
        %v3132 = vunpack.c.l.b16 %v2997
        %v3133 = vunpack.c.l.b16 %v2998
        %v3134 = vunpack.c.l.b16 %v2999
        %v3135 = vunpack.c.l.b16 %v3000
        %v3136 = vunpack.c.l.b16 %v3001
        %v3137 = vunpack.c.l.b16 %v3002
        %v3138 = vunpack.c.l.b16 %v3003
        %v3139 = vunpack.c.l.b16 %v3004
        %v3140 = vunpack.c.l.b16 %v3005
        %v3141 = vunpack.c.l.b16 %v3006
        %v3142 = vunpack.c.l.b16 %v3007
        %v3143 = vunpack.c.l.b16 %v3008
        %v3144 = vunpack.c.l.b16 %v3009
        %v3145 = vunpack.c.l.b16 %v3010
        %v3146 = vunpack.c.l.b16 %v3011
        %v3147 = vunpack.c.l.b16 %v3012
        %v3148 = vunpack.c.l.b16 %v3013
        %v3149 = vunpack.c.l.b16 %v3014
        %v3150 = vunpack.c.l.b16 %v3015
        %v3151 = vunpack.c.l.b16 %v3016
        %v3152 = vunpack.c.l.b16 %v3017
        %v3153 = vunpack.c.l.b16 %v3018
        %v3154 = vunpack.c.l.b16 %v3019
        %v3155 = vunpack.c.l.b16 %v3020
        %v3156 = vunpack.c.l.b16 %v3021
        %v3157 = vunpack.c.l.b16 %v3022
        %v3158 = vunpack.c.l.b16 %v3023
        %v3159 = vunpack.c.l.b16 %v3024
        %v3160 = vunpack.c.l.b16 %v3025
        %v3161 = vunpack.c.l.b16 %v3026
        %v3162 = vunpack.c.l.b16 %v3027
        %v3163 = vunpack.c.l.b16 %v3028
        %v3164 = vunpack.c.l.b16 %v3029
        %v3165 = vunpack.c.l.b16 %v3030
        %v3166 = vunpack.c.l.b16 %v3031
        %v3167 = vunpack.c.l.b16 %v3032
        %v3168 = vunpack.c.l.b16 %v3033
        %v3169 = vunpack.c.l.b16 %v3034
        %v3170 = vunpack.c.l.b16 %v3035
        %v3171 = vunpack.c.l.b16 %v3036
        %v3172 = vunpack.c.l.b16 %v3037
        %v3173 = vunpack.c.l.b16 %v3038
        %v3174 = vunpack.c.l.b16 %v3039
        %v3175 = vunpack.c.l.b16 %v3040
        %v3176 = vunpack.c.l.b16 %v3041
        %v3177 = vunpack.c.l.b16 %v3042
        %v3178 = vunpack.c.l.b16 %v3043
        %v3179 = vunpack.c.l.b16 %v3044
        %v3180 = vunpack.c.l.b16 %v3045
        %v3181 = vunpack.c.l.b16 %v3046
        %v3182 = vunpack.c.l.b16 %v3047
        %v3183 = vunpack.c.l.b16 %v3048
        %v3184 = vunpack.c.l.b16 %v3049
        %v3185 = vunpack.c.l.b16 %v3050
        %v3186 = vunpack.c.l.b16 %v3051
        %v3187 = vpack.c.b16 %v3124, %v3123
        %v3188 = vpack.c.b16 %v3126, %v3125
        %v3189 = vpack.c.b16 %v3128, %v3127
        %v3190 = vpack.c.b16 %v3130, %v3129
        %v3191 = vpack.c.b16 %v3132, %v3131
        %v3192 = vpack.c.b16 %v3134, %v3133
        %v3193 = vpack.c.b16 %v3136, %v3135
        %v3194 = vpack.c.b16 %v3138, %v3137
        %v3195 = vpack.c.b16 %v3140, %v3139
        %v3196 = vpack.c.b16 %v3142, %v3141
        %v3197 = vpack.c.b16 %v3144, %v3143
        %v3198 = vpack.c.b16 %v3146, %v3145
        %v3199 = vpack.c.b16 %v3148, %v3147
        %v3200 = vpack.c.b16 %v3150, %v3149
        %v3201 = vpack.c.b16 %v3152, %v3151
        %v3202 = vpack.c.b16 %v3154, %v3153
        %v3203 = vpack.c.b16 %v3156, %v3155
        %v3204 = vpack.c.b16 %v3158, %v3157
        %v3205 = vpack.c.b16 %v3160, %v3159
        %v3206 = vpack.c.b16 %v3162, %v3161
        %v3207 = vpack.c.b16 %v3164, %v3163
        %v3208 = vpack.c.b16 %v3166, %v3165
        %v3209 = vpack.c.b16 %v3168, %v3167
        %v3210 = vpack.c.b16 %v3170, %v3169
        %v3211 = vpack.c.b16 %v3172, %v3171
        %v3212 = vpack.c.b16 %v3174, %v3173
        %v3213 = vpack.c.b16 %v3176, %v3175
        %v3214 = vpack.c.b16 %v3178, %v3177
        %v3215 = vpack.c.b16 %v3180, %v3179
        %v3216 = vpack.c.b16 %v3182, %v3181
        %v3217 = vpack.c.b16 %v3184, %v3183
        %v3218 = vpack.c.b16 %v3186, %v3185
        %3251 = vmatprep.subr.bf16.mxu0 0
        %3252 = vmatpush1.bf16.msra.mxu0 %v3187
        %3253 = vmatprep.subr.bf16.mxu0 0
        %3254 = vmatpush1.bf16.msra.mxu0 %v3188
        %3255 = vmatprep.subr.bf16.mxu0 0
        %3256 = vmatpush1.bf16.msra.mxu0 %v3189
        %3257 = vmatprep.subr.bf16.mxu0 0
        %3258 = vmatpush1.bf16.msra.mxu0 %v3190
        %3259 = vmatprep.subr.bf16.mxu0 0
        %3260 = vmatpush1.bf16.msra.mxu0 %v3191
        %3261 = vmatprep.subr.bf16.mxu0 0
        %3262 = vmatpush1.bf16.msra.mxu0 %v3192
        %3263 = vmatprep.subr.bf16.mxu0 0
        %3264 = vmatpush1.bf16.msra.mxu0 %v3193
        %3265 = vmatprep.subr.bf16.mxu0 0
        %3266 = vmatpush1.bf16.msra.mxu0 %v3194
        %3267 = vmatprep.subr.bf16.mxu0 0
        %3268 = vmatpush1.bf16.msra.mxu0 %v3195
        %3269 = vmatprep.subr.bf16.mxu0 0
        %3270 = vmatpush1.bf16.msra.mxu0 %v3196
        %3271 = vmatprep.subr.bf16.mxu0 0
        %3272 = vmatpush1.bf16.msra.mxu0 %v3197
        %3273 = vmatprep.subr.bf16.mxu0 0
        %3274 = vmatpush1.bf16.msra.mxu0 %v3198
        %3275 = vmatprep.subr.bf16.mxu0 0
        %3276 = vmatpush1.bf16.msra.mxu0 %v3199
        %3277 = vmatprep.subr.bf16.mxu0 0
        %3278 = vmatpush1.bf16.msra.mxu0 %v3200
        %3279 = vmatprep.subr.bf16.mxu0 0
        %3280 = vmatpush1.bf16.msra.mxu0 %v3201
        %3281 = vmatprep.subr.bf16.mxu0 0
        %3282 = vmatpush1.bf16.msra.mxu0 %v3202
        %3283 = vmatprep.mubr.bf16.mxu0 %v2981
        %3284 = vmatmul.mubr.bf16.gmra.mrb[0].mxu0 %v2980
        %v3285 = vpop.f32.mrb[0].mxu0
        %v3286 = vadd.f32 %v3057, %v3285
        %v3287 = vpop.f32.mrb[0].mxu0
        %v3288 = vpop.f32.mrb[0].mxu0
        %v3289 = vadd.f32 %v3057, %v3288
        %v3290 = vpop.f32.mrb[0].mxu0
        %3291 = vmatprep.mubr.bf16.mxu0 %v2985
        %3292 = vmatmul.mubr.bf16.gmra.mrb[0].mxu0 %v2984
        %v3293 = vpop.f32.mrb[0].mxu0
        %v3294 = vadd.f32 %v3057, %v3293
        %v3295 = vpop.f32.mrb[0].mxu0
        %v3296 = vpop.f32.mrb[0].mxu0
        %v3297 = vadd.f32 %v3057, %v3296
        %v3298 = vpop.f32.mrb[0].mxu0
        %3299 = vdwg.mxu0
        %3300 = vmatprep.subr.bf16.mxu0 0
        %3301 = vmatpush1.bf16.msra.mxu0 %v3203
        %3302 = vmatprep.subr.bf16.mxu0 0
        %3303 = vmatpush1.bf16.msra.mxu0 %v3204
        %3304 = vmatprep.subr.bf16.mxu0 0
        %3305 = vmatpush1.bf16.msra.mxu0 %v3205
        %3306 = vmatprep.subr.bf16.mxu0 0
        %3307 = vmatpush1.bf16.msra.mxu0 %v3206
        %3308 = vmatprep.subr.bf16.mxu0 0
        %3309 = vmatpush1.bf16.msra.mxu0 %v3207
        %3310 = vmatprep.subr.bf16.mxu0 0
        %3311 = vmatpush1.bf16.msra.mxu0 %v3208
        %3312 = vmatprep.subr.bf16.mxu0 0
        %3313 = vmatpush1.bf16.msra.mxu0 %v3209
        %3314 = vmatprep.subr.bf16.mxu0 0
        %3315 = vmatpush1.bf16.msra.mxu0 %v3210
        %3316 = vmatprep.subr.bf16.mxu0 0
        %3317 = vmatpush1.bf16.msra.mxu0 %v3211
        %3318 = vmatprep.subr.bf16.mxu0 0
        %3319 = vmatpush1.bf16.msra.mxu0 %v3212
        %3320 = vmatprep.subr.bf16.mxu0 0
        %3321 = vmatpush1.bf16.msra.mxu0 %v3213
        %3322 = vmatprep.subr.bf16.mxu0 0
        %3323 = vmatpush1.bf16.msra.mxu0 %v3214
        %3324 = vmatprep.subr.bf16.mxu0 0
        %3325 = vmatpush1.bf16.msra.mxu0 %v3215
        %3326 = vmatprep.subr.bf16.mxu0 0
        %3327 = vmatpush1.bf16.msra.mxu0 %v3216
        %3328 = vmatprep.subr.bf16.mxu0 0
        %3329 = vmatpush1.bf16.msra.mxu0 %v3217
        %3330 = vmatprep.subr.bf16.mxu0 0
        %3331 = vmatpush1.bf16.msra.mxu0 %v3218
        %3332 = vmatprep.mubr.bf16.mxu0 %v2983
        %3333 = vmatmul.mubr.bf16.gmra.mrb[0].mxu0 %v2982
        %v3334 = vpop.f32.mrb[0].mxu0
        %v3335 = vadd.f32 %v3286, %v3334
        %v3336 = vpop.f32.mrb[0].mxu0
        %v3337 = vpop.f32.mrb[0].mxu0
        %v3338 = vadd.f32 %v3289, %v3337
        %v3339 = vpop.f32.mrb[0].mxu0
        %3340 = vmatprep.mubr.bf16.mxu0 %v2987
        %3341 = vmatmul.mubr.bf16.gmra.mrb[0].mxu0 %v2986
        %v3342 = vpop.f32.mrb[0].mxu0
        %v3343 = vadd.f32 %v3294, %v3342
        %v3344 = vpop.f32.mrb[0].mxu0
        %v3345 = vpop.f32.mrb[0].mxu0
        %v3346 = vadd.f32 %v3297, %v3345
        %v3347 = vpop.f32.mrb[0].mxu0
        %3348 = vdwg.mxu0
        %v3349 = vadd.f32 %v2572, %v3335
        %v3350 = vadd.f32 %v2573, %v3338
        %v3351 = vadd.f32 %v2574, %v3343
        %v3352 = vadd.f32 %v2575, %v3346
        %3353 = vst [vmem:[#allocation2] sm:$0xff] %v3349
        %3354 = vst [vmem:[#allocation2 + $0x8] sm:$0xff] %v3350
        %3355 = vst [vmem:[#allocation2 + $0x10] sm:$0xff] %v3351
        %3356 = vst [vmem:[#allocation2 + $0x18] sm:$0xff] %v3352
        %p3357 = scmp.eq.s32.totalorder %s50, 1
        // Predicated region
        $region121: #{tpu_custom_call.1} parent=83 // pred_check
          %p3358 = pneg %p3357
        $region122: #{tpu_custom_call.1} parent=83 // pred_check_branch
          %3360 = sbr.rel (%p3358) target = $region124
        $region123: #{tpu_custom_call.1} parent=83 // pred_region
          %v3361 = vld [vmem:[%s14] sm:$0x1]
          %v3362 = vld [vmem:[%s15] sm:$0x1]
          %3363 = vadd.xlane.f32.xlu0 %v3349
          %v3364 = vpop.xlane.xlu0 %3363
          %3365 = vadd.xlane.f32.xlu0 %v3350
          %v3366 = vpop.xlane.xlu0 %3365
          %3367 = vadd.xlane.f32.xlu0 %v3351
          %v3368 = vpop.xlane.xlu0 %3367
          %3369 = vadd.xlane.f32.xlu0 %v3352
          %v3370 = vpop.xlane.xlu0 %3369
          %v3371 = vmul.f32 %v3364, %v932
          %v3372 = vmul.f32 %v3366, %v932
          %v3373 = vmul.f32 %v3368, %v932
          %v3374 = vmul.f32 %v3370, %v932
          %v3375 = vsub.f32 %v3349, %v3371
          %v3376 = vsub.f32 %v3350, %v3372
          %v3377 = vsub.f32 %v3351, %v3373
          %v3378 = vsub.f32 %v3352, %v3374
          %v3379 = vmul.f32 %v3375, %v3375
          %v3380 = vmul.f32 %v3376, %v3376
          %v3381 = vmul.f32 %v3377, %v3377
          %v3382 = vmul.f32 %v3378, %v3378
          %3383 = vadd.xlane.f32.xlu0 %v3379
          %v3384 = vpop.xlane.xlu0 %3383
          %3385 = vadd.xlane.f32.xlu0 %v3380
          %v3386 = vpop.xlane.xlu0 %3385
          %3387 = vadd.xlane.f32.xlu0 %v3381
          %v3388 = vpop.xlane.xlu0 %3387
          %3389 = vadd.xlane.f32.xlu0 %v3382
          %v3390 = vpop.xlane.xlu0 %3389
          %v3391 = vmul.f32 %v3384, %v932
          %v3392 = vmul.f32 %v3386, %v932
          %v3393 = vmul.f32 %v3388, %v932
          %v3394 = vmul.f32 %v3390, %v932
          %v3395 = vadd.f32 %v3391, 1e-05
          %v3396 = vadd.f32 %v3392, 1e-05
          %v3397 = vadd.f32 %v3393, 1e-05
          %v3398 = vadd.f32 %v3394, 1e-05
          %v3399 = vrsqrt.pop %v3395
          %v3400 = vrsqrt.pop %v3396
          %v3401 = vrsqrt.pop %v3397
          %v3402 = vrsqrt.pop %v3398
          %v3403 = vmul.f32 %v3375, %v3399
          %v3404 = vmul.f32 %v3376, %v3400
          %v3405 = vmul.f32 %v3377, %v3401
          %v3406 = vmul.f32 %v3378, %v3402
          %v3408 = vlaneseq
          %v3409 = vshrl.u32 %v3408, 7
          %v3410 = vsub.s32 0, %v3409
          %v3411 = vrot.slane %v3361, %v3410
          %v3413 = vmul.f32 %v3403, %v3411
          %v3414 = vmul.f32 %v3404, %v3411
          %v3415 = vmul.f32 %v3405, %v3411
          %v3416 = vmul.f32 %v3406, %v3411
          %v3418 = vlaneseq
          %v3419 = vshrl.u32 %v3418, 7
          %v3420 = vsub.s32 0, %v3419
          %v3421 = vrot.slane %v3362, %v3420
          %v3423 = vadd.f32 %v3413, %v3421
          %v3424 = vadd.f32 %v3414, %v3421
          %v3425 = vadd.f32 %v3415, %v3421
          %v3426 = vadd.f32 %v3416, %v3421
          %3427 = vst [vmem:[%s881] sm:$0xff] %v3423
          %3428 = vst [vmem:[%s881 + $0x8] sm:$0xff] %v3424
          %3429 = vst [vmem:[%s881 + $0x10] sm:$0xff] %v3425
          %3430 = vst [vmem:[%s881 + $0x18] sm:$0xff] %v3426
        $region124: #{tpu_custom_call.1} parent=83 // pred_fallthru
          _
        %s3431 = sand.u32 %s471, 1
        %s3432 = scalar_lea.sflag [#allocation9], %s3431
        %s3433 = sand.u32 %s471, 1
        %s3434 = smul.addr %s3433, 32
        %s3435 = scalar_lea.vmem [#allocation21], %s3434
        // Predicated region
        $region125: #{tpu_custom_call.1} parent=83 // pred_check
          %p3436 = pneg %p481
        $region126: #{tpu_custom_call.1} parent=83 // pred_check_branch
          %3438 = sbr.rel (%p3436) target = $region128
        $region127: #{tpu_custom_call.1} parent=83 // pred_region
          %s3439 = smul.u32 2, %s49
          %s3441 = ssub.s32 512, 512
          %3442 = vsyncadd %s3432, %s3441
          %s3443 = smul.addr %s3439, 2
          %s3444 = smul.addr %s3443, 128
          %s3445 = scalar_lea.hbm %s16, %s3444
          %s3446 = sshll.u32 %s3435, 4
          %s3447 = int_to_ptr.vmem [resolvable:$true] %s3446
          %3452 = dma.vmem_to_hbm [thread:$0]  %s3447, 512, %s3445, %s3432, 128, 128, 8
        $region128: #{tpu_custom_call.1} parent=83 // pred_fallthru
          _
      $region84: #{tpu_custom_call.1} parent=5 // pred_fallthru
        _
      %p3453 = scmp.le.s32.totalorder 2, %s40
      // Predicated region
      $region129: #{tpu_custom_call.1} parent=5 // pred_check
        %p3454 = pneg %p3453
      $region130: #{tpu_custom_call.1} parent=5 // pred_check_branch
        %3456 = sbr.rel (%p3454) target = $region132
      $region131: #{tpu_custom_call.1} parent=5 // pred_region
        %s3457 = ssub.s32 %s40, 2
        // Predicated region
        $region133: #{tpu_custom_call.1} parent=131 // pred_check
          %p3458 = pneg %p487
        $region134: #{tpu_custom_call.1} parent=131 // pred_check_branch
          %3460 = sbr.rel (%p3458) target = $region136
        $region135: #{tpu_custom_call.1} parent=131 // pred_region
          %s3461 = sand.u32 %s472, 1
          %s3462 = scalar_lea.sflag [#allocation9], %s3461
          %s3463 = sand.u32 %s472, 1
          %s3464 = smul.addr %s3463, 32
          %s3465 = scalar_lea.vmem [#allocation21], %s3464
          %3466 = dma.done %s3462, 512
        $region136: #{tpu_custom_call.1} parent=131 // pred_fallthru
          _
      $region132: #{tpu_custom_call.1} parent=5 // pred_fallthru
        _
    $region6: #{tpu_custom_call.1} parent=1 // loop_footer
      %s44 = sadd.s32 1, %s40
    $region7: #{tpu_custom_call.1} parent=1 // loop_footer_branch
      %39 = sbr.rel target = $region3
    $region8: #{tpu_custom_call.1} parent=1 // loop_exit
      _
    %3467 = vsyncpa [#allocation8], 1
    %s3468 = scalar_lea.sflag [#allocation8], 1
    %3469 = vsyncpa %s3468, 1
    %3470 = vsyncpa [#allocation11], 1
    %s3471 = scalar_lea.sflag [#allocation11], 1
    %3472 = vsyncpa %s3471, 1
    %3473 = vsyncpa [#allocation14], 1
    %s3474 = scalar_lea.sflag [#allocation14], 1
    %3475 = vsyncpa %s3474, 1
    %3476 = vsyncpa [#allocation17], 1
    %s3477 = scalar_lea.sflag [#allocation17], 1
    %3478 = vsyncpa %s3477, 1
    %3479 = vsyncpa [#allocation20], 1
    %s3480 = scalar_lea.sflag [#allocation20], 1
    %3481 = vsyncpa %s3480, 1
    %3482 = vsyncpa [#allocation9], 1
    %s3483 = scalar_lea.sflag [#allocation9], 1
    %3484 = vsyncpa %s3483, 1

</llo_original>
